<compile_context>
chip_gen: v6e
topology: v6e:2x2x1
jax: 0.10.0
libtpu: 0.0.40
codegen_flags: <defaults>
</compile_context>

<pallas_src>
import math
import numpy as np
import jax
import jax.numpy as jnp
from jax.experimental import pallas as pl
from jax.experimental.pallas import tpu as pltpu

# --------------------------- hyper-parameters (small but valid) ---------------------------
B = 2
C_IN = 2
H_CH = 56            # fNIRS channels (>= 53 so the hardcoded region->channel indices exist)
W_T = 64             # sampling points (all three conv branches give the same out_w)
DIM = 32
DEPTH = 2
HEADS = 2
DIM_HEAD = 16
INNER = HEADS * DIM_HEAD
MLP_DIM = 64
N_CLASS = 4
OUT_CH = 8
KERNEL_LENS = [50, 25, 12]
STRIDE = 4
NUM_REGIONS = 7
R_PAD = 8                         # region rows padded 7 -> 8 (row 7 is a dummy token)
N_TOK = NUM_REGIONS + H_CH        # real tokens in the reference layout (63)
N_PAD = 64                        # padded token axis: 7 regions + 1 dummy + 56 channels
NC_PAD = 128                      # padded logits lane width (lane-dense output store)
OUT_W = math.floor((W_T - max(KERNEL_LENS) + (max(KERNEL_LENS) - 1) // 2 * 2) / STRIDE) + 1
FEAT = len(KERNEL_LENS) * OUT_CH * OUT_W
SCALE = DIM_HEAD ** -0.5
MASK_VALUE = -1e30                # finite sentinel; exp underflows to exactly 0 in f32
LN_EPS = 1e-5

assert R_PAD + H_CH == N_PAD

REGION_TO_CHANNELS = [[c + 6 for c in region] for region in [
    [1, 4, 10], [40, 47, 52], [2, 3, 5, 7, 8, 13], [44, 46, 49, 50, 51, 53],
    [6, 11, 14, 17, 18, 20, 25, 31, 32, 34, 39, 42, 45], [12, 24, 26, 38],
    [9, 15, 16, 19, 21, 22, 23, 27, 28, 29, 30, 33, 35, 36, 37, 41, 43, 48]]]

# All three conv branches must agree on out_w for the 'b h (c w)' projection layout.
for _k in KERNEL_LENS:
    assert math.floor((W_T - _k + 2 * ((_k - 1) // 2)) / STRIDE) + 1 == OUT_W

# TODO(synk): fNIRS_T.__init__ builds self.mamba_layers (BidirectionalMambaBlock/Mamba),
# but forward() never uses them and Mamba is undefined in the source -> omitted.
# nn.Dropout layers are identity (p=0 / inference).


# --------------------------- in-kernel math helpers ---------------------------
def _layer_norm(x, g, b):
    mu = jnp.mean(x, axis=-1, keepdims=True)
    var = jnp.mean((x - mu) ** 2, axis=-1, keepdims=True)
    return (x - mu) * jax.lax.rsqrt(var + LN_EPS) * g + b


def _erf(x):
    # TODO(synk): lax.erf has no guaranteed Pallas TPU lowering; Abramowitz & Stegun
    # 7.1.26 approximation (|err| < 1.5e-7, ~f32 accurate).
    a1, a2, a3, a4, a5 = 0.254829592, -0.284496736, 1.421413741, -1.453152027, 1.061405429
    p = 0.3275911
    s = jnp.where(x >= 0.0, 1.0, -1.0)
    ax = jnp.abs(x)
    t = 1.0 / (1.0 + p * ax)
    poly = ((((a5 * t + a4) * t + a3) * t + a2) * t + a1) * t
    return s * (1.0 - poly * jnp.exp(-ax * ax))


def _gelu_exact(x):
    # matches torch.nn.GELU() (erf form)
    return 0.5 * x * (1.0 + _erf(x * 0.7071067811865476))


def _bf16(x):
    return x.astype(jnp.bfloat16)


# --------------------------- fully fused forward kernel ---------------------------
def fnirs_t_kernel(x_ref, cm_ref, gvec_ref, base_ref, bias_ref,
                   lvec_ref, bb1_ref, wqk_ref, wvo_ref, w1_ref, w2_ref,
                   hw_ref, hbias_ref, o_ref):
    gvec = gvec_ref[...]                                   # [5, DIM] f32 slab
    bias_comb = gvec[0:1, :]                               # folded conv+proj bias
    eg, eb = gvec[1:2, :], gvec[2:3, :]                    # embedding LayerNorm
    hg, hb = gvec[3:4, :], gvec[4:5, :]                    # head LayerNorm

    # ---- MultiScaleEmbedding: conv-as-matmul and Linear proj folded on host ----
    y = jnp.dot(x_ref[0], cm_ref[...],
                preferred_element_type=jnp.float32) + bias_comb     # [H_CH, DIM]
    emb = _layer_norm(y, eg, eb)

    # ---- token assembly in registers (region tokens + pos-emb are in base_ref) ----
    xt = jnp.concatenate(
        [base_ref[0:R_PAD, :], base_ref[R_PAD:N_PAD, :] + emb], axis=0)   # [N_PAD, DIM]

    bias = bias_ref[...]                                   # additive mask [N_PAD, N_PAD]

    # ---- Transformer: DEPTH layers, statically unrolled (stacked weights) ----
    for l in range(DEPTH):
        lv = lvec_ref[l]                                   # [6, DIM] per-layer vec slab
        g1, b1, bo = lv[0:1, :], lv[1:2, :], lv[2:3, :]
        g2, b2, bb2 = lv[3:4, :], lv[4:5, :], lv[5:6, :]

        # Residual(PreNorm(Attention)); SCALE and Wq@Wk^T / Wv@Wo folded on host.
        h = _layer_norm(xt, g1, b1)
        h_b = _bf16(h)
        attn_out = jnp.zeros((N_PAD, DIM), jnp.float32)
        for hh in range(HEADS):
            w_idx = l * HEADS + hh
            hq = jnp.dot(h_b, wqk_ref[w_idx],
                         preferred_element_type=jnp.float32)          # [N_PAD, DIM]
            dots = jax.lax.dot_general(
                _bf16(hq), h_b, (((1,), (1,)), ((), ())),
                preferred_element_type=jnp.float32) + bias            # [N_PAD, N_PAD]
            dots = dots - jnp.max(dots, axis=-1, keepdims=True)
            e = jnp.exp(dots)
            denom = jnp.sum(e, axis=-1, keepdims=True)
            av = jnp.dot(_bf16(e), h_b,
                         preferred_element_type=jnp.float32)          # [N_PAD, DIM]
            av = av * pl.reciprocal(denom, approx=True)               # normalize small tile
            attn_out = attn_out + jnp.dot(_bf16(av), wvo_ref[w_idx],
                                          preferred_element_type=jnp.float32)
        xt = xt + attn_out + bo

        # Residual(PreNorm(FeedForward))
        h2 = _layer_norm(xt, g2, b2)
        f = jnp.dot(_bf16(h2), w1_ref[l],
                    preferred_element_type=jnp.float32) + bb1_ref[l]
        f = _gelu_exact(f)
        f = jnp.dot(_bf16(f), w2_ref[l],
                    preferred_element_type=jnp.float32) + bb2
        xt = xt + f

    # ---- mlp_head on the region-0 token (pool='cls'), lane-padded logits ----
    cls = xt[0:1, :]
    hc = _layer_norm(cls, hg, hb)
    o_ref[0] = jnp.dot(_bf16(hc), hw_ref[...],
                       preferred_element_type=jnp.float32) + hbias_ref[...]


# --------------------------- wrapper ---------------------------
def fnirs_t_forward(img, consts):
    # NCHW -> [B, H, (C W)] rows (input-channel-major per row); pre-cast to bf16 (host).
    x_rows = jnp.transpose(img, (0, 2, 1, 3)).reshape(
        B, H_CH, C_IN * W_T).astype(jnp.bfloat16)

    def full_spec(a):
        return pl.BlockSpec(a.shape, lambda b, _n=a.ndim: (0,) * _n)

    in_specs = ([pl.BlockSpec((1, H_CH, C_IN * W_T), lambda b: (b, 0, 0))]
                + [full_spec(a) for a in consts])

    embed_flops = 2 * H_CH * (C_IN * W_T) * DIM
    attn_flops = HEADS * (2 * N_PAD * DIM * DIM        # h @ Wqk
                          + 2 * N_PAD * N_PAD * DIM    # scores
                          + 2 * N_PAD * N_PAD * DIM    # e @ h
                          + 2 * N_PAD * DIM * DIM)     # av @ Wvo
    ff_flops = 4 * N_PAD * DIM * MLP_DIM
    flops = B * (embed_flops + DEPTH * (attn_flops + ff_flops) + 2 * DIM * NC_PAD)
    trans = B * DEPTH * (HEADS * N_PAD * N_PAD + N_PAD * MLP_DIM)
    nbytes = int(sum(a.size * a.dtype.itemsize for a in (x_rows, *consts))
                 + B * NC_PAD * 4)

    out = pl.pallas_call(
        fnirs_t_kernel,
        out_shape=jax.ShapeDtypeStruct((B, 1, NC_PAD), jnp.float32),
        grid=(B,),
        in_specs=in_specs,
        out_specs=pl.BlockSpec((1, 1, NC_PAD), lambda b: (b, 0, 0)),
        compiler_params=pltpu.CompilerParams(
            dimension_semantics=("parallel",),
            vmem_limit_bytes=16 * 1024 * 1024),
        cost_estimate=pl.CostEstimate(flops=flops, transcendentals=trans,
                                      bytes_accessed=nbytes),
    )(x_rows, *consts)
    return out[:, 0, :N_CLASS]


# --------------------------- parameter / constant construction ---------------------------
def init_params(key):
    keys = jax.random.split(key, 64)
    it = iter(keys)

    def nrm(shape, std):
        return jax.random.normal(next(it), shape, jnp.float32) * std

    p = {}
    p["conv_w"] = [nrm((OUT_CH, C_IN, 1, k), 0.1) for k in KERNEL_LENS]
    p["conv_b"] = [nrm((OUT_CH,), 0.1) for _ in KERNEL_LENS]
    p["proj_w"] = nrm((FEAT, DIM), 0.05)          # Linear(FEAT, DIM), stored [in, out]
    p["proj_b"] = nrm((1, DIM), 0.05)
    p["embed_ln_g"] = jnp.ones((1, DIM), jnp.float32)
    p["embed_ln_b"] = jnp.zeros((1, DIM), jnp.float32)
    p["pos_emb"] = nrm((1, 100 + NUM_REGIONS, DIM), 0.1)
    p["region_tok"] = nrm((1, NUM_REGIONS, DIM), 0.1)
    p["layers"] = []
    for _ in range(DEPTH):
        p["layers"].append(dict(
            g1=jnp.ones((1, DIM), jnp.float32), b1=jnp.zeros((1, DIM), jnp.float32),
            wq=nrm((HEADS, DIM, DIM_HEAD), 0.08),
            wk=nrm((HEADS, DIM, DIM_HEAD), 0.08),
            wv=nrm((HEADS, DIM, DIM_HEAD), 0.08),
            wo=nrm((HEADS, DIM_HEAD, DIM), 0.08),
            bo=nrm((1, DIM), 0.02),
            g2=jnp.ones((1, DIM), jnp.float32), b2=jnp.zeros((1, DIM), jnp.float32),
            w1=nrm((DIM, MLP_DIM), 0.08), bb1=nrm((1, MLP_DIM), 0.02),
            w2=nrm((MLP_DIM, DIM), 0.08), bb2=nrm((1, DIM), 0.02),
        ))
    p["head_g"] = jnp.ones((1, DIM), jnp.float32)
    p["head_b"] = jnp.zeros((1, DIM), jnp.float32)
    p["head_w"] = nrm((DIM, N_CLASS), 0.08)
    p["head_bias"] = nrm((1, N_CLASS), 0.02)
    return p


def build_conv_matrix(conv_w, conv_b):
    # Each (1,k)-conv (stride 4, pad (k-1)//2) + channel-cat + 'b c h w -> b h (c w)'
    # becomes one dense matrix acting on rows laid out as (input_channel, time).
    cms, cbs = [], []
    for ci, k in enumerate(KERNEL_LENS):
        w = np.asarray(conv_w[ci])                      # [8, 2, 1, k]
        pad = (k - 1) // 2
        M = np.zeros((C_IN, W_T, OUT_CH, OUT_W), dtype=np.float32)
        for ow in range(OUT_W):
            start = ow * STRIDE - pad
            for dt in range(k):
                t = start + dt
                if 0 <= t < W_T:
                    M[:, t, :, ow] += w[:, :, 0, dt].T   # [2, 8]
        cms.append(M.reshape(C_IN * W_T, OUT_CH * OUT_W))
        cbs.append(np.repeat(np.asarray(conv_b[ci]), OUT_W))   # feature = oc*OUT_W + ow
    cm = np.concatenate(cms, axis=1)                    # [2*W, FEAT]
    cb = np.concatenate(cbs)[None, :]                   # [1, FEAT]
    return jnp.asarray(cm), jnp.asarray(cb)


def build_token_base(region_tok, pos_emb):
    # Rows 0..6: region tokens + pos[:7]; row 7: dummy (sublane-alignment padding);
    # rows 8..63: pos for the 56 channel tokens.  (N_PAD == 64 exactly.)
    base = np.zeros((N_PAD, DIM), dtype=np.float32)
    rt = np.asarray(region_tok)[0]
    pe = np.asarray(pos_emb)[0]
    base[:NUM_REGIONS] = rt + pe[:NUM_REGIONS]
    base[R_PAD:R_PAD + H_CH] = pe[NUM_REGIONS:NUM_REGIONS + H_CH]
    return jnp.asarray(base)


def build_attn_bias():
    # Additive bias: 0 where attention is allowed, MASK_VALUE otherwise.
    # Original token index t>=7 (channels) maps to padded row t+1 (dummy row at 7).
    allowed = np.zeros((N_PAD, N_PAD), dtype=bool)
    for r, chans in enumerate(REGION_TO_CHANNELS):
        for v in chans:
            allowed[r, v + 1] = True
            allowed[v + 1, r] = True
    allowed[R_PAD:R_PAD + H_CH, R_PAD:R_PAD + H_CH] = True      # channel <-> channel
    # Dummy row: as a query allows everything (keeps softmax finite); as a key it
    # stays masked for all real query rows, so it never leaks into real tokens.
    allowed[NUM_REGIONS:R_PAD, :] = True
    bias = np.where(allowed, 0.0, MASK_VALUE).astype(np.float32)
    return jnp.asarray(bias)


def prepare_constants(p):
    cm, cb = build_conv_matrix(p["conv_w"], p["conv_b"])
    # Fold conv matrix and projection (both linear) on the host: one matmul in-kernel.
    cm_pw = (cm @ p["proj_w"]).astype(jnp.bfloat16)                 # [C_IN*W_T, DIM]
    bias_comb = cb @ p["proj_w"] + p["proj_b"]                      # [1, DIM] f32

    base = build_token_base(p["region_tok"], p["pos_emb"])
    bias = build_attn_bias()

    # Global [1, DIM] f32 vectors packed into one slab.
    gvec = jnp.concatenate([bias_comb, p["embed_ln_g"], p["embed_ln_b"],
                            p["head_g"], p["head_b"]], axis=0)      # [5, DIM]

    # Per-layer [1, DIM] f32 vectors packed into one slab: g1, b1, bo, g2, b2, bb2.
    lvec = jnp.stack([jnp.concatenate([lp["g1"], lp["b1"], lp["bo"],
                                       lp["g2"], lp["b2"], lp["bb2"]], axis=0)
                      for lp in p["layers"]], axis=0)               # [DEPTH, 6, DIM]
    bb1 = jnp.stack([lp["bb1"] for lp in p["layers"]], axis=0)      # [DEPTH, 1, MLP_DIM]

    # Fold per-head Wq(scaled)@Wk^T and Wv@Wo into [DIM, DIM] slabs (exact linear folds):
    # dots = scale * (h Wq)(h Wk)^T = h (scale*Wq Wk^T) h^T ; out_h = (attn h)(Wv Wo).
    wqk, wvo = [], []
    for lp in p["layers"]:
        for h in range(HEADS):
            wqk.append((lp["wq"][h] * SCALE) @ lp["wk"][h].T)       # [DIM, DIM]
            wvo.append(lp["wv"][h] @ lp["wo"][h])                   # [DIM, DIM]
    wqk = jnp.stack(wqk, axis=0).astype(jnp.bfloat16)               # [DEPTH*HEADS, DIM, DIM]
    wvo = jnp.stack(wvo, axis=0).astype(jnp.bfloat16)

    w1 = jnp.stack([lp["w1"] for lp in p["layers"]], 0).astype(jnp.bfloat16)
    w2 = jnp.stack([lp["w2"] for lp in p["layers"]], 0).astype(jnp.bfloat16)

    hw = jnp.zeros((DIM, NC_PAD), jnp.float32).at[:, :N_CLASS].set(p["head_w"])
    hbias = jnp.zeros((1, NC_PAD), jnp.float32).at[:, :N_CLASS].set(p["head_bias"])

    return [cm_pw, gvec, base, bias, lvec, bb1, wqk, wvo, w1, w2,
            hw.astype(jnp.bfloat16), hbias]


# --------------------------- main ---------------------------
if __name__ == "__main__":
    key = jax.random.PRNGKey(0)
    k_param, k_img = jax.random.split(key)
    params = init_params(k_param)
    consts = prepare_constants(params)
    img = jax.random.normal(k_img, (B, C_IN, H_CH, W_T), jnp.float32)

    logits = fnirs_t_forward(img, consts)
    logits = jax.block_until_ready(logits)
    assert logits.shape == (B, N_CLASS)
    assert bool(jnp.all(jnp.isfinite(logits)))
    print("KERNEL_OK")
</pallas_src>

<mosaic_0001>
module attributes {stable_mosaic.version = 11 : i64} {
  func.func @fnirs_t_kernel(%arg0: i32, %arg1: memref<1x56x128xbf16, #tpu.memory_space<vmem>>, %arg2: memref<128x32xbf16, #tpu.memory_space<vmem>>, %arg3: memref<5x32xf32, #tpu.memory_space<vmem>>, %arg4: memref<64x32xf32, #tpu.memory_space<vmem>>, %arg5: memref<64x64xf32, #tpu.memory_space<vmem>>, %arg6: memref<2x6x32xf32, #tpu.memory_space<vmem>>, %arg7: memref<2x1x64xf32, #tpu.memory_space<vmem>>, %arg8: memref<4x32x32xbf16, #tpu.memory_space<vmem>>, %arg9: memref<4x32x32xbf16, #tpu.memory_space<vmem>>, %arg10: memref<2x32x64xbf16, #tpu.memory_space<vmem>>, %arg11: memref<2x64x32xbf16, #tpu.memory_space<vmem>>, %arg12: memref<32x128xbf16, #tpu.memory_space<vmem>>, %arg13: memref<1x128xf32, #tpu.memory_space<vmem>>, %arg14: memref<1x1x128xf32, #tpu.memory_space<vmem>>) attributes {dimension_semantics = [#tpu.dimension_semantics<parallel>], iteration_bounds = array<i64: 2>, scalar_prefetch = 0 : i64, scratch_operands = 0 : i64, tpu.core_type = #tpu.core_type<tc>, window_params = [{transform_indices = @transform_0, window_bounds = array<i64: 1, 56, 128>}, {pipeline_mode = #tpu.pipeline_mode<synchronous>, transform_indices = @transform_1, window_bounds = array<i64: 128, 32>}, {pipeline_mode = #tpu.pipeline_mode<synchronous>, transform_indices = @transform_2, window_bounds = array<i64: 5, 32>}, {pipeline_mode = #tpu.pipeline_mode<synchronous>, transform_indices = @transform_3, window_bounds = array<i64: 64, 32>}, {pipeline_mode = #tpu.pipeline_mode<synchronous>, transform_indices = @transform_4, window_bounds = array<i64: 64, 64>}, {pipeline_mode = #tpu.pipeline_mode<synchronous>, transform_indices = @transform_5, window_bounds = array<i64: 2, 6, 32>}, {pipeline_mode = #tpu.pipeline_mode<synchronous>, transform_indices = @transform_6, window_bounds = array<i64: 2, 1, 64>}, {pipeline_mode = #tpu.pipeline_mode<synchronous>, transform_indices = @transform_7, window_bounds = array<i64: 4, 32, 32>}, {pipeline_mode = #tpu.pipeline_mode<synchronous>, transform_indices = @transform_8, window_bounds = array<i64: 4, 32, 32>}, {pipeline_mode = #tpu.pipeline_mode<synchronous>, transform_indices = @transform_9, window_bounds = array<i64: 2, 32, 64>}, {pipeline_mode = #tpu.pipeline_mode<synchronous>, transform_indices = @transform_10, window_bounds = array<i64: 2, 64, 32>}, {pipeline_mode = #tpu.pipeline_mode<synchronous>, transform_indices = @transform_11, window_bounds = array<i64: 32, 128>}, {pipeline_mode = #tpu.pipeline_mode<synchronous>, transform_indices = @transform_12, window_bounds = array<i64: 1, 128>}, {transform_indices = @transform_13, window_bounds = array<i64: 1, 1, 128>}]} {
    %c0 = arith.constant 0 : index
    %c0_0 = arith.constant 0 : index
    %0 = vector.load %arg3[%c0, %c0_0] : memref<5x32xf32, #tpu.memory_space<vmem>>, vector<5x32xf32>
    %1 = vector.extract_strided_slice %0 {offsets = [0, 0], sizes = [1, 32], strides = [1, 1]} : vector<5x32xf32> to vector<1x32xf32>
    %2 = vector.extract_strided_slice %0 {offsets = [1, 0], sizes = [1, 32], strides = [1, 1]} : vector<5x32xf32> to vector<1x32xf32>
    %3 = vector.extract_strided_slice %0 {offsets = [2, 0], sizes = [1, 32], strides = [1, 1]} : vector<5x32xf32> to vector<1x32xf32>
    %4 = vector.extract_strided_slice %0 {offsets = [3, 0], sizes = [1, 32], strides = [1, 1]} : vector<5x32xf32> to vector<1x32xf32>
    %5 = vector.extract_strided_slice %0 {offsets = [4, 0], sizes = [1, 32], strides = [1, 1]} : vector<5x32xf32> to vector<1x32xf32>
    %c0_1 = arith.constant 0 : index
    %c0_2 = arith.constant 0 : index
    %c0_3 = arith.constant 0 : index
    %6 = vector.load %arg1[%c0_1, %c0_2, %c0_3] : memref<1x56x128xbf16, #tpu.memory_space<vmem>>, vector<1x56x128xbf16>
    %7 = vector.shape_cast %6 : vector<1x56x128xbf16> to vector<56x128xbf16>
    %c0_4 = arith.constant 0 : index
    %c0_5 = arith.constant 0 : index
    %8 = vector.load %arg2[%c0_4, %c0_5] : memref<128x32xbf16, #tpu.memory_space<vmem>>, vector<128x32xbf16>
    %cst = arith.constant dense<0.000000e+00> : vector<56x32xf32>
    %9 = tpu.matmul %7, %8, %cst {dimension_numbers = #tpu.dot_dimension_numbers<[1], [0], [0], [1], [0, 0, 1, 1], [], []>} : vector<56x128xbf16>, vector<128x32xbf16>, vector<56x32xf32> -> vector<56x32xf32>
    %10 = vector.broadcast %1 : vector<1x32xf32> to vector<56x32xf32>
    %11 = arith.addf %9, %10 : vector<56x32xf32>
    %cst_6 = arith.constant dense<0.000000e+00> : vector<56xf32>
    %12 = vector.multi_reduction <add>, %11, %cst_6 [1] : vector<56x32xf32> to vector<56xf32>
    %13 = vector.shape_cast %12 : vector<56xf32> to vector<56x1xf32>
    %cst_7 = arith.constant 3.200000e+01 : f32
    %14 = vector.broadcast %cst_7 : f32 to vector<56x1xf32>
    %15 = arith.divf %13, %14 : vector<56x1xf32>
    %16 = vector.broadcast %15 : vector<56x1xf32> to vector<56x32xf32>
    %17 = arith.subf %11, %16 : vector<56x32xf32>
    %18 = arith.mulf %17, %17 : vector<56x32xf32>
    %cst_8 = arith.constant dense<0.000000e+00> : vector<56xf32>
    %19 = vector.multi_reduction <add>, %18, %cst_8 [1] : vector<56x32xf32> to vector<56xf32>
    %20 = vector.shape_cast %19 : vector<56xf32> to vector<56x1xf32>
    %cst_9 = arith.constant 3.200000e+01 : f32
    %21 = vector.broadcast %cst_9 : f32 to vector<56x1xf32>
    %22 = arith.divf %20, %21 : vector<56x1xf32>
    %23 = vector.broadcast %15 : vector<56x1xf32> to vector<56x32xf32>
    %24 = arith.subf %11, %23 : vector<56x32xf32>
    %cst_10 = arith.constant 9.99999974E-6 : f32
    %25 = vector.broadcast %cst_10 : f32 to vector<56x1xf32>
    %26 = arith.addf %22, %25 : vector<56x1xf32>
    %27 = math.rsqrt %26 : vector<56x1xf32>
    %28 = vector.broadcast %27 : vector<56x1xf32> to vector<56x32xf32>
    %29 = arith.mulf %24, %28 : vector<56x32xf32>
    %30 = vector.broadcast %2 : vector<1x32xf32> to vector<56x32xf32>
    %31 = arith.mulf %29, %30 : vector<56x32xf32>
    %32 = vector.broadcast %3 : vector<1x32xf32> to vector<56x32xf32>
    %33 = arith.addf %31, %32 : vector<56x32xf32>
    %c0_11 = arith.constant 0 : index
    %c0_12 = arith.constant 0 : index
    %34 = vector.load %arg4[%c0_11, %c0_12] : memref<64x32xf32, #tpu.memory_space<vmem>>, vector<8x32xf32>
    %c8 = arith.constant 8 : index
    %c0_13 = arith.constant 0 : index
    %35 = vector.load %arg4[%c8, %c0_13] : memref<64x32xf32, #tpu.memory_space<vmem>>, vector<56x32xf32>
    %36 = arith.addf %35, %33 : vector<56x32xf32>
    %37 = tpu.concatenate %34, %36 in 0 : vector<8x32xf32>, vector<56x32xf32> -> vector<64x32xf32>
    %c0_14 = arith.constant 0 : index
    %c0_15 = arith.constant 0 : index
    %38 = vector.load %arg5[%c0_14, %c0_15] : memref<64x64xf32, #tpu.memory_space<vmem>>, vector<64x64xf32>
    %c0_16 = arith.constant 0 : index
    %c0_17 = arith.constant 0 : index
    %c0_18 = arith.constant 0 : index
    %39 = vector.load %arg6[%c0_16, %c0_17, %c0_18] : memref<2x6x32xf32, #tpu.memory_space<vmem>>, vector<1x6x32xf32>
    %40 = vector.shape_cast %39 : vector<1x6x32xf32> to vector<6x32xf32>
    %41 = vector.extract_strided_slice %40 {offsets = [0, 0], sizes = [1, 32], strides = [1, 1]} : vector<6x32xf32> to vector<1x32xf32>
    %42 = vector.extract_strided_slice %40 {offsets = [1, 0], sizes = [1, 32], strides = [1, 1]} : vector<6x32xf32> to vector<1x32xf32>
    %43 = vector.extract_strided_slice %40 {offsets = [2, 0], sizes = [1, 32], strides = [1, 1]} : vector<6x32xf32> to vector<1x32xf32>
    %44 = vector.extract_strided_slice %40 {offsets = [3, 0], sizes = [1, 32], strides = [1, 1]} : vector<6x32xf32> to vector<1x32xf32>
    %45 = vector.extract_strided_slice %40 {offsets = [4, 0], sizes = [1, 32], strides = [1, 1]} : vector<6x32xf32> to vector<1x32xf32>
    %46 = vector.extract_strided_slice %40 {offsets = [5, 0], sizes = [1, 32], strides = [1, 1]} : vector<6x32xf32> to vector<1x32xf32>
    %cst_19 = arith.constant dense<0.000000e+00> : vector<64xf32>
    %47 = vector.multi_reduction <add>, %37, %cst_19 [1] : vector<64x32xf32> to vector<64xf32>
    %48 = vector.shape_cast %47 : vector<64xf32> to vector<64x1xf32>
    %cst_20 = arith.constant 3.200000e+01 : f32
    %49 = vector.broadcast %cst_20 : f32 to vector<64x1xf32>
    %50 = arith.divf %48, %49 : vector<64x1xf32>
    %51 = vector.broadcast %50 : vector<64x1xf32> to vector<64x32xf32>
    %52 = arith.subf %37, %51 : vector<64x32xf32>
    %53 = arith.mulf %52, %52 : vector<64x32xf32>
    %cst_21 = arith.constant dense<0.000000e+00> : vector<64xf32>
    %54 = vector.multi_reduction <add>, %53, %cst_21 [1] : vector<64x32xf32> to vector<64xf32>
    %55 = vector.shape_cast %54 : vector<64xf32> to vector<64x1xf32>
    %cst_22 = arith.constant 3.200000e+01 : f32
    %56 = vector.broadcast %cst_22 : f32 to vector<64x1xf32>
    %57 = arith.divf %55, %56 : vector<64x1xf32>
    %58 = vector.broadcast %50 : vector<64x1xf32> to vector<64x32xf32>
    %59 = arith.subf %37, %58 : vector<64x32xf32>
    %cst_23 = arith.constant 9.99999974E-6 : f32
    %60 = vector.broadcast %cst_23 : f32 to vector<64x1xf32>
    %61 = arith.addf %57, %60 : vector<64x1xf32>
    %62 = math.rsqrt %61 : vector<64x1xf32>
    %63 = vector.broadcast %62 : vector<64x1xf32> to vector<64x32xf32>
    %64 = arith.mulf %59, %63 : vector<64x32xf32>
    %65 = vector.broadcast %41 : vector<1x32xf32> to vector<64x32xf32>
    %66 = arith.mulf %64, %65 : vector<64x32xf32>
    %67 = vector.broadcast %42 : vector<1x32xf32> to vector<64x32xf32>
    %68 = arith.addf %66, %67 : vector<64x32xf32>
    %69 = arith.truncf %68 : vector<64x32xf32> to vector<64x32xbf16>
    %cst_24 = arith.constant 0.000000e+00 : f32
    %70 = vector.broadcast %cst_24 : f32 to vector<64x32xf32>
    %c0_25 = arith.constant 0 : index
    %c0_26 = arith.constant 0 : index
    %c0_27 = arith.constant 0 : index
    %71 = vector.load %arg8[%c0_25, %c0_26, %c0_27] : memref<4x32x32xbf16, #tpu.memory_space<vmem>>, vector<1x32x32xbf16>
    %72 = vector.shape_cast %71 : vector<1x32x32xbf16> to vector<32x32xbf16>
    %cst_28 = arith.constant dense<0.000000e+00> : vector<64x32xf32>
    %73 = tpu.matmul %69, %72, %cst_28 {dimension_numbers = #tpu.dot_dimension_numbers<[1], [0], [0], [1], [0, 0, 1, 1], [], []>} : vector<64x32xbf16>, vector<32x32xbf16>, vector<64x32xf32> -> vector<64x32xf32>
    %74 = arith.truncf %73 : vector<64x32xf32> to vector<64x32xbf16>
    %cst_29 = arith.constant dense<0.000000e+00> : vector<64x64xf32>
    %75 = tpu.matmul %74, %69, %cst_29 {dimension_numbers = #tpu.dot_dimension_numbers<[1], [1], [0], [0], [0, 0, 1, 0], [], []>} : vector<64x32xbf16>, vector<64x32xbf16>, vector<64x64xf32> -> vector<64x64xf32>
    %76 = arith.addf %75, %38 : vector<64x64xf32>
    %cst_30 = arith.constant dense<0xFF800000> : vector<64xf32>
    %77 = vector.multi_reduction <maximumf>, %76, %cst_30 [1] : vector<64x64xf32> to vector<64xf32>
    %78 = vector.shape_cast %77 : vector<64xf32> to vector<64x1xf32>
    %79 = vector.broadcast %78 : vector<64x1xf32> to vector<64x64xf32>
    %80 = arith.subf %76, %79 : vector<64x64xf32>
    %81 = math.exp %80 : vector<64x64xf32>
    %cst_31 = arith.constant dense<0.000000e+00> : vector<64xf32>
    %82 = vector.multi_reduction <add>, %81, %cst_31 [1] : vector<64x64xf32> to vector<64xf32>
    %83 = vector.shape_cast %82 : vector<64xf32> to vector<64x1xf32>
    %84 = arith.truncf %81 : vector<64x64xf32> to vector<64x64xbf16>
    %cst_32 = arith.constant dense<0.000000e+00> : vector<64x32xf32>
    %85 = tpu.matmul %84, %69, %cst_32 {dimension_numbers = #tpu.dot_dimension_numbers<[1], [0], [0], [1], [0, 0, 1, 1], [], []>} : vector<64x64xbf16>, vector<64x32xbf16>, vector<64x32xf32> -> vector<64x32xf32>
    %86 = tpu.reciprocal %83 {approx = true} : vector<64x1xf32> -> vector<64x1xf32>
    %87 = vector.broadcast %86 : vector<64x1xf32> to vector<64x32xf32>
    %88 = arith.mulf %85, %87 : vector<64x32xf32>
    %89 = arith.truncf %88 : vector<64x32xf32> to vector<64x32xbf16>
    %c0_33 = arith.constant 0 : index
    %c0_34 = arith.constant 0 : index
    %c0_35 = arith.constant 0 : index
    %90 = vector.load %arg9[%c0_33, %c0_34, %c0_35] : memref<4x32x32xbf16, #tpu.memory_space<vmem>>, vector<1x32x32xbf16>
    %91 = vector.shape_cast %90 : vector<1x32x32xbf16> to vector<32x32xbf16>
    %cst_36 = arith.constant dense<0.000000e+00> : vector<64x32xf32>
    %92 = tpu.matmul %89, %91, %cst_36 {dimension_numbers = #tpu.dot_dimension_numbers<[1], [0], [0], [1], [0, 0, 1, 1], [], []>} : vector<64x32xbf16>, vector<32x32xbf16>, vector<64x32xf32> -> vector<64x32xf32>
    %93 = arith.addf %70, %92 : vector<64x32xf32>
    %c1 = arith.constant 1 : index
    %c0_37 = arith.constant 0 : index
    %c0_38 = arith.constant 0 : index
    %94 = vector.load %arg8[%c1, %c0_37, %c0_38] : memref<4x32x32xbf16, #tpu.memory_space<vmem>>, vector<1x32x32xbf16>
    %95 = vector.shape_cast %94 : vector<1x32x32xbf16> to vector<32x32xbf16>
    %cst_39 = arith.constant dense<0.000000e+00> : vector<64x32xf32>
    %96 = tpu.matmul %69, %95, %cst_39 {dimension_numbers = #tpu.dot_dimension_numbers<[1], [0], [0], [1], [0, 0, 1, 1], [], []>} : vector<64x32xbf16>, vector<32x32xbf16>, vector<64x32xf32> -> vector<64x32xf32>
    %97 = arith.truncf %96 : vector<64x32xf32> to vector<64x32xbf16>
    %cst_40 = arith.constant dense<0.000000e+00> : vector<64x64xf32>
    %98 = tpu.matmul %97, %69, %cst_40 {dimension_numbers = #tpu.dot_dimension_numbers<[1], [1], [0], [0], [0, 0, 1, 0], [], []>} : vector<64x32xbf16>, vector<64x32xbf16>, vector<64x64xf32> -> vector<64x64xf32>
    %99 = arith.addf %98, %38 : vector<64x64xf32>
    %cst_41 = arith.constant dense<0xFF800000> : vector<64xf32>
    %100 = vector.multi_reduction <maximumf>, %99, %cst_41 [1] : vector<64x64xf32> to vector<64xf32>
    %101 = vector.shape_cast %100 : vector<64xf32> to vector<64x1xf32>
    %102 = vector.broadcast %101 : vector<64x1xf32> to vector<64x64xf32>
    %103 = arith.subf %99, %102 : vector<64x64xf32>
    %104 = math.exp %103 : vector<64x64xf32>
    %cst_42 = arith.constant dense<0.000000e+00> : vector<64xf32>
    %105 = vector.multi_reduction <add>, %104, %cst_42 [1] : vector<64x64xf32> to vector<64xf32>
    %106 = vector.shape_cast %105 : vector<64xf32> to vector<64x1xf32>
    %107 = arith.truncf %104 : vector<64x64xf32> to vector<64x64xbf16>
    %cst_43 = arith.constant dense<0.000000e+00> : vector<64x32xf32>
    %108 = tpu.matmul %107, %69, %cst_43 {dimension_numbers = #tpu.dot_dimension_numbers<[1], [0], [0], [1], [0, 0, 1, 1], [], []>} : vector<64x64xbf16>, vector<64x32xbf16>, vector<64x32xf32> -> vector<64x32xf32>
    %109 = tpu.reciprocal %106 {approx = true} : vector<64x1xf32> -> vector<64x1xf32>
    %110 = vector.broadcast %109 : vector<64x1xf32> to vector<64x32xf32>
    %111 = arith.mulf %108, %110 : vector<64x32xf32>
    %112 = arith.truncf %111 : vector<64x32xf32> to vector<64x32xbf16>
    %c1_44 = arith.constant 1 : index
    %c0_45 = arith.constant 0 : index
    %c0_46 = arith.constant 0 : index
    %113 = vector.load %arg9[%c1_44, %c0_45, %c0_46] : memref<4x32x32xbf16, #tpu.memory_space<vmem>>, vector<1x32x32xbf16>
    %114 = vector.shape_cast %113 : vector<1x32x32xbf16> to vector<32x32xbf16>
    %cst_47 = arith.constant dense<0.000000e+00> : vector<64x32xf32>
    %115 = tpu.matmul %112, %114, %cst_47 {dimension_numbers = #tpu.dot_dimension_numbers<[1], [0], [0], [1], [0, 0, 1, 1], [], []>} : vector<64x32xbf16>, vector<32x32xbf16>, vector<64x32xf32> -> vector<64x32xf32>
    %116 = arith.addf %93, %115 : vector<64x32xf32>
    %117 = arith.addf %37, %116 : vector<64x32xf32>
    %118 = vector.broadcast %43 : vector<1x32xf32> to vector<64x32xf32>
    %119 = arith.addf %117, %118 : vector<64x32xf32>
    %cst_48 = arith.constant dense<0.000000e+00> : vector<64xf32>
    %120 = vector.multi_reduction <add>, %119, %cst_48 [1] : vector<64x32xf32> to vector<64xf32>
    %121 = vector.shape_cast %120 : vector<64xf32> to vector<64x1xf32>
    %cst_49 = arith.constant 3.200000e+01 : f32
    %122 = vector.broadcast %cst_49 : f32 to vector<64x1xf32>
    %123 = arith.divf %121, %122 : vector<64x1xf32>
    %124 = vector.broadcast %123 : vector<64x1xf32> to vector<64x32xf32>
    %125 = arith.subf %119, %124 : vector<64x32xf32>
    %126 = arith.mulf %125, %125 : vector<64x32xf32>
    %cst_50 = arith.constant dense<0.000000e+00> : vector<64xf32>
    %127 = vector.multi_reduction <add>, %126, %cst_50 [1] : vector<64x32xf32> to vector<64xf32>
    %128 = vector.shape_cast %127 : vector<64xf32> to vector<64x1xf32>
    %cst_51 = arith.constant 3.200000e+01 : f32
    %129 = vector.broadcast %cst_51 : f32 to vector<64x1xf32>
    %130 = arith.divf %128, %129 : vector<64x1xf32>
    %131 = vector.broadcast %123 : vector<64x1xf32> to vector<64x32xf32>
    %132 = arith.subf %119, %131 : vector<64x32xf32>
    %cst_52 = arith.constant 9.99999974E-6 : f32
    %133 = vector.broadcast %cst_52 : f32 to vector<64x1xf32>
    %134 = arith.addf %130, %133 : vector<64x1xf32>
    %135 = math.rsqrt %134 : vector<64x1xf32>
    %136 = vector.broadcast %135 : vector<64x1xf32> to vector<64x32xf32>
    %137 = arith.mulf %132, %136 : vector<64x32xf32>
    %138 = vector.broadcast %44 : vector<1x32xf32> to vector<64x32xf32>
    %139 = arith.mulf %137, %138 : vector<64x32xf32>
    %140 = vector.broadcast %45 : vector<1x32xf32> to vector<64x32xf32>
    %141 = arith.addf %139, %140 : vector<64x32xf32>
    %142 = arith.truncf %141 : vector<64x32xf32> to vector<64x32xbf16>
    %c0_53 = arith.constant 0 : index
    %c0_54 = arith.constant 0 : index
    %c0_55 = arith.constant 0 : index
    %143 = vector.load %arg10[%c0_53, %c0_54, %c0_55] : memref<2x32x64xbf16, #tpu.memory_space<vmem>>, vector<1x32x64xbf16>
    %144 = vector.shape_cast %143 : vector<1x32x64xbf16> to vector<32x64xbf16>
    %cst_56 = arith.constant dense<0.000000e+00> : vector<64x64xf32>
    %145 = tpu.matmul %142, %144, %cst_56 {dimension_numbers = #tpu.dot_dimension_numbers<[1], [0], [0], [1], [0, 0, 1, 1], [], []>} : vector<64x32xbf16>, vector<32x64xbf16>, vector<64x64xf32> -> vector<64x64xf32>
    %c0_57 = arith.constant 0 : index
    %c0_58 = arith.constant 0 : index
    %c0_59 = arith.constant 0 : index
    %146 = vector.load %arg7[%c0_57, %c0_58, %c0_59] : memref<2x1x64xf32, #tpu.memory_space<vmem>>, vector<1x1x64xf32>
    %147 = vector.shape_cast %146 : vector<1x1x64xf32> to vector<1x64xf32>
    %148 = vector.broadcast %147 : vector<1x64xf32> to vector<64x64xf32>
    %149 = arith.addf %145, %148 : vector<64x64xf32>
    %cst_60 = arith.constant 5.000000e-01 : f32
    %150 = vector.broadcast %cst_60 : f32 to vector<64x64xf32>
    %151 = arith.mulf %150, %149 : vector<64x64xf32>
    %cst_61 = arith.constant 0.707106769 : f32
    %152 = vector.broadcast %cst_61 : f32 to vector<64x64xf32>
    %153 = arith.mulf %149, %152 : vector<64x64xf32>
    %cst_62 = arith.constant 0.000000e+00 : f32
    %154 = vector.broadcast %cst_62 : f32 to vector<64x64xf32>
    %155 = arith.cmpf oge, %153, %154 : vector<64x64xf32>
    %cst_63 = arith.constant 1.000000e+00 : f32
    %cst_64 = arith.constant -1.000000e+00 : f32
    %156 = vector.broadcast %cst_63 : f32 to vector<64x64xf32>
    %157 = vector.broadcast %cst_64 : f32 to vector<64x64xf32>
    %158 = arith.select %155, %156, %157 : vector<64x64xi1>, vector<64x64xf32>
    %159 = math.absf %153 : vector<64x64xf32>
    %cst_65 = arith.constant 0.327591091 : f32
    %160 = vector.broadcast %cst_65 : f32 to vector<64x64xf32>
    %161 = arith.mulf %160, %159 : vector<64x64xf32>
    %cst_66 = arith.constant 1.000000e+00 : f32
    %162 = vector.broadcast %cst_66 : f32 to vector<64x64xf32>
    %163 = arith.addf %162, %161 : vector<64x64xf32>
    %cst_67 = arith.constant 1.000000e+00 : f32
    %164 = vector.broadcast %cst_67 : f32 to vector<64x64xf32>
    %165 = arith.divf %164, %163 : vector<64x64xf32>
    %cst_68 = arith.constant 1.06140542 : f32
    %166 = vector.broadcast %cst_68 : f32 to vector<64x64xf32>
    %167 = arith.mulf %166, %165 : vector<64x64xf32>
    %cst_69 = arith.constant -1.45315206 : f32
    %168 = vector.broadcast %cst_69 : f32 to vector<64x64xf32>
    %169 = arith.addf %167, %168 : vector<64x64xf32>
    %170 = arith.mulf %169, %165 : vector<64x64xf32>
    %cst_70 = arith.constant 1.42141378 : f32
    %171 = vector.broadcast %cst_70 : f32 to vector<64x64xf32>
    %172 = arith.addf %170, %171 : vector<64x64xf32>
    %173 = arith.mulf %172, %165 : vector<64x64xf32>
    %cst_71 = arith.constant -0.284496725 : f32
    %174 = vector.broadcast %cst_71 : f32 to vector<64x64xf32>
    %175 = arith.addf %173, %174 : vector<64x64xf32>
    %176 = arith.mulf %175, %165 : vector<64x64xf32>
    %cst_72 = arith.constant 0.254829586 : f32
    %177 = vector.broadcast %cst_72 : f32 to vector<64x64xf32>
    %178 = arith.addf %176, %177 : vector<64x64xf32>
    %179 = arith.mulf %178, %165 : vector<64x64xf32>
    %cst_73 = arith.constant 0.000000e+00 : f32
    %180 = vector.broadcast %cst_73 : f32 to vector<64x64xf32>
    %181 = arith.subf %180, %159 : vector<64x64xf32>
    %182 = arith.mulf %181, %159 : vector<64x64xf32>
    %183 = math.exp %182 : vector<64x64xf32>
    %184 = arith.mulf %179, %183 : vector<64x64xf32>
    %cst_74 = arith.constant 1.000000e+00 : f32
    %185 = vector.broadcast %cst_74 : f32 to vector<64x64xf32>
    %186 = arith.subf %185, %184 : vector<64x64xf32>
    %187 = arith.mulf %158, %186 : vector<64x64xf32>
    %cst_75 = arith.constant 1.000000e+00 : f32
    %188 = vector.broadcast %cst_75 : f32 to vector<64x64xf32>
    %189 = arith.addf %188, %187 : vector<64x64xf32>
    %190 = arith.mulf %151, %189 : vector<64x64xf32>
    %191 = arith.truncf %190 : vector<64x64xf32> to vector<64x64xbf16>
    %c0_76 = arith.constant 0 : index
    %c0_77 = arith.constant 0 : index
    %c0_78 = arith.constant 0 : index
    %192 = vector.load %arg11[%c0_76, %c0_77, %c0_78] : memref<2x64x32xbf16, #tpu.memory_space<vmem>>, vector<1x64x32xbf16>
    %193 = vector.shape_cast %192 : vector<1x64x32xbf16> to vector<64x32xbf16>
    %cst_79 = arith.constant dense<0.000000e+00> : vector<64x32xf32>
    %194 = tpu.matmul %191, %193, %cst_79 {dimension_numbers = #tpu.dot_dimension_numbers<[1], [0], [0], [1], [0, 0, 1, 1], [], []>} : vector<64x64xbf16>, vector<64x32xbf16>, vector<64x32xf32> -> vector<64x32xf32>
    %195 = vector.broadcast %46 : vector<1x32xf32> to vector<64x32xf32>
    %196 = arith.addf %194, %195 : vector<64x32xf32>
    %197 = arith.addf %119, %196 : vector<64x32xf32>
    %c1_80 = arith.constant 1 : index
    %c0_81 = arith.constant 0 : index
    %c0_82 = arith.constant 0 : index
    %198 = vector.load %arg6[%c1_80, %c0_81, %c0_82] : memref<2x6x32xf32, #tpu.memory_space<vmem>>, vector<1x6x32xf32>
    %199 = vector.shape_cast %198 : vector<1x6x32xf32> to vector<6x32xf32>
    %200 = vector.extract_strided_slice %199 {offsets = [0, 0], sizes = [1, 32], strides = [1, 1]} : vector<6x32xf32> to vector<1x32xf32>
    %201 = vector.extract_strided_slice %199 {offsets = [1, 0], sizes = [1, 32], strides = [1, 1]} : vector<6x32xf32> to vector<1x32xf32>
    %202 = vector.extract_strided_slice %199 {offsets = [2, 0], sizes = [1, 32], strides = [1, 1]} : vector<6x32xf32> to vector<1x32xf32>
    %203 = vector.extract_strided_slice %199 {offsets = [3, 0], sizes = [1, 32], strides = [1, 1]} : vector<6x32xf32> to vector<1x32xf32>
    %204 = vector.extract_strided_slice %199 {offsets = [4, 0], sizes = [1, 32], strides = [1, 1]} : vector<6x32xf32> to vector<1x32xf32>
    %205 = vector.extract_strided_slice %199 {offsets = [5, 0], sizes = [1, 32], strides = [1, 1]} : vector<6x32xf32> to vector<1x32xf32>
    %cst_83 = arith.constant dense<0.000000e+00> : vector<64xf32>
    %206 = vector.multi_reduction <add>, %197, %cst_83 [1] : vector<64x32xf32> to vector<64xf32>
    %207 = vector.shape_cast %206 : vector<64xf32> to vector<64x1xf32>
    %cst_84 = arith.constant 3.200000e+01 : f32
    %208 = vector.broadcast %cst_84 : f32 to vector<64x1xf32>
    %209 = arith.divf %207, %208 : vector<64x1xf32>
    %210 = vector.broadcast %209 : vector<64x1xf32> to vector<64x32xf32>
    %211 = arith.subf %197, %210 : vector<64x32xf32>
    %212 = arith.mulf %211, %211 : vector<64x32xf32>
    %cst_85 = arith.constant dense<0.000000e+00> : vector<64xf32>
    %213 = vector.multi_reduction <add>, %212, %cst_85 [1] : vector<64x32xf32> to vector<64xf32>
    %214 = vector.shape_cast %213 : vector<64xf32> to vector<64x1xf32>
    %cst_86 = arith.constant 3.200000e+01 : f32
    %215 = vector.broadcast %cst_86 : f32 to vector<64x1xf32>
    %216 = arith.divf %214, %215 : vector<64x1xf32>
    %217 = vector.broadcast %209 : vector<64x1xf32> to vector<64x32xf32>
    %218 = arith.subf %197, %217 : vector<64x32xf32>
    %cst_87 = arith.constant 9.99999974E-6 : f32
    %219 = vector.broadcast %cst_87 : f32 to vector<64x1xf32>
    %220 = arith.addf %216, %219 : vector<64x1xf32>
    %221 = math.rsqrt %220 : vector<64x1xf32>
    %222 = vector.broadcast %221 : vector<64x1xf32> to vector<64x32xf32>
    %223 = arith.mulf %218, %222 : vector<64x32xf32>
    %224 = vector.broadcast %200 : vector<1x32xf32> to vector<64x32xf32>
    %225 = arith.mulf %223, %224 : vector<64x32xf32>
    %226 = vector.broadcast %201 : vector<1x32xf32> to vector<64x32xf32>
    %227 = arith.addf %225, %226 : vector<64x32xf32>
    %228 = arith.truncf %227 : vector<64x32xf32> to vector<64x32xbf16>
    %cst_88 = arith.constant 0.000000e+00 : f32
    %229 = vector.broadcast %cst_88 : f32 to vector<64x32xf32>
    %c2 = arith.constant 2 : index
    %c0_89 = arith.constant 0 : index
    %c0_90 = arith.constant 0 : index
    %230 = vector.load %arg8[%c2, %c0_89, %c0_90] : memref<4x32x32xbf16, #tpu.memory_space<vmem>>, vector<1x32x32xbf16>
    %231 = vector.shape_cast %230 : vector<1x32x32xbf16> to vector<32x32xbf16>
    %cst_91 = arith.constant dense<0.000000e+00> : vector<64x32xf32>
    %232 = tpu.matmul %228, %231, %cst_91 {dimension_numbers = #tpu.dot_dimension_numbers<[1], [0], [0], [1], [0, 0, 1, 1], [], []>} : vector<64x32xbf16>, vector<32x32xbf16>, vector<64x32xf32> -> vector<64x32xf32>
    %233 = arith.truncf %232 : vector<64x32xf32> to vector<64x32xbf16>
    %cst_92 = arith.constant dense<0.000000e+00> : vector<64x64xf32>
    %234 = tpu.matmul %233, %228, %cst_92 {dimension_numbers = #tpu.dot_dimension_numbers<[1], [1], [0], [0], [0, 0, 1, 0], [], []>} : vector<64x32xbf16>, vector<64x32xbf16>, vector<64x64xf32> -> vector<64x64xf32>
    %235 = arith.addf %234, %38 : vector<64x64xf32>
    %cst_93 = arith.constant dense<0xFF800000> : vector<64xf32>
    %236 = vector.multi_reduction <maximumf>, %235, %cst_93 [1] : vector<64x64xf32> to vector<64xf32>
    %237 = vector.shape_cast %236 : vector<64xf32> to vector<64x1xf32>
    %238 = vector.broadcast %237 : vector<64x1xf32> to vector<64x64xf32>
    %239 = arith.subf %235, %238 : vector<64x64xf32>
    %240 = math.exp %239 : vector<64x64xf32>
    %cst_94 = arith.constant dense<0.000000e+00> : vector<64xf32>
    %241 = vector.multi_reduction <add>, %240, %cst_94 [1] : vector<64x64xf32> to vector<64xf32>
    %242 = vector.shape_cast %241 : vector<64xf32> to vector<64x1xf32>
    %243 = arith.truncf %240 : vector<64x64xf32> to vector<64x64xbf16>
    %cst_95 = arith.constant dense<0.000000e+00> : vector<64x32xf32>
    %244 = tpu.matmul %243, %228, %cst_95 {dimension_numbers = #tpu.dot_dimension_numbers<[1], [0], [0], [1], [0, 0, 1, 1], [], []>} : vector<64x64xbf16>, vector<64x32xbf16>, vector<64x32xf32> -> vector<64x32xf32>
    %245 = tpu.reciprocal %242 {approx = true} : vector<64x1xf32> -> vector<64x1xf32>
    %246 = vector.broadcast %245 : vector<64x1xf32> to vector<64x32xf32>
    %247 = arith.mulf %244, %246 : vector<64x32xf32>
    %248 = arith.truncf %247 : vector<64x32xf32> to vector<64x32xbf16>
    %c2_96 = arith.constant 2 : index
    %c0_97 = arith.constant 0 : index
    %c0_98 = arith.constant 0 : index
    %249 = vector.load %arg9[%c2_96, %c0_97, %c0_98] : memref<4x32x32xbf16, #tpu.memory_space<vmem>>, vector<1x32x32xbf16>
    %250 = vector.shape_cast %249 : vector<1x32x32xbf16> to vector<32x32xbf16>
    %cst_99 = arith.constant dense<0.000000e+00> : vector<64x32xf32>
    %251 = tpu.matmul %248, %250, %cst_99 {dimension_numbers = #tpu.dot_dimension_numbers<[1], [0], [0], [1], [0, 0, 1, 1], [], []>} : vector<64x32xbf16>, vector<32x32xbf16>, vector<64x32xf32> -> vector<64x32xf32>
    %252 = arith.addf %229, %251 : vector<64x32xf32>
    %c3 = arith.constant 3 : index
    %c0_100 = arith.constant 0 : index
    %c0_101 = arith.constant 0 : index
    %253 = vector.load %arg8[%c3, %c0_100, %c0_101] : memref<4x32x32xbf16, #tpu.memory_space<vmem>>, vector<1x32x32xbf16>
    %254 = vector.shape_cast %253 : vector<1x32x32xbf16> to vector<32x32xbf16>
    %cst_102 = arith.constant dense<0.000000e+00> : vector<64x32xf32>
    %255 = tpu.matmul %228, %254, %cst_102 {dimension_numbers = #tpu.dot_dimension_numbers<[1], [0], [0], [1], [0, 0, 1, 1], [], []>} : vector<64x32xbf16>, vector<32x32xbf16>, vector<64x32xf32> -> vector<64x32xf32>
    %256 = arith.truncf %255 : vector<64x32xf32> to vector<64x32xbf16>
    %cst_103 = arith.constant dense<0.000000e+00> : vector<64x64xf32>
    %257 = tpu.matmul %256, %228, %cst_103 {dimension_numbers = #tpu.dot_dimension_numbers<[1], [1], [0], [0], [0, 0, 1, 0], [], []>} : vector<64x32xbf16>, vector<64x32xbf16>, vector<64x64xf32> -> vector<64x64xf32>
    %258 = arith.addf %257, %38 : vector<64x64xf32>
    %cst_104 = arith.constant dense<0xFF800000> : vector<64xf32>
    %259 = vector.multi_reduction <maximumf>, %258, %cst_104 [1] : vector<64x64xf32> to vector<64xf32>
    %260 = vector.shape_cast %259 : vector<64xf32> to vector<64x1xf32>
    %261 = vector.broadcast %260 : vector<64x1xf32> to vector<64x64xf32>
    %262 = arith.subf %258, %261 : vector<64x64xf32>
    %263 = math.exp %262 : vector<64x64xf32>
    %cst_105 = arith.constant dense<0.000000e+00> : vector<64xf32>
    %264 = vector.multi_reduction <add>, %263, %cst_105 [1] : vector<64x64xf32> to vector<64xf32>
    %265 = vector.shape_cast %264 : vector<64xf32> to vector<64x1xf32>
    %266 = arith.truncf %263 : vector<64x64xf32> to vector<64x64xbf16>
    %cst_106 = arith.constant dense<0.000000e+00> : vector<64x32xf32>
    %267 = tpu.matmul %266, %228, %cst_106 {dimension_numbers = #tpu.dot_dimension_numbers<[1], [0], [0], [1], [0, 0, 1, 1], [], []>} : vector<64x64xbf16>, vector<64x32xbf16>, vector<64x32xf32> -> vector<64x32xf32>
    %268 = tpu.reciprocal %265 {approx = true} : vector<64x1xf32> -> vector<64x1xf32>
    %269 = vector.broadcast %268 : vector<64x1xf32> to vector<64x32xf32>
    %270 = arith.mulf %267, %269 : vector<64x32xf32>
    %271 = arith.truncf %270 : vector<64x32xf32> to vector<64x32xbf16>
    %c3_107 = arith.constant 3 : index
    %c0_108 = arith.constant 0 : index
    %c0_109 = arith.constant 0 : index
    %272 = vector.load %arg9[%c3_107, %c0_108, %c0_109] : memref<4x32x32xbf16, #tpu.memory_space<vmem>>, vector<1x32x32xbf16>
    %273 = vector.shape_cast %272 : vector<1x32x32xbf16> to vector<32x32xbf16>
    %cst_110 = arith.constant dense<0.000000e+00> : vector<64x32xf32>
    %274 = tpu.matmul %271, %273, %cst_110 {dimension_numbers = #tpu.dot_dimension_numbers<[1], [0], [0], [1], [0, 0, 1, 1], [], []>} : vector<64x32xbf16>, vector<32x32xbf16>, vector<64x32xf32> -> vector<64x32xf32>
    %275 = arith.addf %252, %274 : vector<64x32xf32>
    %276 = arith.addf %197, %275 : vector<64x32xf32>
    %277 = vector.broadcast %202 : vector<1x32xf32> to vector<64x32xf32>
    %278 = arith.addf %276, %277 : vector<64x32xf32>
    %cst_111 = arith.constant dense<0.000000e+00> : vector<64xf32>
    %279 = vector.multi_reduction <add>, %278, %cst_111 [1] : vector<64x32xf32> to vector<64xf32>
    %280 = vector.shape_cast %279 : vector<64xf32> to vector<64x1xf32>
    %cst_112 = arith.constant 3.200000e+01 : f32
    %281 = vector.broadcast %cst_112 : f32 to vector<64x1xf32>
    %282 = arith.divf %280, %281 : vector<64x1xf32>
    %283 = vector.broadcast %282 : vector<64x1xf32> to vector<64x32xf32>
    %284 = arith.subf %278, %283 : vector<64x32xf32>
    %285 = arith.mulf %284, %284 : vector<64x32xf32>
    %cst_113 = arith.constant dense<0.000000e+00> : vector<64xf32>
    %286 = vector.multi_reduction <add>, %285, %cst_113 [1] : vector<64x32xf32> to vector<64xf32>
    %287 = vector.shape_cast %286 : vector<64xf32> to vector<64x1xf32>
    %cst_114 = arith.constant 3.200000e+01 : f32
    %288 = vector.broadcast %cst_114 : f32 to vector<64x1xf32>
    %289 = arith.divf %287, %288 : vector<64x1xf32>
    %290 = vector.broadcast %282 : vector<64x1xf32> to vector<64x32xf32>
    %291 = arith.subf %278, %290 : vector<64x32xf32>
    %cst_115 = arith.constant 9.99999974E-6 : f32
    %292 = vector.broadcast %cst_115 : f32 to vector<64x1xf32>
    %293 = arith.addf %289, %292 : vector<64x1xf32>
    %294 = math.rsqrt %293 : vector<64x1xf32>
    %295 = vector.broadcast %294 : vector<64x1xf32> to vector<64x32xf32>
    %296 = arith.mulf %291, %295 : vector<64x32xf32>
    %297 = vector.broadcast %203 : vector<1x32xf32> to vector<64x32xf32>
    %298 = arith.mulf %296, %297 : vector<64x32xf32>
    %299 = vector.broadcast %204 : vector<1x32xf32> to vector<64x32xf32>
    %300 = arith.addf %298, %299 : vector<64x32xf32>
    %301 = arith.truncf %300 : vector<64x32xf32> to vector<64x32xbf16>
    %c1_116 = arith.constant 1 : index
    %c0_117 = arith.constant 0 : index
    %c0_118 = arith.constant 0 : index
    %302 = vector.load %arg10[%c1_116, %c0_117, %c0_118] : memref<2x32x64xbf16, #tpu.memory_space<vmem>>, vector<1x32x64xbf16>
    %303 = vector.shape_cast %302 : vector<1x32x64xbf16> to vector<32x64xbf16>
    %cst_119 = arith.constant dense<0.000000e+00> : vector<64x64xf32>
    %304 = tpu.matmul %301, %303, %cst_119 {dimension_numbers = #tpu.dot_dimension_numbers<[1], [0], [0], [1], [0, 0, 1, 1], [], []>} : vector<64x32xbf16>, vector<32x64xbf16>, vector<64x64xf32> -> vector<64x64xf32>
    %c1_120 = arith.constant 1 : index
    %c0_121 = arith.constant 0 : index
    %c0_122 = arith.constant 0 : index
    %305 = vector.load %arg7[%c1_120, %c0_121, %c0_122] : memref<2x1x64xf32, #tpu.memory_space<vmem>>, vector<1x1x64xf32>
    %306 = vector.shape_cast %305 : vector<1x1x64xf32> to vector<1x64xf32>
    %307 = vector.broadcast %306 : vector<1x64xf32> to vector<64x64xf32>
    %308 = arith.addf %304, %307 : vector<64x64xf32>
    %cst_123 = arith.constant 5.000000e-01 : f32
    %309 = vector.broadcast %cst_123 : f32 to vector<64x64xf32>
    %310 = arith.mulf %309, %308 : vector<64x64xf32>
    %cst_124 = arith.constant 0.707106769 : f32
    %311 = vector.broadcast %cst_124 : f32 to vector<64x64xf32>
    %312 = arith.mulf %308, %311 : vector<64x64xf32>
    %cst_125 = arith.constant 0.000000e+00 : f32
    %313 = vector.broadcast %cst_125 : f32 to vector<64x64xf32>
    %314 = arith.cmpf oge, %312, %313 : vector<64x64xf32>
    %cst_126 = arith.constant 1.000000e+00 : f32
    %cst_127 = arith.constant -1.000000e+00 : f32
    %315 = vector.broadcast %cst_126 : f32 to vector<64x64xf32>
    %316 = vector.broadcast %cst_127 : f32 to vector<64x64xf32>
    %317 = arith.select %314, %315, %316 : vector<64x64xi1>, vector<64x64xf32>
    %318 = math.absf %312 : vector<64x64xf32>
    %cst_128 = arith.constant 0.327591091 : f32
    %319 = vector.broadcast %cst_128 : f32 to vector<64x64xf32>
    %320 = arith.mulf %319, %318 : vector<64x64xf32>
    %cst_129 = arith.constant 1.000000e+00 : f32
    %321 = vector.broadcast %cst_129 : f32 to vector<64x64xf32>
    %322 = arith.addf %321, %320 : vector<64x64xf32>
    %cst_130 = arith.constant 1.000000e+00 : f32
    %323 = vector.broadcast %cst_130 : f32 to vector<64x64xf32>
    %324 = arith.divf %323, %322 : vector<64x64xf32>
    %cst_131 = arith.constant 1.06140542 : f32
    %325 = vector.broadcast %cst_131 : f32 to vector<64x64xf32>
    %326 = arith.mulf %325, %324 : vector<64x64xf32>
    %cst_132 = arith.constant -1.45315206 : f32
    %327 = vector.broadcast %cst_132 : f32 to vector<64x64xf32>
    %328 = arith.addf %326, %327 : vector<64x64xf32>
    %329 = arith.mulf %328, %324 : vector<64x64xf32>
    %cst_133 = arith.constant 1.42141378 : f32
    %330 = vector.broadcast %cst_133 : f32 to vector<64x64xf32>
    %331 = arith.addf %329, %330 : vector<64x64xf32>
    %332 = arith.mulf %331, %324 : vector<64x64xf32>
    %cst_134 = arith.constant -0.284496725 : f32
    %333 = vector.broadcast %cst_134 : f32 to vector<64x64xf32>
    %334 = arith.addf %332, %333 : vector<64x64xf32>
    %335 = arith.mulf %334, %324 : vector<64x64xf32>
    %cst_135 = arith.constant 0.254829586 : f32
    %336 = vector.broadcast %cst_135 : f32 to vector<64x64xf32>
    %337 = arith.addf %335, %336 : vector<64x64xf32>
    %338 = arith.mulf %337, %324 : vector<64x64xf32>
    %cst_136 = arith.constant 0.000000e+00 : f32
    %339 = vector.broadcast %cst_136 : f32 to vector<64x64xf32>
    %340 = arith.subf %339, %318 : vector<64x64xf32>
    %341 = arith.mulf %340, %318 : vector<64x64xf32>
    %342 = math.exp %341 : vector<64x64xf32>
    %343 = arith.mulf %338, %342 : vector<64x64xf32>
    %cst_137 = arith.constant 1.000000e+00 : f32
    %344 = vector.broadcast %cst_137 : f32 to vector<64x64xf32>
    %345 = arith.subf %344, %343 : vector<64x64xf32>
    %346 = arith.mulf %317, %345 : vector<64x64xf32>
    %cst_138 = arith.constant 1.000000e+00 : f32
    %347 = vector.broadcast %cst_138 : f32 to vector<64x64xf32>
    %348 = arith.addf %347, %346 : vector<64x64xf32>
    %349 = arith.mulf %310, %348 : vector<64x64xf32>
    %350 = arith.truncf %349 : vector<64x64xf32> to vector<64x64xbf16>
    %c1_139 = arith.constant 1 : index
    %c0_140 = arith.constant 0 : index
    %c0_141 = arith.constant 0 : index
    %351 = vector.load %arg11[%c1_139, %c0_140, %c0_141] : memref<2x64x32xbf16, #tpu.memory_space<vmem>>, vector<1x64x32xbf16>
    %352 = vector.shape_cast %351 : vector<1x64x32xbf16> to vector<64x32xbf16>
    %cst_142 = arith.constant dense<0.000000e+00> : vector<64x32xf32>
    %353 = tpu.matmul %350, %352, %cst_142 {dimension_numbers = #tpu.dot_dimension_numbers<[1], [0], [0], [1], [0, 0, 1, 1], [], []>} : vector<64x64xbf16>, vector<64x32xbf16>, vector<64x32xf32> -> vector<64x32xf32>
    %354 = vector.broadcast %205 : vector<1x32xf32> to vector<64x32xf32>
    %355 = arith.addf %353, %354 : vector<64x32xf32>
    %356 = arith.addf %278, %355 : vector<64x32xf32>
    %357 = vector.extract_strided_slice %356 {offsets = [0, 0], sizes = [1, 32], strides = [1, 1]} : vector<64x32xf32> to vector<1x32xf32>
    %cst_143 = arith.constant dense<0.000000e+00> : vector<1xf32>
    %358 = vector.multi_reduction <add>, %357, %cst_143 [1] : vector<1x32xf32> to vector<1xf32>
    %359 = vector.shape_cast %358 : vector<1xf32> to vector<1x1xf32>
    %cst_144 = arith.constant 3.200000e+01 : f32
    %360 = vector.broadcast %cst_144 : f32 to vector<1x1xf32>
    %361 = arith.divf %359, %360 : vector<1x1xf32>
    %362 = vector.broadcast %361 : vector<1x1xf32> to vector<1x32xf32>
    %363 = arith.subf %357, %362 : vector<1x32xf32>
    %364 = arith.mulf %363, %363 : vector<1x32xf32>
    %cst_145 = arith.constant dense<0.000000e+00> : vector<1xf32>
    %365 = vector.multi_reduction <add>, %364, %cst_145 [1] : vector<1x32xf32> to vector<1xf32>
    %366 = vector.shape_cast %365 : vector<1xf32> to vector<1x1xf32>
    %cst_146 = arith.constant 3.200000e+01 : f32
    %367 = vector.broadcast %cst_146 : f32 to vector<1x1xf32>
    %368 = arith.divf %366, %367 : vector<1x1xf32>
    %369 = vector.broadcast %361 : vector<1x1xf32> to vector<1x32xf32>
    %370 = arith.subf %357, %369 : vector<1x32xf32>
    %cst_147 = arith.constant 9.99999974E-6 : f32
    %371 = vector.broadcast %cst_147 : f32 to vector<1x1xf32>
    %372 = arith.addf %368, %371 : vector<1x1xf32>
    %373 = math.rsqrt %372 : vector<1x1xf32>
    %374 = vector.broadcast %373 : vector<1x1xf32> to vector<1x32xf32>
    %375 = arith.mulf %370, %374 : vector<1x32xf32>
    %376 = arith.mulf %375, %4 : vector<1x32xf32>
    %377 = arith.addf %376, %5 : vector<1x32xf32>
    %378 = arith.truncf %377 : vector<1x32xf32> to vector<1x32xbf16>
    %c0_148 = arith.constant 0 : index
    %c0_149 = arith.constant 0 : index
    %379 = vector.load %arg12[%c0_148, %c0_149] : memref<32x128xbf16, #tpu.memory_space<vmem>>, vector<32x128xbf16>
    %cst_150 = arith.constant dense<0.000000e+00> : vector<1x128xf32>
    %380 = tpu.matmul %378, %379, %cst_150 {dimension_numbers = #tpu.dot_dimension_numbers<[1], [0], [0], [1], [0, 0, 1, 1], [], []>} : vector<1x32xbf16>, vector<32x128xbf16>, vector<1x128xf32> -> vector<1x128xf32>
    %c0_151 = arith.constant 0 : index
    %c0_152 = arith.constant 0 : index
    %381 = vector.load %arg13[%c0_151, %c0_152] : memref<1x128xf32, #tpu.memory_space<vmem>>, vector<1x128xf32>
    %382 = arith.addf %380, %381 : vector<1x128xf32>
    %c0_153 = arith.constant 0 : index
    %c0_154 = arith.constant 0 : index
    %c0_155 = arith.constant 0 : index
    %383 = vector.load %arg14[%c0_153, %c0_154, %c0_155] : memref<1x1x128xf32, #tpu.memory_space<vmem>>, vector<1x1x128xf32>
    %384 = vector.shape_cast %383 : vector<1x1x128xf32> to vector<1x128xf32>
    %385 = vector.shape_cast %382 : vector<1x128xf32> to vector<1x1x128xf32>
    tpu.vector_store %arg14[%c0_153, %c0_154, %c0_155], %385 {strides = array<i32>} : memref<1x1x128xf32, #tpu.memory_space<vmem>>, vector<1x1x128xf32>,
    return
  }
  func.func @transform_0(%arg0: i32) -> (i32, i32, i32) {
    %c0_i32 = arith.constant 0 : i32
    %c0_i32_0 = arith.constant 0 : i32
    %c0_i32_1 = arith.constant 0 : i32
    return %arg0, %c0_i32, %c0_i32_0 : i32, i32, i32
  }
  func.func @transform_1(%arg0: i32) -> (i32, i32) {
    %c0_i32 = arith.constant 0 : i32
    %c0_i32_0 = arith.constant 0 : i32
    %c0_i32_1 = arith.constant 0 : i32
    return %c0_i32, %c0_i32_0 : i32, i32
  }
  func.func @transform_2(%arg0: i32) -> (i32, i32) {
    %c0_i32 = arith.constant 0 : i32
    %c0_i32_0 = arith.constant 0 : i32
    %c0_i32_1 = arith.constant 0 : i32
    return %c0_i32, %c0_i32_0 : i32, i32
  }
  func.func @transform_3(%arg0: i32) -> (i32, i32) {
    %c0_i32 = arith.constant 0 : i32
    %c0_i32_0 = arith.constant 0 : i32
    %c0_i32_1 = arith.constant 0 : i32
    return %c0_i32, %c0_i32_0 : i32, i32
  }
  func.func @transform_4(%arg0: i32) -> (i32, i32) {
    %c0_i32 = arith.constant 0 : i32
    %c0_i32_0 = arith.constant 0 : i32
    %c0_i32_1 = arith.constant 0 : i32
    return %c0_i32, %c0_i32_0 : i32, i32
  }
  func.func @transform_5(%arg0: i32) -> (i32, i32, i32) {
    %c0_i32 = arith.constant 0 : i32
    %c0_i32_0 = arith.constant 0 : i32
    %c0_i32_1 = arith.constant 0 : i32
    %c0_i32_2 = arith.constant 0 : i32
    return %c0_i32, %c0_i32_0, %c0_i32_1 : i32, i32, i32
  }
  func.func @transform_6(%arg0: i32) -> (i32, i32, i32) {
    %c0_i32 = arith.constant 0 : i32
    %c0_i32_0 = arith.constant 0 : i32
    %c0_i32_1 = arith.constant 0 : i32
    %c0_i32_2 = arith.constant 0 : i32
    return %c0_i32, %c0_i32_0, %c0_i32_1 : i32, i32, i32
  }
  func.func @transform_7(%arg0: i32) -> (i32, i32, i32) {
    %c0_i32 = arith.constant 0 : i32
    %c0_i32_0 = arith.constant 0 : i32
    %c0_i32_1 = arith.constant 0 : i32
    %c0_i32_2 = arith.constant 0 : i32
    return %c0_i32, %c0_i32_0, %c0_i32_1 : i32, i32, i32
  }
  func.func @transform_8(%arg0: i32) -> (i32, i32, i32) {
    %c0_i32 = arith.constant 0 : i32
    %c0_i32_0 = arith.constant 0 : i32
    %c0_i32_1 = arith.constant 0 : i32
    %c0_i32_2 = arith.constant 0 : i32
    return %c0_i32, %c0_i32_0, %c0_i32_1 : i32, i32, i32
  }
  func.func @transform_9(%arg0: i32) -> (i32, i32, i32) {
    %c0_i32 = arith.constant 0 : i32
    %c0_i32_0 = arith.constant 0 : i32
    %c0_i32_1 = arith.constant 0 : i32
    %c0_i32_2 = arith.constant 0 : i32
    return %c0_i32, %c0_i32_0, %c0_i32_1 : i32, i32, i32
  }
  func.func @transform_10(%arg0: i32) -> (i32, i32, i32) {
    %c0_i32 = arith.constant 0 : i32
    %c0_i32_0 = arith.constant 0 : i32
    %c0_i32_1 = arith.constant 0 : i32
    %c0_i32_2 = arith.constant 0 : i32
    return %c0_i32, %c0_i32_0, %c0_i32_1 : i32, i32, i32
  }
  func.func @transform_11(%arg0: i32) -> (i32, i32) {
    %c0_i32 = arith.constant 0 : i32
    %c0_i32_0 = arith.constant 0 : i32
    %c0_i32_1 = arith.constant 0 : i32
    return %c0_i32, %c0_i32_0 : i32, i32
  }
  func.func @transform_12(%arg0: i32) -> (i32, i32) {
    %c0_i32 = arith.constant 0 : i32
    %c0_i32_0 = arith.constant 0 : i32
    %c0_i32_1 = arith.constant 0 : i32
    return %c0_i32, %c0_i32_0 : i32, i32
  }
  func.func @transform_13(%arg0: i32) -> (i32, i32, i32) {
    %c0_i32 = arith.constant 0 : i32
    %c0_i32_0 = arith.constant 0 : i32
    %c0_i32_1 = arith.constant 0 : i32
    return %arg0, %c0_i32, %c0_i32_0 : i32, i32, i32
  }
}

</mosaic_0001>

<llo_original>
// kernel: tpu_custom_call.1
$region0: #{tpu_custom_call.1}
  #allocation0 [shape = 'u32[]', space=smem, size = 0x4, offset = 0x4, fixed_abs, tag = 'smem constant byte address 0x4 - core index']
  #allocation1 [shape = 'u32[144,128]{1,0:T(1,128)}', space=vmem, size = 0x12000, scoped, tag = 'internal scratch']
  %s0 = inlined_call_operand.vmem [shape: bf16[2,56,128], index: 0, kind: input, shape index: {}]
  %s1 = inlined_call_operand.vmem [shape: bf16[128,32], index: 1, kind: input, shape index: {}]
  %s2 = inlined_call_operand.hbm [shape: f32[5,32], index: 2, kind: input, shape index: {}]
  %s3 = inlined_call_operand.vmem [shape: f32[64,32], index: 3, kind: input, shape index: {}]
  %s4 = inlined_call_operand.vmem [shape: f32[64,64], index: 4, kind: input, shape index: {}]
  %s5 = inlined_call_operand.vmem [shape: f32[2,6,32], index: 5, kind: input, shape index: {}]
  %s6 = inlined_call_operand.vmem [shape: f32[2,1,64], index: 6, kind: input, shape index: {}]
  %s7 = inlined_call_operand.vmem [shape: bf16[4,32,32], index: 7, kind: input, shape index: {}]
  %s8 = inlined_call_operand.vmem [shape: bf16[4,32,32], index: 8, kind: input, shape index: {}]
  %s9 = inlined_call_operand.vmem [shape: bf16[2,32,64], index: 9, kind: input, shape index: {}]
  %s10 = inlined_call_operand.vmem [shape: bf16[2,64,32], index: 10, kind: input, shape index: {}]
  %s11 = inlined_call_operand.hbm [shape: bf16[32,128], index: 11, kind: input, shape index: {}]
  %s12 = inlined_call_operand.vmem [shape: f32[1,128], index: 12, kind: input, shape index: {}]
  %s13 = inlined_call_operand.hbm [shape: f32[2,1,128], index: 13, kind: output, shape index: {}]
  %s14 = sld [smem:[#allocation0]]
  $region93: #{tpu_custom_call.1} parent=0
    _
  %s16 = ssub.s32 1, %s14
  %s17 = scalar_select 0, %s16, %s14
  $region1: #{tpu_custom_call.1} parent=0
    #allocation2 [shape = 'u8[4096]{0}', space=vmem, size = 0x1000, scoped, tag = 'input window, operand 2, single buffered']
    #allocation3 [shape = 's32[2]{0}', space=sflag, size = 0x8, scoped, tag = 'scoped memory for tpu_custom_call.1']
    #allocation4 [shape = 's32[2]{0}', space=sflag, size = 0x8, scoped, tag = 'scoped memory for tpu_custom_call.1']
    #allocation5 [shape = 'u8[8192]{0}', space=vmem, size = 0x2000, scoped, tag = 'input window, operand 11, single buffered']
    #allocation6 [shape = 's32[1]{0}', space=sflag, size = 0x4, scoped, tag = 'scoped memory for tpu_custom_call.1']
    #allocation7 [shape = 'u8[1024]{0}', space=vmem, size = 0x400, scoped, tag = 'output window, operand 0']
    %18 = vsyncpa [#allocation3], 0
    %19 = vsyncpa [#allocation6], 0
    %20 = vsyncpa [#allocation4], 0
    %s21 = scalar_lea.sflag [#allocation4], 1
    %22 = vsyncpa %s21, 0
    loop: start=0, step=1, limit=4
    $region2: #{tpu_custom_call.1} parent=1 // loop_pre_header
      _
    $region3: #{tpu_custom_call.1} parent=1 // loop_header
      %s24 = sphi 0, %s28
      %p25 = scmp.ge.s32.totalorder %s24, 4
      %s34 = sphi 0, %s36
      %s37 = sphi 0, %s34
      %s38 = sphi 0, %s37
      %s54 = sphi 0, %s38
      %s58 = sphi 0, %s58
      %s60 = sphi 0, %s58
      %s61 = sphi 0, %s60
      %s75 = sphi 0, %s61
      %s79 = sphi 0, %s79
      %s81 = sphi 0, %s79
      %s82 = sphi 0, %s81
      %s96 = sphi 0, %s82
      %s100 = sphi 0, %s100
      %s102 = sphi 0, %s100
      %s103 = sphi 0, %s102
      %s117 = sphi 0, %s103
      %s121 = sphi 0, %s121
      %s123 = sphi 0, %s121
      %s124 = sphi 0, %s123
      %s138 = sphi 0, %s124
      %s142 = sphi 0, %s142
      %s144 = sphi 0, %s142
      %s145 = sphi 0, %s144
      %s159 = sphi 0, %s145
      %s163 = sphi 0, %s163
      %s165 = sphi 0, %s163
      %s166 = sphi 0, %s165
      %s180 = sphi 0, %s166
      %s184 = sphi 0, %s184
      %s186 = sphi 0, %s184
      %s187 = sphi 0, %s186
      %s201 = sphi 0, %s187
      %s205 = sphi 0, %s205
      %s207 = sphi 0, %s205
      %s208 = sphi 0, %s207
      %s222 = sphi 0, %s208
      %s226 = sphi 0, %s226
      %s228 = sphi 0, %s226
      %s229 = sphi 0, %s228
      %s243 = sphi 0, %s229
      %s247 = sphi 0, %s247
      %s249 = sphi 0, %s247
      %s250 = sphi 0, %s249
      %s264 = sphi 0, %s250
      %s268 = sphi 0, %s268
      %s270 = sphi 0, %s268
      %s271 = sphi 0, %s270
      %s285 = sphi 0, %s271
      %s289 = sphi 0, %s289
      %s291 = sphi 0, %s289
      %s292 = sphi 0, %s291
      %s306 = sphi 0, %s292
      %s312 = sphi 0, %s314
      %s315 = sphi 0, %s312
      %s316 = sphi 0, %s315
      %s332 = sphi 0, %s316
    $region4: #{tpu_custom_call.1} parent=1 // loop_header_branch
      %27 = sbr.rel (%p25) target = $region8
    $region5: #{tpu_custom_call.1} parent=1 // loop_body
      %s29 = ssub.s32 %s24, 1
      %s30 = ssub.s32 %s24, 2
      %s31 = sadd.s32 %s24, 1
      %s32 = ssub.s32 %s24, %s31
      %p33 = scmp.eq.s32.totalorder %s32, 0
      %s35 = sadd.s32 %s34, 1
      %s36 = scalar_select %p33, %s34, %s35
      %p39 = pneg %p33
      %p40 = scmp.eq.s32.totalorder %s24, 1
      %p41 = por %p39, %p40
      %p42 = scmp.ne.s32.totalorder %s34, %s37
      %p43 = scmp.eq.s32.totalorder %s24, 0
      %p44 = por %p42, %p43
      %p45 = scmp.ne.s32.totalorder %s34, %s37
      %p46 = scmp.eq.s32.totalorder %s29, 1
      %p47 = por %p45, %p46
      %p48 = scmp.ne.s32.totalorder %s37, %s38
      %p49 = scmp.eq.s32.totalorder %s29, 0
      %p50 = por %p48, %p49
      %p51 = scmp.ne.s32.totalorder %s37, %s38
      %p52 = scmp.eq.s32.totalorder %s30, 1
      %p53 = por %p51, %p52
      %p55 = scmp.ne.s32.totalorder %s38, %s54
      %p56 = scmp.eq.s32.totalorder %s30, 0
      %p57 = por %p55, %p56
      %s59 = sadd.s32 %s58, 1
      %p62 = scmp.eq.s32.totalorder %s24, 1
      %p63 = scmp.ne.s32.totalorder %s58, %s60
      %p64 = scmp.eq.s32.totalorder %s24, 0
      %p65 = por %p63, %p64
      %p66 = scmp.ne.s32.totalorder %s58, %s60
      %p67 = scmp.eq.s32.totalorder %s29, 1
      %p68 = por %p66, %p67
      %p69 = scmp.ne.s32.totalorder %s60, %s61
      %p70 = scmp.eq.s32.totalorder %s29, 0
      %p71 = por %p69, %p70
      %p72 = scmp.ne.s32.totalorder %s60, %s61
      %p73 = scmp.eq.s32.totalorder %s30, 1
      %p74 = por %p72, %p73
      %p76 = scmp.ne.s32.totalorder %s61, %s75
      %p77 = scmp.eq.s32.totalorder %s30, 0
      %p78 = por %p76, %p77
      %s80 = sadd.s32 %s79, 1
      %p83 = scmp.eq.s32.totalorder %s24, 1
      %p84 = scmp.ne.s32.totalorder %s79, %s81
      %p85 = scmp.eq.s32.totalorder %s24, 0
      %p86 = por %p84, %p85
      %p87 = scmp.ne.s32.totalorder %s79, %s81
      %p88 = scmp.eq.s32.totalorder %s29, 1
      %p89 = por %p87, %p88
      %p90 = scmp.ne.s32.totalorder %s81, %s82
      %p91 = scmp.eq.s32.totalorder %s29, 0
      %p92 = por %p90, %p91
      %p93 = scmp.ne.s32.totalorder %s81, %s82
      %p94 = scmp.eq.s32.totalorder %s30, 1
      %p95 = por %p93, %p94
      %p97 = scmp.ne.s32.totalorder %s82, %s96
      %p98 = scmp.eq.s32.totalorder %s30, 0
      %p99 = por %p97, %p98
      %s101 = sadd.s32 %s100, 1
      %p104 = scmp.eq.s32.totalorder %s24, 1
      %p105 = scmp.ne.s32.totalorder %s100, %s102
      %p106 = scmp.eq.s32.totalorder %s24, 0
      %p107 = por %p105, %p106
      %p108 = scmp.ne.s32.totalorder %s100, %s102
      %p109 = scmp.eq.s32.totalorder %s29, 1
      %p110 = por %p108, %p109
      %p111 = scmp.ne.s32.totalorder %s102, %s103
      %p112 = scmp.eq.s32.totalorder %s29, 0
      %p113 = por %p111, %p112
      %p114 = scmp.ne.s32.totalorder %s102, %s103
      %p115 = scmp.eq.s32.totalorder %s30, 1
      %p116 = por %p114, %p115
      %p118 = scmp.ne.s32.totalorder %s103, %s117
      %p119 = scmp.eq.s32.totalorder %s30, 0
      %p120 = por %p118, %p119
      %s122 = sadd.s32 %s121, 1
      %p125 = scmp.eq.s32.totalorder %s24, 1
      %p126 = scmp.ne.s32.totalorder %s121, %s123
      %p127 = scmp.eq.s32.totalorder %s24, 0
      %p128 = por %p126, %p127
      %p129 = scmp.ne.s32.totalorder %s121, %s123
      %p130 = scmp.eq.s32.totalorder %s29, 1
      %p131 = por %p129, %p130
      %p132 = scmp.ne.s32.totalorder %s123, %s124
      %p133 = scmp.eq.s32.totalorder %s29, 0
      %p134 = por %p132, %p133
      %p135 = scmp.ne.s32.totalorder %s123, %s124
      %p136 = scmp.eq.s32.totalorder %s30, 1
      %p137 = por %p135, %p136
      %p139 = scmp.ne.s32.totalorder %s124, %s138
      %p140 = scmp.eq.s32.totalorder %s30, 0
      %p141 = por %p139, %p140
      %s143 = sadd.s32 %s142, 1
      %p146 = scmp.eq.s32.totalorder %s24, 1
      %p147 = scmp.ne.s32.totalorder %s142, %s144
      %p148 = scmp.eq.s32.totalorder %s24, 0
      %p149 = por %p147, %p148
      %p150 = scmp.ne.s32.totalorder %s142, %s144
      %p151 = scmp.eq.s32.totalorder %s29, 1
      %p152 = por %p150, %p151
      %p153 = scmp.ne.s32.totalorder %s144, %s145
      %p154 = scmp.eq.s32.totalorder %s29, 0
      %p155 = por %p153, %p154
      %p156 = scmp.ne.s32.totalorder %s144, %s145
      %p157 = scmp.eq.s32.totalorder %s30, 1
      %p158 = por %p156, %p157
      %p160 = scmp.ne.s32.totalorder %s145, %s159
      %p161 = scmp.eq.s32.totalorder %s30, 0
      %p162 = por %p160, %p161
      %s164 = sadd.s32 %s163, 1
      %p167 = scmp.eq.s32.totalorder %s24, 1
      %p168 = scmp.ne.s32.totalorder %s163, %s165
      %p169 = scmp.eq.s32.totalorder %s24, 0
      %p170 = por %p168, %p169
      %p171 = scmp.ne.s32.totalorder %s163, %s165
      %p172 = scmp.eq.s32.totalorder %s29, 1
      %p173 = por %p171, %p172
      %p174 = scmp.ne.s32.totalorder %s165, %s166
      %p175 = scmp.eq.s32.totalorder %s29, 0
      %p176 = por %p174, %p175
      %p177 = scmp.ne.s32.totalorder %s165, %s166
      %p178 = scmp.eq.s32.totalorder %s30, 1
      %p179 = por %p177, %p178
      %p181 = scmp.ne.s32.totalorder %s166, %s180
      %p182 = scmp.eq.s32.totalorder %s30, 0
      %p183 = por %p181, %p182
      %s185 = sadd.s32 %s184, 1
      %p188 = scmp.eq.s32.totalorder %s24, 1
      %p189 = scmp.ne.s32.totalorder %s184, %s186
      %p190 = scmp.eq.s32.totalorder %s24, 0
      %p191 = por %p189, %p190
      %p192 = scmp.ne.s32.totalorder %s184, %s186
      %p193 = scmp.eq.s32.totalorder %s29, 1
      %p194 = por %p192, %p193
      %p195 = scmp.ne.s32.totalorder %s186, %s187
      %p196 = scmp.eq.s32.totalorder %s29, 0
      %p197 = por %p195, %p196
      %p198 = scmp.ne.s32.totalorder %s186, %s187
      %p199 = scmp.eq.s32.totalorder %s30, 1
      %p200 = por %p198, %p199
      %p202 = scmp.ne.s32.totalorder %s187, %s201
      %p203 = scmp.eq.s32.totalorder %s30, 0
      %p204 = por %p202, %p203
      %s206 = sadd.s32 %s205, 1
      %p209 = scmp.eq.s32.totalorder %s24, 1
      %p210 = scmp.ne.s32.totalorder %s205, %s207
      %p211 = scmp.eq.s32.totalorder %s24, 0
      %p212 = por %p210, %p211
      %p213 = scmp.ne.s32.totalorder %s205, %s207
      %p214 = scmp.eq.s32.totalorder %s29, 1
      %p215 = por %p213, %p214
      %p216 = scmp.ne.s32.totalorder %s207, %s208
      %p217 = scmp.eq.s32.totalorder %s29, 0
      %p218 = por %p216, %p217
      %p219 = scmp.ne.s32.totalorder %s207, %s208
      %p220 = scmp.eq.s32.totalorder %s30, 1
      %p221 = por %p219, %p220
      %p223 = scmp.ne.s32.totalorder %s208, %s222
      %p224 = scmp.eq.s32.totalorder %s30, 0
      %p225 = por %p223, %p224
      %s227 = sadd.s32 %s226, 1
      %p230 = scmp.eq.s32.totalorder %s24, 1
      %p231 = scmp.ne.s32.totalorder %s226, %s228
      %p232 = scmp.eq.s32.totalorder %s24, 0
      %p233 = por %p231, %p232
      %p234 = scmp.ne.s32.totalorder %s226, %s228
      %p235 = scmp.eq.s32.totalorder %s29, 1
      %p236 = por %p234, %p235
      %p237 = scmp.ne.s32.totalorder %s228, %s229
      %p238 = scmp.eq.s32.totalorder %s29, 0
      %p239 = por %p237, %p238
      %p240 = scmp.ne.s32.totalorder %s228, %s229
      %p241 = scmp.eq.s32.totalorder %s30, 1
      %p242 = por %p240, %p241
      %p244 = scmp.ne.s32.totalorder %s229, %s243
      %p245 = scmp.eq.s32.totalorder %s30, 0
      %p246 = por %p244, %p245
      %s248 = sadd.s32 %s247, 1
      %p251 = scmp.eq.s32.totalorder %s24, 1
      %p252 = scmp.ne.s32.totalorder %s247, %s249
      %p253 = scmp.eq.s32.totalorder %s24, 0
      %p254 = por %p252, %p253
      %p255 = scmp.ne.s32.totalorder %s247, %s249
      %p256 = scmp.eq.s32.totalorder %s29, 1
      %p257 = por %p255, %p256
      %p258 = scmp.ne.s32.totalorder %s249, %s250
      %p259 = scmp.eq.s32.totalorder %s29, 0
      %p260 = por %p258, %p259
      %p261 = scmp.ne.s32.totalorder %s249, %s250
      %p262 = scmp.eq.s32.totalorder %s30, 1
      %p263 = por %p261, %p262
      %p265 = scmp.ne.s32.totalorder %s250, %s264
      %p266 = scmp.eq.s32.totalorder %s30, 0
      %p267 = por %p265, %p266
      %s269 = sadd.s32 %s268, 1
      %p272 = scmp.eq.s32.totalorder %s24, 1
      %p273 = scmp.ne.s32.totalorder %s268, %s270
      %p274 = scmp.eq.s32.totalorder %s24, 0
      %p275 = por %p273, %p274
      %p276 = scmp.ne.s32.totalorder %s268, %s270
      %p277 = scmp.eq.s32.totalorder %s29, 1
      %p278 = por %p276, %p277
      %p279 = scmp.ne.s32.totalorder %s270, %s271
      %p280 = scmp.eq.s32.totalorder %s29, 0
      %p281 = por %p279, %p280
      %p282 = scmp.ne.s32.totalorder %s270, %s271
      %p283 = scmp.eq.s32.totalorder %s30, 1
      %p284 = por %p282, %p283
      %p286 = scmp.ne.s32.totalorder %s271, %s285
      %p287 = scmp.eq.s32.totalorder %s30, 0
      %p288 = por %p286, %p287
      %s290 = sadd.s32 %s289, 1
      %p293 = scmp.eq.s32.totalorder %s24, 1
      %p294 = scmp.ne.s32.totalorder %s289, %s291
      %p295 = scmp.eq.s32.totalorder %s24, 0
      %p296 = por %p294, %p295
      %p297 = scmp.ne.s32.totalorder %s289, %s291
      %p298 = scmp.eq.s32.totalorder %s29, 1
      %p299 = por %p297, %p298
      %p300 = scmp.ne.s32.totalorder %s291, %s292
      %p301 = scmp.eq.s32.totalorder %s29, 0
      %p302 = por %p300, %p301
      %p303 = scmp.ne.s32.totalorder %s291, %s292
      %p304 = scmp.eq.s32.totalorder %s30, 1
      %p305 = por %p303, %p304
      %p307 = scmp.ne.s32.totalorder %s292, %s306
      %p308 = scmp.eq.s32.totalorder %s30, 0
      %p309 = por %p307, %p308
      %s310 = ssub.s32 %s24, %s31
      %p311 = scmp.eq.s32.totalorder %s310, 0
      %s313 = sadd.s32 %s312, 1
      %s314 = scalar_select %p311, %s312, %s313
      %p317 = pneg %p311
      %p318 = scmp.eq.s32.totalorder %s24, 1
      %p319 = por %p317, %p318
      %p320 = scmp.ne.s32.totalorder %s312, %s315
      %p321 = scmp.eq.s32.totalorder %s24, 0
      %p322 = por %p320, %p321
      %p323 = scmp.ne.s32.totalorder %s312, %s315
      %p324 = scmp.eq.s32.totalorder %s29, 1
      %p325 = por %p323, %p324
      %p326 = scmp.ne.s32.totalorder %s315, %s316
      %p327 = scmp.eq.s32.totalorder %s29, 0
      %p328 = por %p326, %p327
      %p329 = scmp.ne.s32.totalorder %s315, %s316
      %p330 = scmp.eq.s32.totalorder %s30, 1
      %p331 = por %p329, %p330
      %p333 = scmp.ne.s32.totalorder %s316, %s332
      %p334 = scmp.eq.s32.totalorder %s30, 0
      %p335 = por %p333, %p334
      %p336 = scmp.le.s32.totalorder 1, %s24
      %p337 = scmp.lt.s32.totalorder %s24, 3
      %p338 = pnand %p336, %p337
      %p339 = pneg %p338
      // Predicated region
      $region9: #{tpu_custom_call.1} parent=5 // pred_check
        _
      $region10: #{tpu_custom_call.1} parent=5 // pred_check_branch
        %341 = sbr.rel (%p338) target = $region12
      $region11: #{tpu_custom_call.1} parent=5 // pred_region
        %s342 = ssub.s32 %s24, 1
        // Predicated region
        $region13: #{tpu_custom_call.1} parent=11 // pred_check
          %p343 = pneg %p71
        $region14: #{tpu_custom_call.1} parent=11 // pred_check_branch
          %345 = sbr.rel (%p343) target = $region16
        $region15: #{tpu_custom_call.1} parent=11 // pred_region
          _
        $region16: #{tpu_custom_call.1} parent=11 // pred_fallthru
          _
        // Predicated region
        $region17: #{tpu_custom_call.1} parent=11 // pred_check
          %p346 = pneg %p92
        $region18: #{tpu_custom_call.1} parent=11 // pred_check_branch
          %348 = sbr.rel (%p346) target = $region20
        $region19: #{tpu_custom_call.1} parent=11 // pred_region
          %s350 = ssub.s32 128, 128
          %351 = vsyncadd [#allocation3], %s350
          %s353 = sshll.u32 [#allocation2], 4
          %s354 = int_to_ptr.vmem [resolvable:$true] %s353
          %356 = dma.hbm_to_vmem [thread:$0]  %s2, 128, %s354, [#allocation3]
        $region20: #{tpu_custom_call.1} parent=11 // pred_fallthru
          _
        // Predicated region
        $region21: #{tpu_custom_call.1} parent=11 // pred_check
          %p357 = pneg %p113
        $region22: #{tpu_custom_call.1} parent=11 // pred_check_branch
          %359 = sbr.rel (%p357) target = $region24
        $region23: #{tpu_custom_call.1} parent=11 // pred_region
          _
        $region24: #{tpu_custom_call.1} parent=11 // pred_fallthru
          _
        // Predicated region
        $region25: #{tpu_custom_call.1} parent=11 // pred_check
          %p360 = pneg %p134
        $region26: #{tpu_custom_call.1} parent=11 // pred_check_branch
          %362 = sbr.rel (%p360) target = $region28
        $region27: #{tpu_custom_call.1} parent=11 // pred_region
          _
        $region28: #{tpu_custom_call.1} parent=11 // pred_fallthru
          _
        // Predicated region
        $region29: #{tpu_custom_call.1} parent=11 // pred_check
          %p363 = pneg %p155
        $region30: #{tpu_custom_call.1} parent=11 // pred_check_branch
          %365 = sbr.rel (%p363) target = $region32
        $region31: #{tpu_custom_call.1} parent=11 // pred_region
          _
        $region32: #{tpu_custom_call.1} parent=11 // pred_fallthru
          _
        // Predicated region
        $region33: #{tpu_custom_call.1} parent=11 // pred_check
          %p366 = pneg %p176
        $region34: #{tpu_custom_call.1} parent=11 // pred_check_branch
          %368 = sbr.rel (%p366) target = $region36
        $region35: #{tpu_custom_call.1} parent=11 // pred_region
          _
        $region36: #{tpu_custom_call.1} parent=11 // pred_fallthru
          _
        // Predicated region
        $region37: #{tpu_custom_call.1} parent=11 // pred_check
          %p369 = pneg %p197
        $region38: #{tpu_custom_call.1} parent=11 // pred_check_branch
          %371 = sbr.rel (%p369) target = $region40
        $region39: #{tpu_custom_call.1} parent=11 // pred_region
          _
        $region40: #{tpu_custom_call.1} parent=11 // pred_fallthru
          _
        // Predicated region
        $region41: #{tpu_custom_call.1} parent=11 // pred_check
          %p372 = pneg %p218
        $region42: #{tpu_custom_call.1} parent=11 // pred_check_branch
          %374 = sbr.rel (%p372) target = $region44
        $region43: #{tpu_custom_call.1} parent=11 // pred_region
          _
        $region44: #{tpu_custom_call.1} parent=11 // pred_fallthru
          _
        // Predicated region
        $region45: #{tpu_custom_call.1} parent=11 // pred_check
          %p375 = pneg %p239
        $region46: #{tpu_custom_call.1} parent=11 // pred_check_branch
          %377 = sbr.rel (%p375) target = $region48
        $region47: #{tpu_custom_call.1} parent=11 // pred_region
          _
        $region48: #{tpu_custom_call.1} parent=11 // pred_fallthru
          _
        // Predicated region
        $region49: #{tpu_custom_call.1} parent=11 // pred_check
          %p378 = pneg %p260
        $region50: #{tpu_custom_call.1} parent=11 // pred_check_branch
          %380 = sbr.rel (%p378) target = $region52
        $region51: #{tpu_custom_call.1} parent=11 // pred_region
          _
        $region52: #{tpu_custom_call.1} parent=11 // pred_fallthru
          _
        // Predicated region
        $region53: #{tpu_custom_call.1} parent=11 // pred_check
          %p381 = pneg %p281
        $region54: #{tpu_custom_call.1} parent=11 // pred_check_branch
          %383 = sbr.rel (%p381) target = $region56
        $region55: #{tpu_custom_call.1} parent=11 // pred_region
          %s385 = ssub.s32 256, 256
          %386 = vsyncadd [#allocation6], %s385
          %s387 = sshll.u32 [#allocation5], 4
          %s388 = int_to_ptr.vmem [resolvable:$true] %s387
          %393 = dma.hbm_to_vmem [thread:$0]  %s11, 256, %s388, [#allocation6], 64, 64, 4
        $region56: #{tpu_custom_call.1} parent=11 // pred_fallthru
          _
        // Predicated region
        $region57: #{tpu_custom_call.1} parent=11 // pred_check
          %p394 = pneg %p302
        $region58: #{tpu_custom_call.1} parent=11 // pred_check_branch
          %396 = sbr.rel (%p394) target = $region60
        $region59: #{tpu_custom_call.1} parent=11 // pred_region
          _
        $region60: #{tpu_custom_call.1} parent=11 // pred_fallthru
          _
      $region12: #{tpu_custom_call.1} parent=5 // pred_fallthru
        _
      %p397 = scmp.lt.s32.totalorder %s24, 2
      // Predicated region
      $region61: #{tpu_custom_call.1} parent=5 // pred_check
        %p398 = pneg %p397
      $region62: #{tpu_custom_call.1} parent=5 // pred_check_branch
        %400 = sbr.rel (%p398) target = $region64
      $region63: #{tpu_custom_call.1} parent=5 // pred_region
        // Predicated region
        $region65: #{tpu_custom_call.1} parent=63 // pred_check
          %p401 = pneg %p44
        $region66: #{tpu_custom_call.1} parent=63 // pred_check_branch
          %403 = sbr.rel (%p401) target = $region68
        $region67: #{tpu_custom_call.1} parent=63 // pred_region
          %p404 = scmp.lt.s32.totalorder %s24, 1
          %s405 = scalar_select %p404, %s24, 1
          %s406 = smul.addr %s405, 7
          %s407 = smul.addr %s406, 4
          %s408 = scalar_lea.vmem %s0, %s407
        $region68: #{tpu_custom_call.1} parent=63 // pred_fallthru
          _
      $region64: #{tpu_custom_call.1} parent=5 // pred_fallthru
        _
      %p409 = scmp.le.s32.totalorder 1, %s24
      %p410 = scmp.lt.s32.totalorder %s24, 3
      %p411 = pnand %p409, %p410
      %p412 = pneg %p411
      // Predicated region
      $region69: #{tpu_custom_call.1} parent=5 // pred_check
        _
      $region70: #{tpu_custom_call.1} parent=5 // pred_check_branch
        %414 = sbr.rel (%p411) target = $region72
      $region71: #{tpu_custom_call.1} parent=5 // pred_region
        %s415 = ssub.s32 %s24, 1
        // Predicated region
        $region73: #{tpu_custom_call.1} parent=71 // pred_check
          %p416 = pneg %p92
        $region74: #{tpu_custom_call.1} parent=71 // pred_check_branch
          %418 = sbr.rel (%p416) target = $region76
        $region75: #{tpu_custom_call.1} parent=71 // pred_region
          %419 = dma.done [#allocation3], 128
        $region76: #{tpu_custom_call.1} parent=71 // pred_fallthru
          _
        // Predicated region
        $region77: #{tpu_custom_call.1} parent=71 // pred_check
          %p420 = pneg %p281
        $region78: #{tpu_custom_call.1} parent=71 // pred_check_branch
          %422 = sbr.rel (%p420) target = $region80
        $region79: #{tpu_custom_call.1} parent=71 // pred_region
          %423 = dma.done [#allocation6], 256
        $region80: #{tpu_custom_call.1} parent=71 // pred_fallthru
          _
        %p424 = scmp.lt.s32.totalorder %s29, 1
        %s425 = scalar_select %p424, %s29, 1
        %s426 = smul.addr %s425, 7
        %s427 = smul.addr %s426, 4
        %s428 = scalar_lea.vmem %s0, %s427
        %p429 = pneg %p50
        %p430 = pneg %p47
        %p431 = pneg %p71
        %p432 = pneg %p68
        %p433 = pneg %p92
        %p434 = pneg %p89
        %p435 = pneg %p113
        %p436 = pneg %p110
        %p437 = pneg %p134
        %p438 = pneg %p131
        %p439 = pneg %p155
        %p440 = pneg %p152
        %p441 = pneg %p176
        %p442 = pneg %p173
        %p443 = pneg %p197
        %p444 = pneg %p194
        %p445 = pneg %p218
        %p446 = pneg %p215
        %p447 = pneg %p239
        %p448 = pneg %p236
        %p449 = pneg %p260
        %p450 = pneg %p257
        %p451 = pneg %p281
        %p452 = pneg %p278
        %p453 = pneg %p302
        %p454 = pneg %p299
        %p455 = pneg %p328
        %p456 = pneg %p325
        %s457 = sand.u32 %s315, 1
        %s458 = scalar_lea.sflag [#allocation4], %s457
        %s459 = sand.u32 %s315, 1
        %s460 = scalar_lea.vmem [#allocation7], %s459
        %p461 = scmp.lt.s32.totalorder %s29, 1
        %s462 = scalar_select %p461, %s29, 1
        %s463 = smul.addr %s462, 7
        %s464 = smul.addr %s463, 4
        %s465 = scalar_lea.vmem %s0, %s464
        %v467 = vld [vmem:[#allocation2] sm:$0x1f]
        %v468 = vld [vmem:[%s465] sm:$0xf]
        %v469 = vld [vmem:[%s465 + $0x4] sm:$0xf]
        %v470 = vld [vmem:[%s465 + $0x8] sm:$0xf]
        %v471 = vld [vmem:[%s465 + $0xc] sm:$0xf]
        %v472 = vld [vmem:[%s465 + $0x10] sm:$0xf]
        %v473 = vld [vmem:[%s465 + $0x14] sm:$0xf]
        %v474 = vld [vmem:[%s465 + $0x18] sm:$0xf]
        %v475 = vld [vmem:[%s1] sm:$0xf]
        %v476 = vld [vmem:[%s1 + $0x4] sm:$0xf]
        %v477 = vld [vmem:[%s1 + $0x8] sm:$0xf]
        %v478 = vld [vmem:[%s1 + $0xc] sm:$0xf]
        %v479 = vld [vmem:[%s1 + $0x10] sm:$0xf]
        %v480 = vld [vmem:[%s1 + $0x14] sm:$0xf]
        %v481 = vld [vmem:[%s1 + $0x18] sm:$0xf]
        %v482 = vld [vmem:[%s1 + $0x1c] sm:$0xf]
        %v483 = vld [vmem:[%s1 + $0x20] sm:$0xf]
        %v484 = vld [vmem:[%s1 + $0x24] sm:$0xf]
        %v485 = vld [vmem:[%s1 + $0x28] sm:$0xf]
        %v486 = vld [vmem:[%s1 + $0x2c] sm:$0xf]
        %v487 = vld [vmem:[%s1 + $0x30] sm:$0xf]
        %v488 = vld [vmem:[%s1 + $0x34] sm:$0xf]
        %v489 = vld [vmem:[%s1 + $0x38] sm:$0xf]
        %v490 = vld [vmem:[%s1 + $0x3c] sm:$0xf]
        %v491 = vlaneseq
        %v492 = vshrl.u32 %v491, 7
        %v493 = vsub.s32 0, %v492
        %v494 = vrot.slane %v467, %v493
        %v502 = vunpack.c.l.b16 %v468
        %v503 = vunpack.c.l.b16 %v469
        %v504 = vunpack.c.l.b16 %v470
        %v505 = vunpack.c.l.b16 %v471
        %v506 = vunpack.c.l.b16 %v472
        %v507 = vunpack.c.l.b16 %v473
        %v508 = vunpack.c.l.b16 %v474
        %v509 = vpack.c.b16 %v503, %v502
        %v510 = vpack.c.b16 %v505, %v504
        %v511 = vpack.c.b16 %v507, %v506
        %v512 = vpack.c.b16 %v508, %v508
        %v533 = vunpack.c.l.b16 %v475
        %v534 = vunpack.c.l.b16 %v476
        %v535 = vunpack.c.l.b16 %v477
        %v536 = vunpack.c.l.b16 %v478
        %v537 = vunpack.c.l.b16 %v479
        %v538 = vunpack.c.l.b16 %v480
        %v539 = vunpack.c.l.b16 %v481
        %v540 = vunpack.c.l.b16 %v482
        %v541 = vunpack.c.l.b16 %v483
        %v542 = vunpack.c.l.b16 %v484
        %v543 = vunpack.c.l.b16 %v485
        %v544 = vunpack.c.l.b16 %v486
        %v545 = vunpack.c.l.b16 %v487
        %v546 = vunpack.c.l.b16 %v488
        %v547 = vunpack.c.l.b16 %v489
        %v548 = vunpack.c.l.b16 %v490
        %v549 = vpack.c.b16 %v534, %v533
        %v550 = vpack.c.b16 %v536, %v535
        %v551 = vpack.c.b16 %v538, %v537
        %v552 = vpack.c.b16 %v540, %v539
        %v553 = vpack.c.b16 %v542, %v541
        %v554 = vpack.c.b16 %v544, %v543
        %v555 = vpack.c.b16 %v546, %v545
        %v556 = vpack.c.b16 %v548, %v547
        %565 = vmatprep.subr.bf16.mxu0 0
        %566 = vmatpush1.bf16.msra.mxu0 %v556
        %567 = vmatprep.subr.bf16.mxu0 0
        %568 = vmatpush1.bf16.msra.mxu0 %v555
        %569 = vmatprep.subr.bf16.mxu0 0
        %570 = vmatpush1.bf16.msra.mxu0 %v554
        %571 = vmatprep.subr.bf16.mxu0 0
        %572 = vmatpush1.bf16.msra.mxu0 %v553
        %573 = vmatprep.subr.bf16.mxu0 0
        %574 = vmatpush1.bf16.msra.mxu0 %v552
        %575 = vmatprep.subr.bf16.mxu0 0
        %576 = vmatpush1.bf16.msra.mxu0 %v551
        %577 = vmatprep.subr.bf16.mxu0 0
        %578 = vmatpush1.bf16.msra.mxu0 %v550
        %579 = vmatprep.subr.bf16.mxu0 0
        %580 = vmatpush1.bf16.msra.mxu0 %v549
        %581 = vmatprep.subr.bf16.mxu0 0
        %582 = vmatpush2.bf16.msra.mxu0 0
        %583 = vmatprep.subr.bf16.mxu0 0
        %584 = vmatpush2.bf16.msra.mxu0 0
        %585 = vmatprep.subr.bf16.mxu0 0
        %586 = vmatpush2.bf16.msra.mxu0 0
        %587 = vmatprep.subr.bf16.mxu0 0
        %588 = vmatpush2.bf16.msra.mxu0 0
        %589 = vmatprep.subr.bf16.mxu0 0
        %590 = vmatpush2.bf16.msra.mxu0 0
        %591 = vmatprep.subr.bf16.mxu0 0
        %592 = vmatpush2.bf16.msra.mxu0 0
        %593 = vmatprep.subr.bf16.mxu0 0
        %594 = vmatpush2.bf16.msra.mxu0 0
        %595 = vmatprep.subr.bf16.mxu0 0
        %596 = vmatpush2.bf16.msra.mxu0 0
        %597 = vmatprep.mubr.bf16.mxu0 0
        %598 = vmatmul.mubr.bf16.gmra.mxu0 %v509
        %v599 = vpop.f32.mrf.mxu0
        %v600 = vadd.f32 %v494, %v599
        %v601 = vpop.f32.mrf.mxu0
        %v602 = vpop.f32.mrf.mxu0
        %v603 = vadd.f32 %v494, %v602
        %v604 = vpop.f32.mrf.mxu0
        %605 = vmatprep.mubr.bf16.mxu0 0
        %606 = vmatmul.mubr.bf16.gmra.mxu0 %v510
        %v607 = vpop.f32.mrf.mxu0
        %v608 = vadd.f32 %v494, %v607
        %v609 = vpop.f32.mrf.mxu0
        %v610 = vpop.f32.mrf.mxu0
        %v611 = vadd.f32 %v494, %v610
        %v612 = vpop.f32.mrf.mxu0
        %613 = vmatprep.mubr.bf16.mxu0 0
        %614 = vmatmul.mubr.bf16.gmra.mxu0 %v511
        %v615 = vpop.f32.mrf.mxu0
        %v616 = vadd.f32 %v494, %v615
        %v617 = vpop.f32.mrf.mxu0
        %v618 = vpop.f32.mrf.mxu0
        %v619 = vadd.f32 %v494, %v618
        %v620 = vpop.f32.mrf.mxu0
        %621 = vmatprep.mubr.bf16.mxu0 0
        %622 = vmatmul.mubr.bf16.gmra.mxu0 %v512
        %v623 = vpop.f32.mrf.mxu0
        %v624 = vadd.f32 %v494, %v623
        %v625 = vpop.f32.mrf.mxu0
        %v626 = vpop.f32.mrf.mxu0
        %v627 = vpop.f32.mrf.mxu0
        %628 = vdwg.mxu0
        %vm629 = vcmask 261120
        %v630 = vsel %vm629, %v600, 0.0
        %631 = vadd.xlane.f32.xlu0 %v630
        %v632 = vpop.xlane.xlu0 %631
        %v633 = vsel %vm629, %v603, 0.0
        %634 = vadd.xlane.f32.xlu0 %v633
        %v635 = vpop.xlane.xlu0 %634
        %v636 = vsel %vm629, %v608, 0.0
        %637 = vadd.xlane.f32.xlu0 %v636
        %v638 = vpop.xlane.xlu0 %637
        %v639 = vsel %vm629, %v611, 0.0
        %640 = vadd.xlane.f32.xlu0 %v639
        %v641 = vpop.xlane.xlu0 %640
        %v642 = vsel %vm629, %v616, 0.0
        %643 = vadd.xlane.f32.xlu0 %v642
        %v644 = vpop.xlane.xlu0 %643
        %v645 = vsel %vm629, %v619, 0.0
        %646 = vadd.xlane.f32.xlu0 %v645
        %v647 = vpop.xlane.xlu0 %646
        %v648 = vsel %vm629, %v624, 0.0
        %649 = vadd.xlane.f32.xlu0 %v648
        %v650 = vpop.xlane.xlu0 %649
        %v651 = vrcp.pop 32.0
        %v652 = vmul.f32 %v632, %v651
        %v653 = vmul.f32 %v635, %v651
        %v654 = vmul.f32 %v638, %v651
        %v655 = vmul.f32 %v641, %v651
        %v656 = vmul.f32 %v644, %v651
        %v657 = vmul.f32 %v647, %v651
        %v658 = vmul.f32 %v650, %v651
        %v659 = vsub.f32 %v600, %v652
        %v660 = vsub.f32 %v603, %v653
        %v661 = vsub.f32 %v608, %v654
        %v662 = vsub.f32 %v611, %v655
        %v663 = vsub.f32 %v616, %v656
        %v664 = vsub.f32 %v619, %v657
        %v665 = vsub.f32 %v624, %v658
        %v666 = vmul.f32 %v659, %v659
        %v667 = vmul.f32 %v660, %v660
        %v668 = vmul.f32 %v661, %v661
        %v669 = vmul.f32 %v662, %v662
        %v670 = vmul.f32 %v663, %v663
        %v671 = vmul.f32 %v664, %v664
        %v672 = vmul.f32 %v665, %v665
        %v673 = vsel %vm629, %v666, 0.0
        %674 = vadd.xlane.f32.xlu0 %v673
        %v675 = vpop.xlane.xlu0 %674
        %v676 = vsel %vm629, %v667, 0.0
        %677 = vadd.xlane.f32.xlu0 %v676
        %v678 = vpop.xlane.xlu0 %677
        %v679 = vsel %vm629, %v668, 0.0
        %680 = vadd.xlane.f32.xlu0 %v679
        %v681 = vpop.xlane.xlu0 %680
        %v682 = vsel %vm629, %v669, 0.0
        %683 = vadd.xlane.f32.xlu0 %v682
        %v684 = vpop.xlane.xlu0 %683
        %v685 = vsel %vm629, %v670, 0.0
        %686 = vadd.xlane.f32.xlu0 %v685
        %v687 = vpop.xlane.xlu0 %686
        %v688 = vsel %vm629, %v671, 0.0
        %689 = vadd.xlane.f32.xlu0 %v688
        %v690 = vpop.xlane.xlu0 %689
        %v691 = vsel %vm629, %v672, 0.0
        %692 = vadd.xlane.f32.xlu0 %v691
        %v693 = vpop.xlane.xlu0 %692
        %v694 = vmul.f32 %v675, %v651
        %v695 = vmul.f32 %v678, %v651
        %v696 = vmul.f32 %v681, %v651
        %v697 = vmul.f32 %v684, %v651
        %v698 = vmul.f32 %v687, %v651
        %v699 = vmul.f32 %v690, %v651
        %v700 = vmul.f32 %v693, %v651
        %v701 = vadd.f32 %v694, 1e-05
        %v702 = vadd.f32 %v695, 1e-05
        %v703 = vadd.f32 %v696, 1e-05
        %v704 = vadd.f32 %v697, 1e-05
        %v705 = vadd.f32 %v698, 1e-05
        %v706 = vadd.f32 %v699, 1e-05
        %v707 = vadd.f32 %v700, 1e-05
        %v708 = vrsqrt.pop %v701
        %v709 = vrsqrt.pop %v702
        %v710 = vrsqrt.pop %v703
        %v711 = vrsqrt.pop %v704
        %v712 = vrsqrt.pop %v705
        %v713 = vrsqrt.pop %v706
        %v714 = vrsqrt.pop %v707
        %v715 = vmul.f32 %v659, %v708
        %v716 = vmul.f32 %v660, %v709
        %v717 = vmul.f32 %v661, %v710
        %v718 = vmul.f32 %v662, %v711
        %v719 = vmul.f32 %v663, %v712
        %v720 = vmul.f32 %v664, %v713
        %v721 = vmul.f32 %v665, %v714
        %v722 = vlaneseq
        %v723 = vshrl.u32 %v722, 7
        %v724 = vsub.s32 1, %v723
        %v725 = vrot.slane %v467, %v724
        %v726 = vmul.f32 %v715, %v725
        %v727 = vmul.f32 %v716, %v725
        %v728 = vmul.f32 %v717, %v725
        %v729 = vmul.f32 %v718, %v725
        %v730 = vmul.f32 %v719, %v725
        %v731 = vmul.f32 %v720, %v725
        %v732 = vmul.f32 %v721, %v725
        %v733 = vlaneseq
        %v734 = vshrl.u32 %v733, 7
        %v735 = vsub.s32 2, %v734
        %v736 = vrot.slane %v467, %v735
        %v737 = vadd.f32 %v726, %v736
        %v738 = vadd.f32 %v727, %v736
        %v739 = vadd.f32 %v728, %v736
        %v740 = vadd.f32 %v729, %v736
        %v741 = vadd.f32 %v730, %v736
        %v742 = vadd.f32 %v731, %v736
        %v743 = vadd.f32 %v732, %v736
        %v744 = vld [vmem:[%s3] sm:$0xff]
        %v745 = vld [vmem:[%s3 + $0x8] sm:$0xff]
        %v746 = vld [vmem:[%s3 + $0x10] sm:$0xff]
        %v747 = vld [vmem:[%s3 + $0x18] sm:$0xff]
        %v748 = vld [vmem:[%s3 + $0x20] sm:$0xff]
        %v749 = vld [vmem:[%s3 + $0x28] sm:$0xff]
        %v750 = vld [vmem:[%s3 + $0x30] sm:$0xff]
        %v751 = vld [vmem:[%s3 + $0x38] sm:$0xff]
        %v752 = vadd.f32 %v745, %v737
        %v753 = vadd.f32 %v746, %v738
        %v754 = vadd.f32 %v747, %v739
        %v755 = vadd.f32 %v748, %v740
        %v756 = vadd.f32 %v749, %v741
        %v757 = vadd.f32 %v750, %v742
        %v758 = vadd.f32 %v751, %v743
        %v759 = vld [vmem:[%s4] sm:$0xff]
        %v760 = vld [vmem:[%s4 + $0x8] sm:$0xff]
        %v761 = vld [vmem:[%s4 + $0x10] sm:$0xff]
        %v762 = vld [vmem:[%s4 + $0x18] sm:$0xff]
        %v763 = vld [vmem:[%s4 + $0x20] sm:$0xff]
        %v764 = vld [vmem:[%s4 + $0x28] sm:$0xff]
        %v765 = vld [vmem:[%s4 + $0x30] sm:$0xff]
        %v766 = vld [vmem:[%s4 + $0x38] sm:$0xff]
        %v767 = vld [vmem:[%s5] sm:$0x3f]
        %v768 = vsel %vm629, %v744, 0.0
        %769 = vadd.xlane.f32.xlu0 %v768
        %v770 = vpop.xlane.xlu0 %769
        %v771 = vsel %vm629, %v752, 0.0
        %772 = vadd.xlane.f32.xlu0 %v771
        %v773 = vpop.xlane.xlu0 %772
        %v774 = vsel %vm629, %v753, 0.0
        %775 = vadd.xlane.f32.xlu0 %v774
        %v776 = vpop.xlane.xlu0 %775
        %v777 = vsel %vm629, %v754, 0.0
        %778 = vadd.xlane.f32.xlu0 %v777
        %v779 = vpop.xlane.xlu0 %778
        %v780 = vsel %vm629, %v755, 0.0
        %781 = vadd.xlane.f32.xlu0 %v780
        %v782 = vpop.xlane.xlu0 %781
        %v783 = vsel %vm629, %v756, 0.0
        %784 = vadd.xlane.f32.xlu0 %v783
        %v785 = vpop.xlane.xlu0 %784
        %v786 = vsel %vm629, %v757, 0.0
        %787 = vadd.xlane.f32.xlu0 %v786
        %v788 = vpop.xlane.xlu0 %787
        %v789 = vsel %vm629, %v758, 0.0
        %790 = vadd.xlane.f32.xlu0 %v789
        %v791 = vpop.xlane.xlu0 %790
        %v792 = vmul.f32 %v770, %v651
        %v793 = vmul.f32 %v773, %v651
        %v794 = vmul.f32 %v776, %v651
        %v795 = vmul.f32 %v779, %v651
        %v796 = vmul.f32 %v782, %v651
        %v797 = vmul.f32 %v785, %v651
        %v798 = vmul.f32 %v788, %v651
        %v799 = vmul.f32 %v791, %v651
        %v800 = vsub.f32 %v744, %v792
        %v801 = vsub.f32 %v752, %v793
        %v802 = vsub.f32 %v753, %v794
        %v803 = vsub.f32 %v754, %v795
        %v804 = vsub.f32 %v755, %v796
        %v805 = vsub.f32 %v756, %v797
        %v806 = vsub.f32 %v757, %v798
        %v807 = vsub.f32 %v758, %v799
        %v808 = vmul.f32 %v800, %v800
        %v809 = vmul.f32 %v801, %v801
        %v810 = vmul.f32 %v802, %v802
        %v811 = vmul.f32 %v803, %v803
        %v812 = vmul.f32 %v804, %v804
        %v813 = vmul.f32 %v805, %v805
        %v814 = vmul.f32 %v806, %v806
        %v815 = vmul.f32 %v807, %v807
        %v816 = vsel %vm629, %v808, 0.0
        %817 = vadd.xlane.f32.xlu0 %v816
        %v818 = vpop.xlane.xlu0 %817
        %v819 = vsel %vm629, %v809, 0.0
        %820 = vadd.xlane.f32.xlu0 %v819
        %v821 = vpop.xlane.xlu0 %820
        %v822 = vsel %vm629, %v810, 0.0
        %823 = vadd.xlane.f32.xlu0 %v822
        %v824 = vpop.xlane.xlu0 %823
        %v825 = vsel %vm629, %v811, 0.0
        %826 = vadd.xlane.f32.xlu0 %v825
        %v827 = vpop.xlane.xlu0 %826
        %v828 = vsel %vm629, %v812, 0.0
        %829 = vadd.xlane.f32.xlu0 %v828
        %v830 = vpop.xlane.xlu0 %829
        %v831 = vsel %vm629, %v813, 0.0
        %832 = vadd.xlane.f32.xlu0 %v831
        %v833 = vpop.xlane.xlu0 %832
        %v834 = vsel %vm629, %v814, 0.0
        %835 = vadd.xlane.f32.xlu0 %v834
        %v836 = vpop.xlane.xlu0 %835
        %v837 = vsel %vm629, %v815, 0.0
        %838 = vadd.xlane.f32.xlu0 %v837
        %v839 = vpop.xlane.xlu0 %838
        %v840 = vmul.f32 %v818, %v651
        %v841 = vmul.f32 %v821, %v651
        %v842 = vmul.f32 %v824, %v651
        %v843 = vmul.f32 %v827, %v651
        %v844 = vmul.f32 %v830, %v651
        %v845 = vmul.f32 %v833, %v651
        %v846 = vmul.f32 %v836, %v651
        %v847 = vmul.f32 %v839, %v651
        %v848 = vadd.f32 %v840, 1e-05
        %v849 = vadd.f32 %v841, 1e-05
        %v850 = vadd.f32 %v842, 1e-05
        %v851 = vadd.f32 %v843, 1e-05
        %v852 = vadd.f32 %v844, 1e-05
        %v853 = vadd.f32 %v845, 1e-05
        %v854 = vadd.f32 %v846, 1e-05
        %v855 = vadd.f32 %v847, 1e-05
        %v856 = vrsqrt.pop %v848
        %v857 = vrsqrt.pop %v849
        %v858 = vrsqrt.pop %v850
        %v859 = vrsqrt.pop %v851
        %v860 = vrsqrt.pop %v852
        %v861 = vrsqrt.pop %v853
        %v862 = vrsqrt.pop %v854
        %v863 = vrsqrt.pop %v855
        %v864 = vmul.f32 %v800, %v856
        %v865 = vmul.f32 %v801, %v857
        %v866 = vmul.f32 %v802, %v858
        %v867 = vmul.f32 %v803, %v859
        %v868 = vmul.f32 %v804, %v860
        %v869 = vmul.f32 %v805, %v861
        %v870 = vmul.f32 %v806, %v862
        %v871 = vmul.f32 %v807, %v863
        %v872 = vlaneseq
        %v873 = vshrl.u32 %v872, 7
        %v874 = vsub.s32 0, %v873
        %v875 = vrot.slane %v767, %v874
        %v876 = vmul.f32 %v864, %v875
        %v877 = vmul.f32 %v865, %v875
        %v878 = vmul.f32 %v866, %v875
        %v879 = vmul.f32 %v867, %v875
        %v880 = vmul.f32 %v868, %v875
        %v881 = vmul.f32 %v869, %v875
        %v882 = vmul.f32 %v870, %v875
        %v883 = vmul.f32 %v871, %v875
        %v884 = vlaneseq
        %v885 = vshrl.u32 %v884, 7
        %v886 = vsub.s32 1, %v885
        %v887 = vrot.slane %v767, %v886
        %v888 = vadd.f32 %v876, %v887
        %v889 = vadd.f32 %v877, %v887
        %v890 = vadd.f32 %v878, %v887
        %v891 = vadd.f32 %v879, %v887
        %v892 = vadd.f32 %v880, %v887
        %v893 = vadd.f32 %v881, %v887
        %v894 = vadd.f32 %v882, %v887
        %v895 = vadd.f32 %v883, %v887
        %v896 = vpack.c.bf16 %v889, %v888
        %v897 = vpack.c.bf16 %v891, %v890
        %v898 = vpack.c.bf16 %v893, %v892
        %v899 = vpack.c.bf16 %v895, %v894
        %v900 = vld [vmem:[%s7] sm:$0xf]
        %v901 = vld [vmem:[%s7 + $0x4] sm:$0xf]
        %v902 = vld [vmem:[%s7 + $0x8] sm:$0xf]
        %v903 = vld [vmem:[%s7 + $0xc] sm:$0xf]
        %v908 = vunpack.c.l.b16 %v900
        %v909 = vunpack.c.l.b16 %v901
        %v910 = vunpack.c.l.b16 %v902
        %v911 = vunpack.c.l.b16 %v903
        %v912 = vpack.c.b16 %v909, %v908
        %v913 = vpack.c.b16 %v911, %v910
        %v917 = vsel %vm629, %v896, 0
        %v920 = vsel %vm629, %v897, 0
        %v923 = vsel %vm629, %v898, 0
        %v926 = vsel %vm629, %v899, 0
        %928 = vmatprep.subr.bf16.mxu0 0
        %929 = vmatpush1.bf16.msra.mxu0 0
        %930 = vmatprep.subr.bf16.mxu0 0
        %931 = vmatpush1.bf16.msra.mxu0 0
        %932 = vmatprep.subr.bf16.mxu0 0
        %933 = vmatpush1.bf16.msra.mxu0 0
        %934 = vmatprep.subr.bf16.mxu0 0
        %935 = vmatpush1.bf16.msra.mxu0 0
        %936 = vmatprep.subr.bf16.mxu0 0
        %937 = vmatpush1.bf16.msra.mxu0 0
        %938 = vmatprep.subr.bf16.mxu0 0
        %939 = vmatpush1.bf16.msra.mxu0 0
        %940 = vmatprep.subr.bf16.mxu0 0
        %941 = vmatpush1.bf16.msra.mxu0 %v913
        %942 = vmatprep.subr.bf16.mxu0 0
        %943 = vmatpush1.bf16.msra.mxu0 %v912
        %944 = vmatprep.subr.bf16.mxu0 0
        %945 = vmatpush2.bf16.msra.mxu0 0
        %946 = vmatprep.subr.bf16.mxu0 0
        %947 = vmatpush2.bf16.msra.mxu0 0
        %948 = vmatprep.subr.bf16.mxu0 0
        %949 = vmatpush2.bf16.msra.mxu0 0
        %950 = vmatprep.subr.bf16.mxu0 0
        %951 = vmatpush2.bf16.msra.mxu0 0
        %952 = vmatprep.subr.bf16.mxu0 0
        %953 = vmatpush2.bf16.msra.mxu0 0
        %954 = vmatprep.subr.bf16.mxu0 0
        %955 = vmatpush2.bf16.msra.mxu0 0
        %956 = vmatprep.subr.bf16.mxu0 0
        %957 = vmatpush2.bf16.msra.mxu0 0
        %958 = vmatprep.subr.bf16.mxu0 0
        %959 = vmatpush2.bf16.msra.mxu0 0
        %960 = vmatprep.mubr.bf16.mxu0 0
        %961 = vmatmul.mubr.bf16.gmra.mxu0 %v917
        %v962 = vpop.f32.mrf.mxu0
        %v963 = vadd.f32 0.0, %v962
        %v964 = vpop.f32.mrf.mxu0
        %v965 = vpop.f32.mrf.mxu0
        %v966 = vadd.f32 0.0, %v965
        %v967 = vpop.f32.mrf.mxu0
        %968 = vmatprep.mubr.bf16.mxu0 0
        %969 = vmatmul.mubr.bf16.gmra.mxu0 %v920
        %v970 = vpop.f32.mrf.mxu0
        %v971 = vadd.f32 0.0, %v970
        %v972 = vpop.f32.mrf.mxu0
        %v973 = vpop.f32.mrf.mxu0
        %v974 = vadd.f32 0.0, %v973
        %v975 = vpop.f32.mrf.mxu0
        %976 = vmatprep.mubr.bf16.mxu0 0
        %977 = vmatmul.mubr.bf16.gmra.mxu0 %v923
        %v978 = vpop.f32.mrf.mxu0
        %v979 = vadd.f32 0.0, %v978
        %v980 = vpop.f32.mrf.mxu0
        %v981 = vpop.f32.mrf.mxu0
        %v982 = vadd.f32 0.0, %v981
        %v983 = vpop.f32.mrf.mxu0
        %984 = vmatprep.mubr.bf16.mxu0 0
        %985 = vmatmul.mubr.bf16.gmra.mxu0 %v926
        %v986 = vpop.f32.mrf.mxu0
        %v987 = vadd.f32 0.0, %v986
        %v988 = vpop.f32.mrf.mxu0
        %v989 = vpop.f32.mrf.mxu0
        %v990 = vadd.f32 0.0, %v989
        %v991 = vpop.f32.mrf.mxu0
        %992 = vdwg.mxu0
        %v993 = vpack.c.bf16 %v966, %v963
        %v994 = vpack.c.bf16 %v974, %v971
        %v995 = vpack.c.bf16 %v982, %v979
        %v996 = vpack.c.bf16 %v990, %v987
        %v998 = vsel %vm629, %v993, 0
        %v1001 = vsel %vm629, %v994, 0
        %v1004 = vsel %vm629, %v995, 0
        %v1007 = vsel %vm629, %v996, 0
        %1009 = vmatprep.subr.bf16.mxu0 0
        %1010 = vmatpush1.bf16.xpose.msra.mxu0 0
        %1011 = vmatprep.subr.bf16.mxu0 0
        %1012 = vmatpush1.bf16.xpose.msra.mxu0 0
        %1013 = vmatprep.subr.bf16.mxu0 0
        %1014 = vmatpush1.bf16.xpose.msra.mxu0 0
        %1015 = vmatprep.subr.bf16.mxu0 0
        %1016 = vmatpush1.bf16.xpose.msra.mxu0 0
        %1017 = vmatprep.subr.bf16.mxu0 0
        %1018 = vmatpush1.bf16.xpose.msra.mxu0 %v926
        %1019 = vmatprep.subr.bf16.mxu0 0
        %1020 = vmatpush1.bf16.xpose.msra.mxu0 %v923
        %1021 = vmatprep.subr.bf16.mxu0 0
        %1022 = vmatpush1.bf16.xpose.msra.mxu0 %v920
        %1023 = vmatprep.subr.bf16.mxu0 0
        %1024 = vmatpush1.bf16.xpose.msra.mxu0 %v917
        %1025 = vmatprep.subr.bf16.mxu0 0
        %1026 = vmatpush2.bf16.xpose.msra.mxu0 0
        %1027 = vmatprep.subr.bf16.mxu0 0
        %1028 = vmatpush2.bf16.xpose.msra.mxu0 0
        %1029 = vmatprep.subr.bf16.mxu0 0
        %1030 = vmatpush2.bf16.xpose.msra.mxu0 0
        %1031 = vmatprep.subr.bf16.mxu0 0
        %1032 = vmatpush2.bf16.xpose.msra.mxu0 0
        %1033 = vmatprep.subr.bf16.mxu0 0
        %1034 = vmatpush2.bf16.xpose.msra.mxu0 0
        %1035 = vmatprep.subr.bf16.mxu0 0
        %1036 = vmatpush2.bf16.xpose.msra.mxu0 0
        %1037 = vmatprep.subr.bf16.mxu0 0
        %1038 = vmatpush2.bf16.xpose.msra.mxu0 0
        %1039 = vmatprep.subr.bf16.mxu0 0
        %1040 = vmatpush2.bf16.xpose.msra.mxu0 0
        %1041 = vmatprep.mubr.bf16.mxu0 0
        %1042 = vmatmul.mubr.bf16.gmra.mxu0 %v998
        %v1043 = vpop.f32.mrf.mxu0
        %v1044 = vadd.f32 %v759, %v1043
        %v1045 = vpop.f32.mrf.mxu0
        %v1046 = vpop.f32.mrf.mxu0
        %v1047 = vadd.f32 %v760, %v1046
        %v1048 = vpop.f32.mrf.mxu0
        %1049 = vmatprep.mubr.bf16.mxu0 0
        %1050 = vmatmul.mubr.bf16.gmra.mxu0 %v1001
        %v1051 = vpop.f32.mrf.mxu0
        %v1052 = vadd.f32 %v761, %v1051
        %v1053 = vpop.f32.mrf.mxu0
        %v1054 = vpop.f32.mrf.mxu0
        %v1055 = vadd.f32 %v762, %v1054
        %v1056 = vpop.f32.mrf.mxu0
        %1057 = vmatprep.mubr.bf16.mxu0 0
        %1058 = vmatmul.mubr.bf16.gmra.mxu0 %v1004
        %v1059 = vpop.f32.mrf.mxu0
        %v1060 = vadd.f32 %v763, %v1059
        %v1061 = vpop.f32.mrf.mxu0
        %v1062 = vpop.f32.mrf.mxu0
        %v1063 = vadd.f32 %v764, %v1062
        %v1064 = vpop.f32.mrf.mxu0
        %1065 = vmatprep.mubr.bf16.mxu0 0
        %1066 = vmatmul.mubr.bf16.gmra.mxu0 %v1007
        %v1067 = vpop.f32.mrf.mxu0
        %v1068 = vadd.f32 %v765, %v1067
        %v1069 = vpop.f32.mrf.mxu0
        %v1070 = vpop.f32.mrf.mxu0
        %v1071 = vadd.f32 %v766, %v1070
        %v1072 = vpop.f32.mrf.mxu0
        %1073 = vdwg.mxu0
        %vm1074 = vcmask 523264
        %v1075 = vsel %vm1074, %v1044, -inf
        %1076 = vmax.xlane.f32.xlu0 %v1075
        %v1077 = vpop.xlane.xlu0 %1076
        %v1078 = vsel %vm1074, %v1047, -inf
        %1079 = vmax.xlane.f32.xlu0 %v1078
        %v1080 = vpop.xlane.xlu0 %1079
        %v1081 = vsel %vm1074, %v1052, -inf
        %1082 = vmax.xlane.f32.xlu0 %v1081
        %v1083 = vpop.xlane.xlu0 %1082
        %v1084 = vsel %vm1074, %v1055, -inf
        %1085 = vmax.xlane.f32.xlu0 %v1084
        %v1086 = vpop.xlane.xlu0 %1085
        %v1087 = vsel %vm1074, %v1060, -inf
        %1088 = vmax.xlane.f32.xlu0 %v1087
        %v1089 = vpop.xlane.xlu0 %1088
        %v1090 = vsel %vm1074, %v1063, -inf
        %1091 = vmax.xlane.f32.xlu0 %v1090
        %v1092 = vpop.xlane.xlu0 %1091
        %v1093 = vsel %vm1074, %v1068, -inf
        %1094 = vmax.xlane.f32.xlu0 %v1093
        %v1095 = vpop.xlane.xlu0 %1094
        %v1096 = vsel %vm1074, %v1071, -inf
        %1097 = vmax.xlane.f32.xlu0 %v1096
        %v1098 = vpop.xlane.xlu0 %1097
        %v1099 = vsub.f32 %v1044, %v1077
        %v1100 = vsub.f32 %v1047, %v1080
        %v1101 = vsub.f32 %v1052, %v1083
        %v1102 = vsub.f32 %v1055, %v1086
        %v1103 = vsub.f32 %v1060, %v1089
        %v1104 = vsub.f32 %v1063, %v1092
        %v1105 = vsub.f32 %v1068, %v1095
        %v1106 = vsub.f32 %v1071, %v1098
        %v1107 = vmul.f32 %v1099, 1.442695
        %v1108 = vpow.pop %v1107
        %v1109 = vmul.f32 %v1100, 1.442695
        %v1110 = vpow.pop %v1109
        %v1111 = vmul.f32 %v1101, 1.442695
        %v1112 = vpow.pop %v1111
        %v1113 = vmul.f32 %v1102, 1.442695
        %v1114 = vpow.pop %v1113
        %v1115 = vmul.f32 %v1103, 1.442695
        %v1116 = vpow.pop %v1115
        %v1117 = vmul.f32 %v1104, 1.442695
        %v1118 = vpow.pop %v1117
        %v1119 = vmul.f32 %v1105, 1.442695
        %v1120 = vpow.pop %v1119
        %v1121 = vmul.f32 %v1106, 1.442695
        %v1122 = vpow.pop %v1121
        %v1123 = vsel %vm1074, %v1108, 0.0
        %1124 = vadd.xlane.f32.xlu0 %v1123
        %v1125 = vpop.xlane.xlu0 %1124
        %v1126 = vsel %vm1074, %v1110, 0.0
        %1127 = vadd.xlane.f32.xlu0 %v1126
        %v1128 = vpop.xlane.xlu0 %1127
        %v1129 = vsel %vm1074, %v1112, 0.0
        %1130 = vadd.xlane.f32.xlu0 %v1129
        %v1131 = vpop.xlane.xlu0 %1130
        %v1132 = vsel %vm1074, %v1114, 0.0
        %1133 = vadd.xlane.f32.xlu0 %v1132
        %v1134 = vpop.xlane.xlu0 %1133
        %v1135 = vsel %vm1074, %v1116, 0.0
        %1136 = vadd.xlane.f32.xlu0 %v1135
        %v1137 = vpop.xlane.xlu0 %1136
        %v1138 = vsel %vm1074, %v1118, 0.0
        %1139 = vadd.xlane.f32.xlu0 %v1138
        %v1140 = vpop.xlane.xlu0 %1139
        %v1141 = vsel %vm1074, %v1120, 0.0
        %1142 = vadd.xlane.f32.xlu0 %v1141
        %v1143 = vpop.xlane.xlu0 %1142
        %v1144 = vsel %vm1074, %v1122, 0.0
        %1145 = vadd.xlane.f32.xlu0 %v1144
        %v1146 = vpop.xlane.xlu0 %1145
        %v1147 = vpack.c.bf16 %v1110, %v1108
        %v1148 = vpack.c.bf16 %v1114, %v1112
        %v1149 = vpack.c.bf16 %v1118, %v1116
        %v1150 = vpack.c.bf16 %v1122, %v1120
        %v1152 = vsel %vm1074, %v1147, 0
        %v1155 = vsel %vm1074, %v1148, 0
        %v1158 = vsel %vm1074, %v1149, 0
        %v1161 = vsel %vm1074, %v1150, 0
        %1163 = vmatprep.subr.bf16.mxu0 0
        %1164 = vmatpush1.bf16.msra.mxu0 0
        %1165 = vmatprep.subr.bf16.mxu0 0
        %1166 = vmatpush1.bf16.msra.mxu0 0
        %1167 = vmatprep.subr.bf16.mxu0 0
        %1168 = vmatpush1.bf16.msra.mxu0 0
        %1169 = vmatprep.subr.bf16.mxu0 0
        %1170 = vmatpush1.bf16.msra.mxu0 0
        %1171 = vmatprep.subr.bf16.mxu0 0
        %1172 = vmatpush1.bf16.msra.mxu0 %v899
        %1173 = vmatprep.subr.bf16.mxu0 0
        %1174 = vmatpush1.bf16.msra.mxu0 %v898
        %1175 = vmatprep.subr.bf16.mxu0 0
        %1176 = vmatpush1.bf16.msra.mxu0 %v897
        %1177 = vmatprep.subr.bf16.mxu0 0
        %1178 = vmatpush1.bf16.msra.mxu0 %v896
        %1179 = vmatprep.subr.bf16.mxu0 0
        %1180 = vmatpush2.bf16.msra.mxu0 0
        %1181 = vmatprep.subr.bf16.mxu0 0
        %1182 = vmatpush2.bf16.msra.mxu0 0
        %1183 = vmatprep.subr.bf16.mxu0 0
        %1184 = vmatpush2.bf16.msra.mxu0 0
        %1185 = vmatprep.subr.bf16.mxu0 0
        %1186 = vmatpush2.bf16.msra.mxu0 0
        %1187 = vmatprep.subr.bf16.mxu0 0
        %1188 = vmatpush2.bf16.msra.mxu0 0
        %1189 = vmatprep.subr.bf16.mxu0 0
        %1190 = vmatpush2.bf16.msra.mxu0 0
        %1191 = vmatprep.subr.bf16.mxu0 0
        %1192 = vmatpush2.bf16.msra.mxu0 0
        %1193 = vmatprep.subr.bf16.mxu0 0
        %1194 = vmatpush2.bf16.msra.mxu0 0
        %1195 = vmatprep.mubr.bf16.mxu0 0
        %1196 = vmatmul.mubr.bf16.gmra.mxu0 %v1152
        %v1197 = vpop.f32.mrf.mxu0
        %v1198 = vadd.f32 0.0, %v1197
        %v1199 = vpop.f32.mrf.mxu0
        %v1200 = vpop.f32.mrf.mxu0
        %v1201 = vadd.f32 0.0, %v1200
        %v1202 = vpop.f32.mrf.mxu0
        %1203 = vmatprep.mubr.bf16.mxu0 0
        %1204 = vmatmul.mubr.bf16.gmra.mxu0 %v1155
        %v1205 = vpop.f32.mrf.mxu0
        %v1206 = vadd.f32 0.0, %v1205
        %v1207 = vpop.f32.mrf.mxu0
        %v1208 = vpop.f32.mrf.mxu0
        %v1209 = vadd.f32 0.0, %v1208
        %v1210 = vpop.f32.mrf.mxu0
        %1211 = vmatprep.mubr.bf16.mxu0 0
        %1212 = vmatmul.mubr.bf16.gmra.mxu0 %v1158
        %v1213 = vpop.f32.mrf.mxu0
        %v1214 = vadd.f32 0.0, %v1213
        %v1215 = vpop.f32.mrf.mxu0
        %v1216 = vpop.f32.mrf.mxu0
        %v1217 = vadd.f32 0.0, %v1216
        %v1218 = vpop.f32.mrf.mxu0
        %1219 = vmatprep.mubr.bf16.mxu0 0
        %1220 = vmatmul.mubr.bf16.gmra.mxu0 %v1161
        %v1221 = vpop.f32.mrf.mxu0
        %v1222 = vadd.f32 0.0, %v1221
        %v1223 = vpop.f32.mrf.mxu0
        %v1224 = vpop.f32.mrf.mxu0
        %v1225 = vadd.f32 0.0, %v1224
        %v1226 = vpop.f32.mrf.mxu0
        %1227 = vdwg.mxu0
        %v1228 = vrcp.pop %v1125
        %v1229 = vrcp.pop %v1128
        %v1230 = vrcp.pop %v1131
        %v1231 = vrcp.pop %v1134
        %v1232 = vrcp.pop %v1137
        %v1233 = vrcp.pop %v1140
        %v1234 = vrcp.pop %v1143
        %v1235 = vrcp.pop %v1146
        %v1236 = vmul.f32 %v1198, %v1228
        %v1237 = vmul.f32 %v1201, %v1229
        %v1238 = vmul.f32 %v1206, %v1230
        %v1239 = vmul.f32 %v1209, %v1231
        %v1240 = vmul.f32 %v1214, %v1232
        %v1241 = vmul.f32 %v1217, %v1233
        %v1242 = vmul.f32 %v1222, %v1234
        %v1243 = vmul.f32 %v1225, %v1235
        %v1244 = vpack.c.bf16 %v1237, %v1236
        %v1245 = vpack.c.bf16 %v1239, %v1238
        %v1246 = vpack.c.bf16 %v1241, %v1240
        %v1247 = vpack.c.bf16 %v1243, %v1242
        %v1248 = vld [vmem:[%s8] sm:$0xf]
        %v1249 = vld [vmem:[%s8 + $0x4] sm:$0xf]
        %v1250 = vld [vmem:[%s8 + $0x8] sm:$0xf]
        %v1251 = vld [vmem:[%s8 + $0xc] sm:$0xf]
        %s1252 = scalar_lea.vmem %s7, 16
        %v1253 = vld [vmem:[%s1252] sm:$0xf]
        %v1254 = vld [vmem:[%s1252 + $0x4] sm:$0xf]
        %v1255 = vld [vmem:[%s1252 + $0x8] sm:$0xf]
        %v1256 = vld [vmem:[%s1252 + $0xc] sm:$0xf]
        %v1261 = vunpack.c.l.b16 %v1253
        %v1262 = vunpack.c.l.b16 %v1254
        %v1263 = vunpack.c.l.b16 %v1255
        %v1264 = vunpack.c.l.b16 %v1256
        %v1265 = vpack.c.b16 %v1262, %v1261
        %v1266 = vpack.c.b16 %v1264, %v1263
        %1269 = vmatprep.subr.bf16.mxu0 0
        %1270 = vmatpush1.bf16.msra.mxu0 0
        %1271 = vmatprep.subr.bf16.mxu0 0
        %1272 = vmatpush1.bf16.msra.mxu0 0
        %1273 = vmatprep.subr.bf16.mxu0 0
        %1274 = vmatpush1.bf16.msra.mxu0 0
        %1275 = vmatprep.subr.bf16.mxu0 0
        %1276 = vmatpush1.bf16.msra.mxu0 0
        %1277 = vmatprep.subr.bf16.mxu0 0
        %1278 = vmatpush1.bf16.msra.mxu0 0
        %1279 = vmatprep.subr.bf16.mxu0 0
        %1280 = vmatpush1.bf16.msra.mxu0 0
        %1281 = vmatprep.subr.bf16.mxu0 0
        %1282 = vmatpush1.bf16.msra.mxu0 %v1266
        %1283 = vmatprep.subr.bf16.mxu0 0
        %1284 = vmatpush1.bf16.msra.mxu0 %v1265
        %1285 = vmatprep.subr.bf16.mxu0 0
        %1286 = vmatpush2.bf16.msra.mxu0 0
        %1287 = vmatprep.subr.bf16.mxu0 0
        %1288 = vmatpush2.bf16.msra.mxu0 0
        %1289 = vmatprep.subr.bf16.mxu0 0
        %1290 = vmatpush2.bf16.msra.mxu0 0
        %1291 = vmatprep.subr.bf16.mxu0 0
        %1292 = vmatpush2.bf16.msra.mxu0 0
        %1293 = vmatprep.subr.bf16.mxu0 0
        %1294 = vmatpush2.bf16.msra.mxu0 0
        %1295 = vmatprep.subr.bf16.mxu0 0
        %1296 = vmatpush2.bf16.msra.mxu0 0
        %1297 = vmatprep.subr.bf16.mxu0 0
        %1298 = vmatpush2.bf16.msra.mxu0 0
        %1299 = vmatprep.subr.bf16.mxu0 0
        %1300 = vmatpush2.bf16.msra.mxu0 0
        %1301 = vmatprep.mubr.bf16.mxu0 0
        %1302 = vmatmul.mubr.bf16.gmra.mxu0 %v917
        %v1303 = vpop.f32.mrf.mxu0
        %v1304 = vadd.f32 0.0, %v1303
        %v1305 = vpop.f32.mrf.mxu0
        %v1306 = vpop.f32.mrf.mxu0
        %v1307 = vadd.f32 0.0, %v1306
        %v1308 = vpop.f32.mrf.mxu0
        %1309 = vmatprep.mubr.bf16.mxu0 0
        %1310 = vmatmul.mubr.bf16.gmra.mxu0 %v920
        %v1311 = vpop.f32.mrf.mxu0
        %v1312 = vadd.f32 0.0, %v1311
        %v1313 = vpop.f32.mrf.mxu0
        %v1314 = vpop.f32.mrf.mxu0
        %v1315 = vadd.f32 0.0, %v1314
        %v1316 = vpop.f32.mrf.mxu0
        %1317 = vmatprep.mubr.bf16.mxu0 0
        %1318 = vmatmul.mubr.bf16.gmra.mxu0 %v923
        %v1319 = vpop.f32.mrf.mxu0
        %v1320 = vadd.f32 0.0, %v1319
        %v1321 = vpop.f32.mrf.mxu0
        %v1322 = vpop.f32.mrf.mxu0
        %v1323 = vadd.f32 0.0, %v1322
        %v1324 = vpop.f32.mrf.mxu0
        %1325 = vmatprep.mubr.bf16.mxu0 0
        %1326 = vmatmul.mubr.bf16.gmra.mxu0 %v926
        %v1327 = vpop.f32.mrf.mxu0
        %v1328 = vadd.f32 0.0, %v1327
        %v1329 = vpop.f32.mrf.mxu0
        %v1330 = vpop.f32.mrf.mxu0
        %v1331 = vadd.f32 0.0, %v1330
        %v1332 = vpop.f32.mrf.mxu0
        %1333 = vdwg.mxu0
        %v1334 = vpack.c.bf16 %v1307, %v1304
        %v1335 = vpack.c.bf16 %v1315, %v1312
        %v1336 = vpack.c.bf16 %v1323, %v1320
        %v1337 = vpack.c.bf16 %v1331, %v1328
        %v1339 = vsel %vm629, %v1334, 0
        %v1342 = vsel %vm629, %v1335, 0
        %v1345 = vsel %vm629, %v1336, 0
        %v1348 = vsel %vm629, %v1337, 0
        %1350 = vmatprep.subr.bf16.mxu0 0
        %1351 = vmatpush1.bf16.xpose.msra.mxu0 0
        %1352 = vmatprep.subr.bf16.mxu0 0
        %1353 = vmatpush1.bf16.xpose.msra.mxu0 0
        %1354 = vmatprep.subr.bf16.mxu0 0
        %1355 = vmatpush1.bf16.xpose.msra.mxu0 0
        %1356 = vmatprep.subr.bf16.mxu0 0
        %1357 = vmatpush1.bf16.xpose.msra.mxu0 0
        %1358 = vmatprep.subr.bf16.mxu0 0
        %1359 = vmatpush1.bf16.xpose.msra.mxu0 %v926
        %1360 = vmatprep.subr.bf16.mxu0 0
        %1361 = vmatpush1.bf16.xpose.msra.mxu0 %v923
        %1362 = vmatprep.subr.bf16.mxu0 0
        %1363 = vmatpush1.bf16.xpose.msra.mxu0 %v920
        %1364 = vmatprep.subr.bf16.mxu0 0
        %1365 = vmatpush1.bf16.xpose.msra.mxu0 %v917
        %1366 = vmatprep.subr.bf16.mxu0 0
        %1367 = vmatpush2.bf16.xpose.msra.mxu0 0
        %1368 = vmatprep.subr.bf16.mxu0 0
        %1369 = vmatpush2.bf16.xpose.msra.mxu0 0
        %1370 = vmatprep.subr.bf16.mxu0 0
        %1371 = vmatpush2.bf16.xpose.msra.mxu0 0
        %1372 = vmatprep.subr.bf16.mxu0 0
        %1373 = vmatpush2.bf16.xpose.msra.mxu0 0
        %1374 = vmatprep.subr.bf16.mxu0 0
        %1375 = vmatpush2.bf16.xpose.msra.mxu0 0
        %1376 = vmatprep.subr.bf16.mxu0 0
        %1377 = vmatpush2.bf16.xpose.msra.mxu0 0
        %1378 = vmatprep.subr.bf16.mxu0 0
        %1379 = vmatpush2.bf16.xpose.msra.mxu0 0
        %1380 = vmatprep.subr.bf16.mxu0 0
        %1381 = vmatpush2.bf16.xpose.msra.mxu0 0
        %1382 = vmatprep.mubr.bf16.mxu0 0
        %1383 = vmatmul.mubr.bf16.gmra.mxu0 %v1339
        %v1384 = vpop.f32.mrf.mxu0
        %v1385 = vadd.f32 %v759, %v1384
        %v1386 = vpop.f32.mrf.mxu0
        %v1387 = vpop.f32.mrf.mxu0
        %v1388 = vadd.f32 %v760, %v1387
        %v1389 = vpop.f32.mrf.mxu0
        %1390 = vmatprep.mubr.bf16.mxu0 0
        %1391 = vmatmul.mubr.bf16.gmra.mxu0 %v1342
        %v1392 = vpop.f32.mrf.mxu0
        %v1393 = vadd.f32 %v761, %v1392
        %v1394 = vpop.f32.mrf.mxu0
        %v1395 = vpop.f32.mrf.mxu0
        %v1396 = vadd.f32 %v762, %v1395
        %v1397 = vpop.f32.mrf.mxu0
        %1398 = vmatprep.mubr.bf16.mxu0 0
        %1399 = vmatmul.mubr.bf16.gmra.mxu0 %v1345
        %v1400 = vpop.f32.mrf.mxu0
        %v1401 = vadd.f32 %v763, %v1400
        %v1402 = vpop.f32.mrf.mxu0
        %v1403 = vpop.f32.mrf.mxu0
        %v1404 = vadd.f32 %v764, %v1403
        %v1405 = vpop.f32.mrf.mxu0
        %1406 = vmatprep.mubr.bf16.mxu0 0
        %1407 = vmatmul.mubr.bf16.gmra.mxu0 %v1348
        %v1408 = vpop.f32.mrf.mxu0
        %v1409 = vadd.f32 %v765, %v1408
        %v1410 = vpop.f32.mrf.mxu0
        %v1411 = vpop.f32.mrf.mxu0
        %v1412 = vadd.f32 %v766, %v1411
        %v1413 = vpop.f32.mrf.mxu0
        %1414 = vdwg.mxu0
        %v1415 = vsel %vm1074, %v1385, -inf
        %1416 = vmax.xlane.f32.xlu0 %v1415
        %v1417 = vpop.xlane.xlu0 %1416
        %v1418 = vsel %vm1074, %v1388, -inf
        %1419 = vmax.xlane.f32.xlu0 %v1418
        %v1420 = vpop.xlane.xlu0 %1419
        %v1421 = vsel %vm1074, %v1393, -inf
        %1422 = vmax.xlane.f32.xlu0 %v1421
        %v1423 = vpop.xlane.xlu0 %1422
        %v1424 = vsel %vm1074, %v1396, -inf
        %1425 = vmax.xlane.f32.xlu0 %v1424
        %v1426 = vpop.xlane.xlu0 %1425
        %v1427 = vsel %vm1074, %v1401, -inf
        %1428 = vmax.xlane.f32.xlu0 %v1427
        %v1429 = vpop.xlane.xlu0 %1428
        %v1430 = vsel %vm1074, %v1404, -inf
        %1431 = vmax.xlane.f32.xlu0 %v1430
        %v1432 = vpop.xlane.xlu0 %1431
        %v1433 = vsel %vm1074, %v1409, -inf
        %1434 = vmax.xlane.f32.xlu0 %v1433
        %v1435 = vpop.xlane.xlu0 %1434
        %v1436 = vsel %vm1074, %v1412, -inf
        %1437 = vmax.xlane.f32.xlu0 %v1436
        %v1438 = vpop.xlane.xlu0 %1437
        %v1439 = vsub.f32 %v1385, %v1417
        %v1440 = vsub.f32 %v1388, %v1420
        %v1441 = vsub.f32 %v1393, %v1423
        %v1442 = vsub.f32 %v1396, %v1426
        %v1443 = vsub.f32 %v1401, %v1429
        %v1444 = vsub.f32 %v1404, %v1432
        %v1445 = vsub.f32 %v1409, %v1435
        %v1446 = vsub.f32 %v1412, %v1438
        %v1447 = vmul.f32 %v1439, 1.442695
        %v1448 = vpow.pop %v1447
        %v1449 = vmul.f32 %v1440, 1.442695
        %v1450 = vpow.pop %v1449
        %v1451 = vmul.f32 %v1441, 1.442695
        %v1452 = vpow.pop %v1451
        %v1453 = vmul.f32 %v1442, 1.442695
        %v1454 = vpow.pop %v1453
        %v1455 = vmul.f32 %v1443, 1.442695
        %v1456 = vpow.pop %v1455
        %v1457 = vmul.f32 %v1444, 1.442695
        %v1458 = vpow.pop %v1457
        %v1459 = vmul.f32 %v1445, 1.442695
        %v1460 = vpow.pop %v1459
        %v1461 = vmul.f32 %v1446, 1.442695
        %v1462 = vpow.pop %v1461
        %v1463 = vsel %vm1074, %v1448, 0.0
        %1464 = vadd.xlane.f32.xlu0 %v1463
        %v1465 = vpop.xlane.xlu0 %1464
        %v1466 = vsel %vm1074, %v1450, 0.0
        %1467 = vadd.xlane.f32.xlu0 %v1466
        %v1468 = vpop.xlane.xlu0 %1467
        %v1469 = vsel %vm1074, %v1452, 0.0
        %1470 = vadd.xlane.f32.xlu0 %v1469
        %v1471 = vpop.xlane.xlu0 %1470
        %v1472 = vsel %vm1074, %v1454, 0.0
        %1473 = vadd.xlane.f32.xlu0 %v1472
        %v1474 = vpop.xlane.xlu0 %1473
        %v1475 = vsel %vm1074, %v1456, 0.0
        %1476 = vadd.xlane.f32.xlu0 %v1475
        %v1477 = vpop.xlane.xlu0 %1476
        %v1478 = vsel %vm1074, %v1458, 0.0
        %1479 = vadd.xlane.f32.xlu0 %v1478
        %v1480 = vpop.xlane.xlu0 %1479
        %v1481 = vsel %vm1074, %v1460, 0.0
        %1482 = vadd.xlane.f32.xlu0 %v1481
        %v1483 = vpop.xlane.xlu0 %1482
        %v1484 = vsel %vm1074, %v1462, 0.0
        %1485 = vadd.xlane.f32.xlu0 %v1484
        %v1486 = vpop.xlane.xlu0 %1485
        %v1487 = vpack.c.bf16 %v1450, %v1448
        %v1488 = vpack.c.bf16 %v1454, %v1452
        %v1489 = vpack.c.bf16 %v1458, %v1456
        %v1490 = vpack.c.bf16 %v1462, %v1460
        %v1492 = vsel %vm1074, %v1487, 0
        %v1495 = vsel %vm1074, %v1488, 0
        %v1498 = vsel %vm1074, %v1489, 0
        %v1501 = vsel %vm1074, %v1490, 0
        %1503 = vmatprep.subr.bf16.mxu0 0
        %1504 = vmatpush1.bf16.msra.mxu0 0
        %1505 = vmatprep.subr.bf16.mxu0 0
        %1506 = vmatpush1.bf16.msra.mxu0 0
        %1507 = vmatprep.subr.bf16.mxu0 0
        %1508 = vmatpush1.bf16.msra.mxu0 0
        %1509 = vmatprep.subr.bf16.mxu0 0
        %1510 = vmatpush1.bf16.msra.mxu0 0
        %1511 = vmatprep.subr.bf16.mxu0 0
        %1512 = vmatpush1.bf16.msra.mxu0 %v899
        %1513 = vmatprep.subr.bf16.mxu0 0
        %1514 = vmatpush1.bf16.msra.mxu0 %v898
        %1515 = vmatprep.subr.bf16.mxu0 0
        %1516 = vmatpush1.bf16.msra.mxu0 %v897
        %1517 = vmatprep.subr.bf16.mxu0 0
        %1518 = vmatpush1.bf16.msra.mxu0 %v896
        %1519 = vmatprep.subr.bf16.mxu0 0
        %1520 = vmatpush2.bf16.msra.mxu0 0
        %1521 = vmatprep.subr.bf16.mxu0 0
        %1522 = vmatpush2.bf16.msra.mxu0 0
        %1523 = vmatprep.subr.bf16.mxu0 0
        %1524 = vmatpush2.bf16.msra.mxu0 0
        %1525 = vmatprep.subr.bf16.mxu0 0
        %1526 = vmatpush2.bf16.msra.mxu0 0
        %1527 = vmatprep.subr.bf16.mxu0 0
        %1528 = vmatpush2.bf16.msra.mxu0 0
        %1529 = vmatprep.subr.bf16.mxu0 0
        %1530 = vmatpush2.bf16.msra.mxu0 0
        %1531 = vmatprep.subr.bf16.mxu0 0
        %1532 = vmatpush2.bf16.msra.mxu0 0
        %1533 = vmatprep.subr.bf16.mxu0 0
        %1534 = vmatpush2.bf16.msra.mxu0 0
        %1535 = vmatprep.mubr.bf16.mxu0 0
        %1536 = vmatmul.mubr.bf16.gmra.mxu0 %v1492
        %v1537 = vpop.f32.mrf.mxu0
        %v1538 = vadd.f32 0.0, %v1537
        %v1539 = vpop.f32.mrf.mxu0
        %v1540 = vpop.f32.mrf.mxu0
        %v1541 = vadd.f32 0.0, %v1540
        %v1542 = vpop.f32.mrf.mxu0
        %1543 = vmatprep.mubr.bf16.mxu0 0
        %1544 = vmatmul.mubr.bf16.gmra.mxu0 %v1495
        %v1545 = vpop.f32.mrf.mxu0
        %v1546 = vadd.f32 0.0, %v1545
        %v1547 = vpop.f32.mrf.mxu0
        %v1548 = vpop.f32.mrf.mxu0
        %v1549 = vadd.f32 0.0, %v1548
        %v1550 = vpop.f32.mrf.mxu0
        %1551 = vmatprep.mubr.bf16.mxu0 0
        %1552 = vmatmul.mubr.bf16.gmra.mxu0 %v1498
        %v1553 = vpop.f32.mrf.mxu0
        %v1554 = vadd.f32 0.0, %v1553
        %v1555 = vpop.f32.mrf.mxu0
        %v1556 = vpop.f32.mrf.mxu0
        %v1557 = vadd.f32 0.0, %v1556
        %v1558 = vpop.f32.mrf.mxu0
        %1559 = vmatprep.mubr.bf16.mxu0 0
        %1560 = vmatmul.mubr.bf16.gmra.mxu0 %v1501
        %v1561 = vpop.f32.mrf.mxu0
        %v1562 = vadd.f32 0.0, %v1561
        %v1563 = vpop.f32.mrf.mxu0
        %v1564 = vpop.f32.mrf.mxu0
        %v1565 = vadd.f32 0.0, %v1564
        %v1566 = vpop.f32.mrf.mxu0
        %1567 = vdwg.mxu0
        %v1568 = vrcp.pop %v1465
        %v1569 = vrcp.pop %v1468
        %v1570 = vrcp.pop %v1471
        %v1571 = vrcp.pop %v1474
        %v1572 = vrcp.pop %v1477
        %v1573 = vrcp.pop %v1480
        %v1574 = vrcp.pop %v1483
        %v1575 = vrcp.pop %v1486
        %v1576 = vmul.f32 %v1538, %v1568
        %v1577 = vmul.f32 %v1541, %v1569
        %v1578 = vmul.f32 %v1546, %v1570
        %v1579 = vmul.f32 %v1549, %v1571
        %v1580 = vmul.f32 %v1554, %v1572
        %v1581 = vmul.f32 %v1557, %v1573
        %v1582 = vmul.f32 %v1562, %v1574
        %v1583 = vmul.f32 %v1565, %v1575
        %v1584 = vpack.c.bf16 %v1577, %v1576
        %v1585 = vpack.c.bf16 %v1579, %v1578
        %v1586 = vpack.c.bf16 %v1581, %v1580
        %v1587 = vpack.c.bf16 %v1583, %v1582
        %s1588 = scalar_lea.vmem %s8, 16
        %v1589 = vld [vmem:[%s1588] sm:$0xf]
        %v1590 = vld [vmem:[%s1588 + $0x4] sm:$0xf]
        %v1591 = vld [vmem:[%s1588 + $0x8] sm:$0xf]
        %v1592 = vld [vmem:[%s1588 + $0xc] sm:$0xf]
        %v1597 = vunpack.c.l.b16 %v1589
        %v1598 = vunpack.c.l.b16 %v1590
        %v1599 = vunpack.c.l.b16 %v1591
        %v1600 = vunpack.c.l.b16 %v1592
        %v1601 = vpack.c.b16 %v1598, %v1597
        %v1602 = vpack.c.b16 %v1600, %v1599
        %v1606 = vsel %vm629, %v1584, 0
        %v1609 = vsel %vm629, %v1585, 0
        %v1612 = vsel %vm629, %v1586, 0
        %v1615 = vsel %vm629, %v1587, 0
        %1617 = vmatprep.subr.bf16.mxu0 0
        %1618 = vmatpush1.bf16.msra.mxu0 0
        %1619 = vmatprep.subr.bf16.mxu0 0
        %1620 = vmatpush1.bf16.msra.mxu0 0
        %1621 = vmatprep.subr.bf16.mxu0 0
        %1622 = vmatpush1.bf16.msra.mxu0 0
        %1623 = vmatprep.subr.bf16.mxu0 0
        %1624 = vmatpush1.bf16.msra.mxu0 0
        %1625 = vmatprep.subr.bf16.mxu0 0
        %1626 = vmatpush1.bf16.msra.mxu0 0
        %1627 = vmatprep.subr.bf16.mxu0 0
        %1628 = vmatpush1.bf16.msra.mxu0 0
        %1629 = vmatprep.subr.bf16.mxu0 0
        %1630 = vmatpush1.bf16.msra.mxu0 %v1602
        %1631 = vmatprep.subr.bf16.mxu0 0
        %1632 = vmatpush1.bf16.msra.mxu0 %v1601
        %1633 = vmatprep.subr.bf16.mxu0 0
        %1634 = vmatpush2.bf16.msra.mxu0 0
        %1635 = vmatprep.subr.bf16.mxu0 0
        %1636 = vmatpush2.bf16.msra.mxu0 0
        %1637 = vmatprep.subr.bf16.mxu0 0
        %1638 = vmatpush2.bf16.msra.mxu0 0
        %1639 = vmatprep.subr.bf16.mxu0 0
        %1640 = vmatpush2.bf16.msra.mxu0 0
        %1641 = vmatprep.subr.bf16.mxu0 0
        %1642 = vmatpush2.bf16.msra.mxu0 0
        %1643 = vmatprep.subr.bf16.mxu0 0
        %1644 = vmatpush2.bf16.msra.mxu0 0
        %1645 = vmatprep.subr.bf16.mxu0 0
        %1646 = vmatpush2.bf16.msra.mxu0 0
        %1647 = vmatprep.subr.bf16.mxu0 0
        %1648 = vmatpush2.bf16.msra.mxu0 0
        %1649 = vmatprep.mubr.bf16.mxu0 0
        %1650 = vmatmul.mubr.bf16.gmra.mxu0 %v1606
        %v1651 = vpop.f32.mrf.mxu0
        %v1652 = vadd.f32 0.0, %v1651
        %v1653 = vpop.f32.mrf.mxu0
        %v1654 = vpop.f32.mrf.mxu0
        %v1655 = vadd.f32 0.0, %v1654
        %v1656 = vpop.f32.mrf.mxu0
        %1657 = vmatprep.mubr.bf16.mxu0 0
        %1658 = vmatmul.mubr.bf16.gmra.mxu0 %v1609
        %v1659 = vpop.f32.mrf.mxu0
        %v1660 = vadd.f32 0.0, %v1659
        %v1661 = vpop.f32.mrf.mxu0
        %v1662 = vpop.f32.mrf.mxu0
        %v1663 = vadd.f32 0.0, %v1662
        %v1664 = vpop.f32.mrf.mxu0
        %1665 = vmatprep.mubr.bf16.mxu0 0
        %1666 = vmatmul.mubr.bf16.gmra.mxu0 %v1612
        %v1667 = vpop.f32.mrf.mxu0
        %v1668 = vadd.f32 0.0, %v1667
        %v1669 = vpop.f32.mrf.mxu0
        %v1670 = vpop.f32.mrf.mxu0
        %v1671 = vadd.f32 0.0, %v1670
        %v1672 = vpop.f32.mrf.mxu0
        %1673 = vmatprep.mubr.bf16.mxu0 0
        %1674 = vmatmul.mubr.bf16.gmra.mxu0 %v1615
        %v1675 = vpop.f32.mrf.mxu0
        %v1676 = vadd.f32 0.0, %v1675
        %v1677 = vpop.f32.mrf.mxu0
        %v1678 = vpop.f32.mrf.mxu0
        %v1679 = vadd.f32 0.0, %v1678
        %v1680 = vpop.f32.mrf.mxu0
        %1681 = vdwg.mxu0
        %v1686 = vunpack.c.l.b16 %v1248
        %v1687 = vunpack.c.l.b16 %v1249
        %v1688 = vunpack.c.l.b16 %v1250
        %v1689 = vunpack.c.l.b16 %v1251
        %v1690 = vpack.c.b16 %v1687, %v1686
        %v1691 = vpack.c.b16 %v1689, %v1688
        %v1695 = vsel %vm629, %v1244, 0
        %v1698 = vsel %vm629, %v1245, 0
        %v1701 = vsel %vm629, %v1246, 0
        %v1704 = vsel %vm629, %v1247, 0
        %1706 = vmatprep.subr.bf16.mxu0 0
        %1707 = vmatpush1.bf16.msra.mxu0 0
        %1708 = vmatprep.subr.bf16.mxu0 0
        %1709 = vmatpush1.bf16.msra.mxu0 0
        %1710 = vmatprep.subr.bf16.mxu0 0
        %1711 = vmatpush1.bf16.msra.mxu0 0
        %1712 = vmatprep.subr.bf16.mxu0 0
        %1713 = vmatpush1.bf16.msra.mxu0 0
        %1714 = vmatprep.subr.bf16.mxu0 0
        %1715 = vmatpush1.bf16.msra.mxu0 0
        %1716 = vmatprep.subr.bf16.mxu0 0
        %1717 = vmatpush1.bf16.msra.mxu0 0
        %1718 = vmatprep.subr.bf16.mxu0 0
        %1719 = vmatpush1.bf16.msra.mxu0 %v1691
        %1720 = vmatprep.subr.bf16.mxu0 0
        %1721 = vmatpush1.bf16.msra.mxu0 %v1690
        %1722 = vmatprep.subr.bf16.mxu0 0
        %1723 = vmatpush2.bf16.msra.mxu0 0
        %1724 = vmatprep.subr.bf16.mxu0 0
        %1725 = vmatpush2.bf16.msra.mxu0 0
        %1726 = vmatprep.subr.bf16.mxu0 0
        %1727 = vmatpush2.bf16.msra.mxu0 0
        %1728 = vmatprep.subr.bf16.mxu0 0
        %1729 = vmatpush2.bf16.msra.mxu0 0
        %1730 = vmatprep.subr.bf16.mxu0 0
        %1731 = vmatpush2.bf16.msra.mxu0 0
        %1732 = vmatprep.subr.bf16.mxu0 0
        %1733 = vmatpush2.bf16.msra.mxu0 0
        %1734 = vmatprep.subr.bf16.mxu0 0
        %1735 = vmatpush2.bf16.msra.mxu0 0
        %1736 = vmatprep.subr.bf16.mxu0 0
        %1737 = vmatpush2.bf16.msra.mxu0 0
        %1738 = vmatprep.mubr.bf16.mxu0 0
        %1739 = vmatmul.mubr.bf16.gmra.mxu0 %v1695
        %v1740 = vpop.f32.mrf.mxu0
        %v1741 = vadd.f32 %v1652, %v1740
        %v1742 = vpop.f32.mrf.mxu0
        %v1743 = vpop.f32.mrf.mxu0
        %v1744 = vadd.f32 %v1655, %v1743
        %v1745 = vpop.f32.mrf.mxu0
        %1746 = vmatprep.mubr.bf16.mxu0 0
        %1747 = vmatmul.mubr.bf16.gmra.mxu0 %v1698
        %v1748 = vpop.f32.mrf.mxu0
        %v1749 = vadd.f32 %v1660, %v1748
        %v1750 = vpop.f32.mrf.mxu0
        %v1751 = vpop.f32.mrf.mxu0
        %v1752 = vadd.f32 %v1663, %v1751
        %v1753 = vpop.f32.mrf.mxu0
        %1754 = vmatprep.mubr.bf16.mxu0 0
        %1755 = vmatmul.mubr.bf16.gmra.mxu0 %v1701
        %v1756 = vpop.f32.mrf.mxu0
        %v1757 = vadd.f32 %v1668, %v1756
        %v1758 = vpop.f32.mrf.mxu0
        %v1759 = vpop.f32.mrf.mxu0
        %v1760 = vadd.f32 %v1671, %v1759
        %v1761 = vpop.f32.mrf.mxu0
        %1762 = vmatprep.mubr.bf16.mxu0 0
        %1763 = vmatmul.mubr.bf16.gmra.mxu0 %v1704
        %v1764 = vpop.f32.mrf.mxu0
        %v1765 = vadd.f32 %v1676, %v1764
        %v1766 = vpop.f32.mrf.mxu0
        %v1767 = vpop.f32.mrf.mxu0
        %v1768 = vadd.f32 %v1679, %v1767
        %v1769 = vpop.f32.mrf.mxu0
        %1770 = vdwg.mxu0
        %v1771 = vadd.f32 %v744, %v1741
        %v1772 = vadd.f32 %v752, %v1744
        %v1773 = vadd.f32 %v753, %v1749
        %v1774 = vadd.f32 %v754, %v1752
        %v1775 = vadd.f32 %v755, %v1757
        %v1776 = vadd.f32 %v756, %v1760
        %v1777 = vadd.f32 %v757, %v1765
        %v1778 = vadd.f32 %v758, %v1768
        %v1779 = vlaneseq
        %v1780 = vshrl.u32 %v1779, 7
        %v1781 = vsub.s32 2, %v1780
        %v1782 = vrot.slane %v767, %v1781
        %v1783 = vadd.f32 %v1771, %v1782
        %v1784 = vadd.f32 %v1772, %v1782
        %v1785 = vadd.f32 %v1773, %v1782
        %v1786 = vadd.f32 %v1774, %v1782
        %v1787 = vadd.f32 %v1775, %v1782
        %v1788 = vadd.f32 %v1776, %v1782
        %v1789 = vadd.f32 %v1777, %v1782
        %v1790 = vadd.f32 %v1778, %v1782
        %v1791 = vsel %vm629, %v1783, 0.0
        %1792 = vadd.xlane.f32.xlu0 %v1791
        %v1793 = vpop.xlane.xlu0 %1792
        %v1794 = vsel %vm629, %v1784, 0.0
        %1795 = vadd.xlane.f32.xlu0 %v1794
        %v1796 = vpop.xlane.xlu0 %1795
        %v1797 = vsel %vm629, %v1785, 0.0
        %1798 = vadd.xlane.f32.xlu0 %v1797
        %v1799 = vpop.xlane.xlu0 %1798
        %v1800 = vsel %vm629, %v1786, 0.0
        %1801 = vadd.xlane.f32.xlu0 %v1800
        %v1802 = vpop.xlane.xlu0 %1801
        %v1803 = vsel %vm629, %v1787, 0.0
        %1804 = vadd.xlane.f32.xlu0 %v1803
        %v1805 = vpop.xlane.xlu0 %1804
        %v1806 = vsel %vm629, %v1788, 0.0
        %1807 = vadd.xlane.f32.xlu0 %v1806
        %v1808 = vpop.xlane.xlu0 %1807
        %v1809 = vsel %vm629, %v1789, 0.0
        %1810 = vadd.xlane.f32.xlu0 %v1809
        %v1811 = vpop.xlane.xlu0 %1810
        %v1812 = vsel %vm629, %v1790, 0.0
        %1813 = vadd.xlane.f32.xlu0 %v1812
        %v1814 = vpop.xlane.xlu0 %1813
        %v1815 = vmul.f32 %v1793, %v651
        %v1816 = vmul.f32 %v1796, %v651
        %v1817 = vmul.f32 %v1799, %v651
        %v1818 = vmul.f32 %v1802, %v651
        %v1819 = vmul.f32 %v1805, %v651
        %v1820 = vmul.f32 %v1808, %v651
        %v1821 = vmul.f32 %v1811, %v651
        %v1822 = vmul.f32 %v1814, %v651
        %v1823 = vsub.f32 %v1783, %v1815
        %v1824 = vsub.f32 %v1784, %v1816
        %v1825 = vsub.f32 %v1785, %v1817
        %v1826 = vsub.f32 %v1786, %v1818
        %v1827 = vsub.f32 %v1787, %v1819
        %v1828 = vsub.f32 %v1788, %v1820
        %v1829 = vsub.f32 %v1789, %v1821
        %v1830 = vsub.f32 %v1790, %v1822
        %v1831 = vmul.f32 %v1823, %v1823
        %v1832 = vmul.f32 %v1824, %v1824
        %v1833 = vmul.f32 %v1825, %v1825
        %v1834 = vmul.f32 %v1826, %v1826
        %v1835 = vmul.f32 %v1827, %v1827
        %v1836 = vmul.f32 %v1828, %v1828
        %v1837 = vmul.f32 %v1829, %v1829
        %v1838 = vmul.f32 %v1830, %v1830
        %v1839 = vsel %vm629, %v1831, 0.0
        %1840 = vadd.xlane.f32.xlu0 %v1839
        %v1841 = vpop.xlane.xlu0 %1840
        %v1842 = vsel %vm629, %v1832, 0.0
        %1843 = vadd.xlane.f32.xlu0 %v1842
        %v1844 = vpop.xlane.xlu0 %1843
        %v1845 = vsel %vm629, %v1833, 0.0
        %1846 = vadd.xlane.f32.xlu0 %v1845
        %v1847 = vpop.xlane.xlu0 %1846
        %v1848 = vsel %vm629, %v1834, 0.0
        %1849 = vadd.xlane.f32.xlu0 %v1848
        %v1850 = vpop.xlane.xlu0 %1849
        %v1851 = vsel %vm629, %v1835, 0.0
        %1852 = vadd.xlane.f32.xlu0 %v1851
        %v1853 = vpop.xlane.xlu0 %1852
        %v1854 = vsel %vm629, %v1836, 0.0
        %1855 = vadd.xlane.f32.xlu0 %v1854
        %v1856 = vpop.xlane.xlu0 %1855
        %v1857 = vsel %vm629, %v1837, 0.0
        %1858 = vadd.xlane.f32.xlu0 %v1857
        %v1859 = vpop.xlane.xlu0 %1858
        %v1860 = vsel %vm629, %v1838, 0.0
        %1861 = vadd.xlane.f32.xlu0 %v1860
        %v1862 = vpop.xlane.xlu0 %1861
        %v1863 = vmul.f32 %v1841, %v651
        %v1864 = vmul.f32 %v1844, %v651
        %v1865 = vmul.f32 %v1847, %v651
        %v1866 = vmul.f32 %v1850, %v651
        %v1867 = vmul.f32 %v1853, %v651
        %v1868 = vmul.f32 %v1856, %v651
        %v1869 = vmul.f32 %v1859, %v651
        %v1870 = vmul.f32 %v1862, %v651
        %v1871 = vadd.f32 %v1863, 1e-05
        %v1872 = vadd.f32 %v1864, 1e-05
        %v1873 = vadd.f32 %v1865, 1e-05
        %v1874 = vadd.f32 %v1866, 1e-05
        %v1875 = vadd.f32 %v1867, 1e-05
        %v1876 = vadd.f32 %v1868, 1e-05
        %v1877 = vadd.f32 %v1869, 1e-05
        %v1878 = vadd.f32 %v1870, 1e-05
        %v1879 = vrsqrt.pop %v1871
        %v1880 = vrsqrt.pop %v1872
        %v1881 = vrsqrt.pop %v1873
        %v1882 = vrsqrt.pop %v1874
        %v1883 = vrsqrt.pop %v1875
        %v1884 = vrsqrt.pop %v1876
        %v1885 = vrsqrt.pop %v1877
        %v1886 = vrsqrt.pop %v1878
        %v1887 = vmul.f32 %v1823, %v1879
        %v1888 = vmul.f32 %v1824, %v1880
        %v1889 = vmul.f32 %v1825, %v1881
        %v1890 = vmul.f32 %v1826, %v1882
        %v1891 = vmul.f32 %v1827, %v1883
        %v1892 = vmul.f32 %v1828, %v1884
        %v1893 = vmul.f32 %v1829, %v1885
        %v1894 = vmul.f32 %v1830, %v1886
        %v1895 = vlaneseq
        %v1896 = vshrl.u32 %v1895, 7
        %v1897 = vsub.s32 3, %v1896
        %v1898 = vrot.slane %v767, %v1897
        %v1899 = vmul.f32 %v1887, %v1898
        %v1900 = vmul.f32 %v1888, %v1898
        %v1901 = vmul.f32 %v1889, %v1898
        %v1902 = vmul.f32 %v1890, %v1898
        %v1903 = vmul.f32 %v1891, %v1898
        %v1904 = vmul.f32 %v1892, %v1898
        %v1905 = vmul.f32 %v1893, %v1898
        %v1906 = vmul.f32 %v1894, %v1898
        %v1907 = vlaneseq
        %v1908 = vshrl.u32 %v1907, 7
        %v1909 = vsub.s32 4, %v1908
        %v1910 = vrot.slane %v767, %v1909
        %v1911 = vadd.f32 %v1899, %v1910
        %v1912 = vadd.f32 %v1900, %v1910
        %v1913 = vadd.f32 %v1901, %v1910
        %v1914 = vadd.f32 %v1902, %v1910
        %v1915 = vadd.f32 %v1903, %v1910
        %v1916 = vadd.f32 %v1904, %v1910
        %v1917 = vadd.f32 %v1905, %v1910
        %v1918 = vadd.f32 %v1906, %v1910
        %v1919 = vpack.c.bf16 %v1912, %v1911
        %v1920 = vpack.c.bf16 %v1914, %v1913
        %v1921 = vpack.c.bf16 %v1916, %v1915
        %v1922 = vpack.c.bf16 %v1918, %v1917
        %v1923 = vld [vmem:[%s9] sm:$0xf]
        %v1924 = vld [vmem:[%s9 + $0x4] sm:$0xf]
        %v1925 = vld [vmem:[%s9 + $0x8] sm:$0xf]
        %v1926 = vld [vmem:[%s9 + $0xc] sm:$0xf]
        %v1927 = vld [vmem:[%s6] sm:$0x1]
        %v1929 = vlaneseq
        %v1930 = vshrl.u32 %v1929, 7
        %v1931 = vsub.s32 0, %v1930
        %v1932 = vrot.slane %v1927, %v1931
        %v1938 = vunpack.c.l.b16 %v1923
        %v1939 = vunpack.c.l.b16 %v1924
        %v1940 = vunpack.c.l.b16 %v1925
        %v1941 = vunpack.c.l.b16 %v1926
        %v1942 = vpack.c.b16 %v1939, %v1938
        %v1943 = vpack.c.b16 %v1941, %v1940
        %v1947 = vsel %vm629, %v1919, 0
        %v1950 = vsel %vm629, %v1920, 0
        %v1953 = vsel %vm629, %v1921, 0
        %v1956 = vsel %vm629, %v1922, 0
        %1958 = vmatprep.subr.bf16.mxu0 0
        %1959 = vmatpush1.bf16.msra.mxu0 0
        %1960 = vmatprep.subr.bf16.mxu0 0
        %1961 = vmatpush1.bf16.msra.mxu0 0
        %1962 = vmatprep.subr.bf16.mxu0 0
        %1963 = vmatpush1.bf16.msra.mxu0 0
        %1964 = vmatprep.subr.bf16.mxu0 0
        %1965 = vmatpush1.bf16.msra.mxu0 0
        %1966 = vmatprep.subr.bf16.mxu0 0
        %1967 = vmatpush1.bf16.msra.mxu0 0
        %1968 = vmatprep.subr.bf16.mxu0 0
        %1969 = vmatpush1.bf16.msra.mxu0 0
        %1970 = vmatprep.subr.bf16.mxu0 0
        %1971 = vmatpush1.bf16.msra.mxu0 %v1943
        %1972 = vmatprep.subr.bf16.mxu0 0
        %1973 = vmatpush1.bf16.msra.mxu0 %v1942
        %1974 = vmatprep.subr.bf16.mxu0 0
        %1975 = vmatpush2.bf16.msra.mxu0 0
        %1976 = vmatprep.subr.bf16.mxu0 0
        %1977 = vmatpush2.bf16.msra.mxu0 0
        %1978 = vmatprep.subr.bf16.mxu0 0
        %1979 = vmatpush2.bf16.msra.mxu0 0
        %1980 = vmatprep.subr.bf16.mxu0 0
        %1981 = vmatpush2.bf16.msra.mxu0 0
        %1982 = vmatprep.subr.bf16.mxu0 0
        %1983 = vmatpush2.bf16.msra.mxu0 0
        %1984 = vmatprep.subr.bf16.mxu0 0
        %1985 = vmatpush2.bf16.msra.mxu0 0
        %1986 = vmatprep.subr.bf16.mxu0 0
        %1987 = vmatpush2.bf16.msra.mxu0 0
        %1988 = vmatprep.subr.bf16.mxu0 0
        %1989 = vmatpush2.bf16.msra.mxu0 0
        %1990 = vmatprep.mubr.bf16.mxu0 0
        %1991 = vmatmul.mubr.bf16.gmra.mxu0 %v1947
        %v1992 = vpop.f32.mrf.mxu0
        %v1993 = vadd.f32 %v1932, %v1992
        %v1994 = vpop.f32.mrf.mxu0
        %v1995 = vpop.f32.mrf.mxu0
        %v1996 = vadd.f32 %v1932, %v1995
        %v1997 = vpop.f32.mrf.mxu0
        %1998 = vmatprep.mubr.bf16.mxu0 0
        %1999 = vmatmul.mubr.bf16.gmra.mxu0 %v1950
        %v2000 = vpop.f32.mrf.mxu0
        %v2001 = vadd.f32 %v1932, %v2000
        %v2002 = vpop.f32.mrf.mxu0
        %v2003 = vpop.f32.mrf.mxu0
        %v2004 = vadd.f32 %v1932, %v2003
        %v2005 = vpop.f32.mrf.mxu0
        %2006 = vmatprep.mubr.bf16.mxu0 0
        %2007 = vmatmul.mubr.bf16.gmra.mxu0 %v1953
        %v2008 = vpop.f32.mrf.mxu0
        %v2009 = vadd.f32 %v1932, %v2008
        %v2010 = vpop.f32.mrf.mxu0
        %v2011 = vpop.f32.mrf.mxu0
        %v2012 = vadd.f32 %v1932, %v2011
        %v2013 = vpop.f32.mrf.mxu0
        %2014 = vmatprep.mubr.bf16.mxu0 0
        %2015 = vmatmul.mubr.bf16.gmra.mxu0 %v1956
        %v2016 = vpop.f32.mrf.mxu0
        %v2017 = vadd.f32 %v1932, %v2016
        %v2018 = vpop.f32.mrf.mxu0
        %v2019 = vpop.f32.mrf.mxu0
        %v2020 = vadd.f32 %v1932, %v2019
        %v2021 = vpop.f32.mrf.mxu0
        %2022 = vdwg.mxu0
        %v2023 = vmul.f32 %v1993, 0.5
        %v2024 = vmul.f32 %v1996, 0.5
        %v2025 = vmul.f32 %v2001, 0.5
        %v2026 = vmul.f32 %v2004, 0.5
        %v2027 = vmul.f32 %v2009, 0.5
        %v2028 = vmul.f32 %v2012, 0.5
        %v2029 = vmul.f32 %v2017, 0.5
        %v2030 = vmul.f32 %v2020, 0.5
        %v2031 = vmul.f32 %v1993, 0.70710677
        %v2032 = vmul.f32 %v1996, 0.70710677
        %v2033 = vmul.f32 %v2001, 0.70710677
        %v2034 = vmul.f32 %v2004, 0.70710677
        %v2035 = vmul.f32 %v2009, 0.70710677
        %v2036 = vmul.f32 %v2012, 0.70710677
        %v2037 = vmul.f32 %v2017, 0.70710677
        %v2038 = vmul.f32 %v2020, 0.70710677
        %vm2039 = vcmp.ge.f32.partialorder %v2031, 0.0
        %vm2040 = vcmp.ge.f32.partialorder %v2032, 0.0
        %vm2041 = vcmp.ge.f32.partialorder %v2033, 0.0
        %vm2042 = vcmp.ge.f32.partialorder %v2034, 0.0
        %vm2043 = vcmp.ge.f32.partialorder %v2035, 0.0
        %vm2044 = vcmp.ge.f32.partialorder %v2036, 0.0
        %vm2045 = vcmp.ge.f32.partialorder %v2037, 0.0
        %vm2046 = vcmp.ge.f32.partialorder %v2038, 0.0
        %v2047 = vsel %vm2039, 1.0, -1.0
        %v2048 = vsel %vm2040, 1.0, -1.0
        %v2049 = vsel %vm2041, 1.0, -1.0
        %v2050 = vsel %vm2042, 1.0, -1.0
        %v2051 = vsel %vm2043, 1.0, -1.0
        %v2052 = vsel %vm2044, 1.0, -1.0
        %v2053 = vsel %vm2045, 1.0, -1.0
        %v2054 = vsel %vm2046, 1.0, -1.0
        %v2055 = vand.u32 2147483647, %v2031
        %v2056 = vand.u32 2147483647, %v2032
        %v2057 = vand.u32 2147483647, %v2033
        %v2058 = vand.u32 2147483647, %v2034
        %v2059 = vand.u32 2147483647, %v2035
        %v2060 = vand.u32 2147483647, %v2036
        %v2061 = vand.u32 2147483647, %v2037
        %v2062 = vand.u32 2147483647, %v2038
        %v2063 = vmul.f32 %v2055, 0.3275911
        %v2064 = vmul.f32 %v2056, 0.3275911
        %v2065 = vmul.f32 %v2057, 0.3275911
        %v2066 = vmul.f32 %v2058, 0.3275911
        %v2067 = vmul.f32 %v2059, 0.3275911
        %v2068 = vmul.f32 %v2060, 0.3275911
        %v2069 = vmul.f32 %v2061, 0.3275911
        %v2070 = vmul.f32 %v2062, 0.3275911
        %v2071 = vadd.f32 %v2063, 1.0
        %v2072 = vadd.f32 %v2064, 1.0
        %v2073 = vadd.f32 %v2065, 1.0
        %v2074 = vadd.f32 %v2066, 1.0
        %v2075 = vadd.f32 %v2067, 1.0
        %v2076 = vadd.f32 %v2068, 1.0
        %v2077 = vadd.f32 %v2069, 1.0
        %v2078 = vadd.f32 %v2070, 1.0
        %v2079 = vrcp.pop %v2071
        %v2080 = vmul.f32 1.0, %v2079
        %v2081 = vrcp.pop %v2072
        %v2082 = vmul.f32 1.0, %v2081
        %v2083 = vrcp.pop %v2073
        %v2084 = vmul.f32 1.0, %v2083
        %v2085 = vrcp.pop %v2074
        %v2086 = vmul.f32 1.0, %v2085
        %v2087 = vrcp.pop %v2075
        %v2088 = vmul.f32 1.0, %v2087
        %v2089 = vrcp.pop %v2076
        %v2090 = vmul.f32 1.0, %v2089
        %v2091 = vrcp.pop %v2077
        %v2092 = vmul.f32 1.0, %v2091
        %v2093 = vrcp.pop %v2078
        %v2094 = vmul.f32 1.0, %v2093
        %v2095 = vmul.f32 %v2080, 1.0614054
        %v2096 = vmul.f32 %v2082, 1.0614054
        %v2097 = vmul.f32 %v2084, 1.0614054
        %v2098 = vmul.f32 %v2086, 1.0614054
        %v2099 = vmul.f32 %v2088, 1.0614054
        %v2100 = vmul.f32 %v2090, 1.0614054
        %v2101 = vmul.f32 %v2092, 1.0614054
        %v2102 = vmul.f32 %v2094, 1.0614054
        %v2103 = vadd.f32 %v2095, -1.4531521
        %v2104 = vadd.f32 %v2096, -1.4531521
        %v2105 = vadd.f32 %v2097, -1.4531521
        %v2106 = vadd.f32 %v2098, -1.4531521
        %v2107 = vadd.f32 %v2099, -1.4531521
        %v2108 = vadd.f32 %v2100, -1.4531521
        %v2109 = vadd.f32 %v2101, -1.4531521
        %v2110 = vadd.f32 %v2102, -1.4531521
        %v2111 = vmul.f32 %v2103, %v2080
        %v2112 = vmul.f32 %v2104, %v2082
        %v2113 = vmul.f32 %v2105, %v2084
        %v2114 = vmul.f32 %v2106, %v2086
        %v2115 = vmul.f32 %v2107, %v2088
        %v2116 = vmul.f32 %v2108, %v2090
        %v2117 = vmul.f32 %v2109, %v2092
        %v2118 = vmul.f32 %v2110, %v2094
        %v2119 = vadd.f32 %v2111, 1.4214138
        %v2120 = vadd.f32 %v2112, 1.4214138
        %v2121 = vadd.f32 %v2113, 1.4214138
        %v2122 = vadd.f32 %v2114, 1.4214138
        %v2123 = vadd.f32 %v2115, 1.4214138
        %v2124 = vadd.f32 %v2116, 1.4214138
        %v2125 = vadd.f32 %v2117, 1.4214138
        %v2126 = vadd.f32 %v2118, 1.4214138
        %v2127 = vmul.f32 %v2119, %v2080
        %v2128 = vmul.f32 %v2120, %v2082
        %v2129 = vmul.f32 %v2121, %v2084
        %v2130 = vmul.f32 %v2122, %v2086
        %v2131 = vmul.f32 %v2123, %v2088
        %v2132 = vmul.f32 %v2124, %v2090
        %v2133 = vmul.f32 %v2125, %v2092
        %v2134 = vmul.f32 %v2126, %v2094
        %v2135 = vadd.f32 %v2127, -0.28449672
        %v2136 = vadd.f32 %v2128, -0.28449672
        %v2137 = vadd.f32 %v2129, -0.28449672
        %v2138 = vadd.f32 %v2130, -0.28449672
        %v2139 = vadd.f32 %v2131, -0.28449672
        %v2140 = vadd.f32 %v2132, -0.28449672
        %v2141 = vadd.f32 %v2133, -0.28449672
        %v2142 = vadd.f32 %v2134, -0.28449672
        %v2143 = vmul.f32 %v2135, %v2080
        %v2144 = vmul.f32 %v2136, %v2082
        %v2145 = vmul.f32 %v2137, %v2084
        %v2146 = vmul.f32 %v2138, %v2086
        %v2147 = vmul.f32 %v2139, %v2088
        %v2148 = vmul.f32 %v2140, %v2090
        %v2149 = vmul.f32 %v2141, %v2092
        %v2150 = vmul.f32 %v2142, %v2094
        %v2151 = vadd.f32 %v2143, 0.2548296
        %v2152 = vadd.f32 %v2144, 0.2548296
        %v2153 = vadd.f32 %v2145, 0.2548296
        %v2154 = vadd.f32 %v2146, 0.2548296
        %v2155 = vadd.f32 %v2147, 0.2548296
        %v2156 = vadd.f32 %v2148, 0.2548296
        %v2157 = vadd.f32 %v2149, 0.2548296
        %v2158 = vadd.f32 %v2150, 0.2548296
        %v2159 = vmul.f32 %v2151, %v2080
        %v2160 = vmul.f32 %v2152, %v2082
        %v2161 = vmul.f32 %v2153, %v2084
        %v2162 = vmul.f32 %v2154, %v2086
        %v2163 = vmul.f32 %v2155, %v2088
        %v2164 = vmul.f32 %v2156, %v2090
        %v2165 = vmul.f32 %v2157, %v2092
        %v2166 = vmul.f32 %v2158, %v2094
        %v2167 = vsub.f32 0.0, %v2055
        %v2168 = vsub.f32 0.0, %v2056
        %v2169 = vsub.f32 0.0, %v2057
        %v2170 = vsub.f32 0.0, %v2058
        %v2171 = vsub.f32 0.0, %v2059
        %v2172 = vsub.f32 0.0, %v2060
        %v2173 = vsub.f32 0.0, %v2061
        %v2174 = vsub.f32 0.0, %v2062
        %v2175 = vmul.f32 %v2167, %v2055
        %v2176 = vmul.f32 %v2168, %v2056
        %v2177 = vmul.f32 %v2169, %v2057
        %v2178 = vmul.f32 %v2170, %v2058
        %v2179 = vmul.f32 %v2171, %v2059
        %v2180 = vmul.f32 %v2172, %v2060
        %v2181 = vmul.f32 %v2173, %v2061
        %v2182 = vmul.f32 %v2174, %v2062
        %v2183 = vmul.f32 %v2175, 1.442695
        %v2184 = vpow.pop %v2183
        %v2185 = vmul.f32 %v2176, 1.442695
        %v2186 = vpow.pop %v2185
        %v2187 = vmul.f32 %v2177, 1.442695
        %v2188 = vpow.pop %v2187
        %v2189 = vmul.f32 %v2178, 1.442695
        %v2190 = vpow.pop %v2189
        %v2191 = vmul.f32 %v2179, 1.442695
        %v2192 = vpow.pop %v2191
        %v2193 = vmul.f32 %v2180, 1.442695
        %v2194 = vpow.pop %v2193
        %v2195 = vmul.f32 %v2181, 1.442695
        %v2196 = vpow.pop %v2195
        %v2197 = vmul.f32 %v2182, 1.442695
        %v2198 = vpow.pop %v2197
        %v2199 = vmul.f32 %v2159, %v2184
        %v2200 = vmul.f32 %v2160, %v2186
        %v2201 = vmul.f32 %v2161, %v2188
        %v2202 = vmul.f32 %v2162, %v2190
        %v2203 = vmul.f32 %v2163, %v2192
        %v2204 = vmul.f32 %v2164, %v2194
        %v2205 = vmul.f32 %v2165, %v2196
        %v2206 = vmul.f32 %v2166, %v2198
        %v2207 = vsub.f32 1.0, %v2199
        %v2208 = vsub.f32 1.0, %v2200
        %v2209 = vsub.f32 1.0, %v2201
        %v2210 = vsub.f32 1.0, %v2202
        %v2211 = vsub.f32 1.0, %v2203
        %v2212 = vsub.f32 1.0, %v2204
        %v2213 = vsub.f32 1.0, %v2205
        %v2214 = vsub.f32 1.0, %v2206
        %v2215 = vmul.f32 %v2047, %v2207
        %v2216 = vmul.f32 %v2048, %v2208
        %v2217 = vmul.f32 %v2049, %v2209
        %v2218 = vmul.f32 %v2050, %v2210
        %v2219 = vmul.f32 %v2051, %v2211
        %v2220 = vmul.f32 %v2052, %v2212
        %v2221 = vmul.f32 %v2053, %v2213
        %v2222 = vmul.f32 %v2054, %v2214
        %v2223 = vadd.f32 %v2215, 1.0
        %v2224 = vadd.f32 %v2216, 1.0
        %v2225 = vadd.f32 %v2217, 1.0
        %v2226 = vadd.f32 %v2218, 1.0
        %v2227 = vadd.f32 %v2219, 1.0
        %v2228 = vadd.f32 %v2220, 1.0
        %v2229 = vadd.f32 %v2221, 1.0
        %v2230 = vadd.f32 %v2222, 1.0
        %v2231 = vmul.f32 %v2023, %v2223
        %v2232 = vmul.f32 %v2024, %v2224
        %v2233 = vmul.f32 %v2025, %v2225
        %v2234 = vmul.f32 %v2026, %v2226
        %v2235 = vmul.f32 %v2027, %v2227
        %v2236 = vmul.f32 %v2028, %v2228
        %v2237 = vmul.f32 %v2029, %v2229
        %v2238 = vmul.f32 %v2030, %v2230
        %v2239 = vpack.c.bf16 %v2232, %v2231
        %v2240 = vpack.c.bf16 %v2234, %v2233
        %v2241 = vpack.c.bf16 %v2236, %v2235
        %v2242 = vpack.c.bf16 %v2238, %v2237
        %v2243 = vld [vmem:[%s10] sm:$0xf]
        %v2244 = vld [vmem:[%s10 + $0x4] sm:$0xf]
        %v2245 = vld [vmem:[%s10 + $0x8] sm:$0xf]
        %v2246 = vld [vmem:[%s10 + $0xc] sm:$0xf]
        %v2247 = vld [vmem:[%s10 + $0x10] sm:$0xf]
        %v2248 = vld [vmem:[%s10 + $0x14] sm:$0xf]
        %v2249 = vld [vmem:[%s10 + $0x18] sm:$0xf]
        %v2250 = vld [vmem:[%s10 + $0x1c] sm:$0xf]
        %v2251 = vlaneseq
        %v2252 = vshrl.u32 %v2251, 7
        %v2253 = vsub.s32 5, %v2252
        %v2254 = vrot.slane %v767, %v2253
        %v2263 = vunpack.c.l.b16 %v2243
        %v2264 = vunpack.c.l.b16 %v2244
        %v2265 = vunpack.c.l.b16 %v2245
        %v2266 = vunpack.c.l.b16 %v2246
        %v2267 = vunpack.c.l.b16 %v2247
        %v2268 = vunpack.c.l.b16 %v2248
        %v2269 = vunpack.c.l.b16 %v2249
        %v2270 = vunpack.c.l.b16 %v2250
        %v2271 = vpack.c.b16 %v2264, %v2263
        %v2272 = vpack.c.b16 %v2266, %v2265
        %v2273 = vpack.c.b16 %v2268, %v2267
        %v2274 = vpack.c.b16 %v2270, %v2269
        %v2280 = vsel %vm1074, %v2239, 0
        %v2283 = vsel %vm1074, %v2240, 0
        %v2286 = vsel %vm1074, %v2241, 0
        %v2289 = vsel %vm1074, %v2242, 0
        %2291 = vmatprep.subr.bf16.mxu0 0
        %2292 = vmatpush1.bf16.msra.mxu0 0
        %2293 = vmatprep.subr.bf16.mxu0 0
        %2294 = vmatpush1.bf16.msra.mxu0 0
        %2295 = vmatprep.subr.bf16.mxu0 0
        %2296 = vmatpush1.bf16.msra.mxu0 0
        %2297 = vmatprep.subr.bf16.mxu0 0
        %2298 = vmatpush1.bf16.msra.mxu0 0
        %2299 = vmatprep.subr.bf16.mxu0 0
        %2300 = vmatpush1.bf16.msra.mxu0 %v2274
        %2301 = vmatprep.subr.bf16.mxu0 0
        %2302 = vmatpush1.bf16.msra.mxu0 %v2273
        %2303 = vmatprep.subr.bf16.mxu0 0
        %2304 = vmatpush1.bf16.msra.mxu0 %v2272
        %2305 = vmatprep.subr.bf16.mxu0 0
        %2306 = vmatpush1.bf16.msra.mxu0 %v2271
        %2307 = vmatprep.subr.bf16.mxu0 0
        %2308 = vmatpush2.bf16.msra.mxu0 0
        %2309 = vmatprep.subr.bf16.mxu0 0
        %2310 = vmatpush2.bf16.msra.mxu0 0
        %2311 = vmatprep.subr.bf16.mxu0 0
        %2312 = vmatpush2.bf16.msra.mxu0 0
        %2313 = vmatprep.subr.bf16.mxu0 0
        %2314 = vmatpush2.bf16.msra.mxu0 0
        %2315 = vmatprep.subr.bf16.mxu0 0
        %2316 = vmatpush2.bf16.msra.mxu0 0
        %2317 = vmatprep.subr.bf16.mxu0 0
        %2318 = vmatpush2.bf16.msra.mxu0 0
        %2319 = vmatprep.subr.bf16.mxu0 0
        %2320 = vmatpush2.bf16.msra.mxu0 0
        %2321 = vmatprep.subr.bf16.mxu0 0
        %2322 = vmatpush2.bf16.msra.mxu0 0
        %2323 = vmatprep.mubr.bf16.mxu0 0
        %2324 = vmatmul.mubr.bf16.gmra.mxu0 %v2280
        %v2325 = vpop.f32.mrf.mxu0
        %v2326 = vadd.f32 %v2254, %v2325
        %v2327 = vpop.f32.mrf.mxu0
        %v2328 = vpop.f32.mrf.mxu0
        %v2329 = vadd.f32 %v2254, %v2328
        %v2330 = vpop.f32.mrf.mxu0
        %2331 = vmatprep.mubr.bf16.mxu0 0
        %2332 = vmatmul.mubr.bf16.gmra.mxu0 %v2283
        %v2333 = vpop.f32.mrf.mxu0
        %v2334 = vadd.f32 %v2254, %v2333
        %v2335 = vpop.f32.mrf.mxu0
        %v2336 = vpop.f32.mrf.mxu0
        %v2337 = vadd.f32 %v2254, %v2336
        %v2338 = vpop.f32.mrf.mxu0
        %2339 = vmatprep.mubr.bf16.mxu0 0
        %2340 = vmatmul.mubr.bf16.gmra.mxu0 %v2286
        %v2341 = vpop.f32.mrf.mxu0
        %v2342 = vadd.f32 %v2254, %v2341
        %v2343 = vpop.f32.mrf.mxu0
        %v2344 = vpop.f32.mrf.mxu0
        %v2345 = vadd.f32 %v2254, %v2344
        %v2346 = vpop.f32.mrf.mxu0
        %2347 = vmatprep.mubr.bf16.mxu0 0
        %2348 = vmatmul.mubr.bf16.gmra.mxu0 %v2289
        %v2349 = vpop.f32.mrf.mxu0
        %v2350 = vadd.f32 %v2254, %v2349
        %v2351 = vpop.f32.mrf.mxu0
        %v2352 = vpop.f32.mrf.mxu0
        %v2353 = vadd.f32 %v2254, %v2352
        %v2354 = vpop.f32.mrf.mxu0
        %2355 = vdwg.mxu0
        %v2356 = vadd.f32 %v1783, %v2326
        %v2357 = vadd.f32 %v1784, %v2329
        %v2358 = vadd.f32 %v1785, %v2334
        %v2359 = vadd.f32 %v1786, %v2337
        %v2360 = vadd.f32 %v1787, %v2342
        %v2361 = vadd.f32 %v1788, %v2345
        %v2362 = vadd.f32 %v1789, %v2350
        %v2363 = vadd.f32 %v1790, %v2353
        %s2364 = scalar_lea.vmem %s5, 8
        %v2365 = vld [vmem:[%s2364] sm:$0x3f]
        %v2366 = vsel %vm629, %v2356, 0.0
        %2367 = vadd.xlane.f32.xlu0 %v2366
        %v2368 = vpop.xlane.xlu0 %2367
        %v2369 = vsel %vm629, %v2357, 0.0
        %2370 = vadd.xlane.f32.xlu0 %v2369
        %v2371 = vpop.xlane.xlu0 %2370
        %v2372 = vsel %vm629, %v2358, 0.0
        %2373 = vadd.xlane.f32.xlu0 %v2372
        %v2374 = vpop.xlane.xlu0 %2373
        %v2375 = vsel %vm629, %v2359, 0.0
        %2376 = vadd.xlane.f32.xlu0 %v2375
        %v2377 = vpop.xlane.xlu0 %2376
        %v2378 = vsel %vm629, %v2360, 0.0
        %2379 = vadd.xlane.f32.xlu0 %v2378
        %v2380 = vpop.xlane.xlu0 %2379
        %v2381 = vsel %vm629, %v2361, 0.0
        %2382 = vadd.xlane.f32.xlu0 %v2381
        %v2383 = vpop.xlane.xlu0 %2382
        %v2384 = vsel %vm629, %v2362, 0.0
        %2385 = vadd.xlane.f32.xlu0 %v2384
        %v2386 = vpop.xlane.xlu0 %2385
        %v2387 = vsel %vm629, %v2363, 0.0
        %2388 = vadd.xlane.f32.xlu0 %v2387
        %v2389 = vpop.xlane.xlu0 %2388
        %v2390 = vmul.f32 %v2368, %v651
        %v2391 = vmul.f32 %v2371, %v651
        %v2392 = vmul.f32 %v2374, %v651
        %v2393 = vmul.f32 %v2377, %v651
        %v2394 = vmul.f32 %v2380, %v651
        %v2395 = vmul.f32 %v2383, %v651
        %v2396 = vmul.f32 %v2386, %v651
        %v2397 = vmul.f32 %v2389, %v651
        %v2398 = vsub.f32 %v2356, %v2390
        %v2399 = vsub.f32 %v2357, %v2391
        %v2400 = vsub.f32 %v2358, %v2392
        %v2401 = vsub.f32 %v2359, %v2393
        %v2402 = vsub.f32 %v2360, %v2394
        %v2403 = vsub.f32 %v2361, %v2395
        %v2404 = vsub.f32 %v2362, %v2396
        %v2405 = vsub.f32 %v2363, %v2397
        %v2406 = vmul.f32 %v2398, %v2398
        %v2407 = vmul.f32 %v2399, %v2399
        %v2408 = vmul.f32 %v2400, %v2400
        %v2409 = vmul.f32 %v2401, %v2401
        %v2410 = vmul.f32 %v2402, %v2402
        %v2411 = vmul.f32 %v2403, %v2403
        %v2412 = vmul.f32 %v2404, %v2404
        %v2413 = vmul.f32 %v2405, %v2405
        %v2414 = vsel %vm629, %v2406, 0.0
        %2415 = vadd.xlane.f32.xlu0 %v2414
        %v2416 = vpop.xlane.xlu0 %2415
        %v2417 = vsel %vm629, %v2407, 0.0
        %2418 = vadd.xlane.f32.xlu0 %v2417
        %v2419 = vpop.xlane.xlu0 %2418
        %v2420 = vsel %vm629, %v2408, 0.0
        %2421 = vadd.xlane.f32.xlu0 %v2420
        %v2422 = vpop.xlane.xlu0 %2421
        %v2423 = vsel %vm629, %v2409, 0.0
        %2424 = vadd.xlane.f32.xlu0 %v2423
        %v2425 = vpop.xlane.xlu0 %2424
        %v2426 = vsel %vm629, %v2410, 0.0
        %2427 = vadd.xlane.f32.xlu0 %v2426
        %v2428 = vpop.xlane.xlu0 %2427
        %v2429 = vsel %vm629, %v2411, 0.0
        %2430 = vadd.xlane.f32.xlu0 %v2429
        %v2431 = vpop.xlane.xlu0 %2430
        %v2432 = vsel %vm629, %v2412, 0.0
        %2433 = vadd.xlane.f32.xlu0 %v2432
        %v2434 = vpop.xlane.xlu0 %2433
        %v2435 = vsel %vm629, %v2413, 0.0
        %2436 = vadd.xlane.f32.xlu0 %v2435
        %v2437 = vpop.xlane.xlu0 %2436
        %v2438 = vmul.f32 %v2416, %v651
        %v2439 = vmul.f32 %v2419, %v651
        %v2440 = vmul.f32 %v2422, %v651
        %v2441 = vmul.f32 %v2425, %v651
        %v2442 = vmul.f32 %v2428, %v651
        %v2443 = vmul.f32 %v2431, %v651
        %v2444 = vmul.f32 %v2434, %v651
        %v2445 = vmul.f32 %v2437, %v651
        %v2446 = vadd.f32 %v2438, 1e-05
        %v2447 = vadd.f32 %v2439, 1e-05
        %v2448 = vadd.f32 %v2440, 1e-05
        %v2449 = vadd.f32 %v2441, 1e-05
        %v2450 = vadd.f32 %v2442, 1e-05
        %v2451 = vadd.f32 %v2443, 1e-05
        %v2452 = vadd.f32 %v2444, 1e-05
        %v2453 = vadd.f32 %v2445, 1e-05
        %v2454 = vrsqrt.pop %v2446
        %v2455 = vrsqrt.pop %v2447
        %v2456 = vrsqrt.pop %v2448
        %v2457 = vrsqrt.pop %v2449
        %v2458 = vrsqrt.pop %v2450
        %v2459 = vrsqrt.pop %v2451
        %v2460 = vrsqrt.pop %v2452
        %v2461 = vrsqrt.pop %v2453
        %v2462 = vmul.f32 %v2398, %v2454
        %v2463 = vmul.f32 %v2399, %v2455
        %v2464 = vmul.f32 %v2400, %v2456
        %v2465 = vmul.f32 %v2401, %v2457
        %v2466 = vmul.f32 %v2402, %v2458
        %v2467 = vmul.f32 %v2403, %v2459
        %v2468 = vmul.f32 %v2404, %v2460
        %v2469 = vmul.f32 %v2405, %v2461
        %v2470 = vlaneseq
        %v2471 = vshrl.u32 %v2470, 7
        %v2472 = vsub.s32 0, %v2471
        %v2473 = vrot.slane %v2365, %v2472
        %v2474 = vmul.f32 %v2462, %v2473
        %v2475 = vmul.f32 %v2463, %v2473
        %v2476 = vmul.f32 %v2464, %v2473
        %v2477 = vmul.f32 %v2465, %v2473
        %v2478 = vmul.f32 %v2466, %v2473
        %v2479 = vmul.f32 %v2467, %v2473
        %v2480 = vmul.f32 %v2468, %v2473
        %v2481 = vmul.f32 %v2469, %v2473
        %v2482 = vlaneseq
        %v2483 = vshrl.u32 %v2482, 7
        %v2484 = vsub.s32 1, %v2483
        %v2485 = vrot.slane %v2365, %v2484
        %v2486 = vadd.f32 %v2474, %v2485
        %v2487 = vadd.f32 %v2475, %v2485
        %v2488 = vadd.f32 %v2476, %v2485
        %v2489 = vadd.f32 %v2477, %v2485
        %v2490 = vadd.f32 %v2478, %v2485
        %v2491 = vadd.f32 %v2479, %v2485
        %v2492 = vadd.f32 %v2480, %v2485
        %v2493 = vadd.f32 %v2481, %v2485
        %v2494 = vpack.c.bf16 %v2487, %v2486
        %v2495 = vpack.c.bf16 %v2489, %v2488
        %v2496 = vpack.c.bf16 %v2491, %v2490
        %v2497 = vpack.c.bf16 %v2493, %v2492
        %s2498 = scalar_lea.vmem %s7, 32
        %v2499 = vld [vmem:[%s2498] sm:$0xf]
        %v2500 = vld [vmem:[%s2498 + $0x4] sm:$0xf]
        %v2501 = vld [vmem:[%s2498 + $0x8] sm:$0xf]
        %v2502 = vld [vmem:[%s2498 + $0xc] sm:$0xf]
        %v2507 = vunpack.c.l.b16 %v2499
        %v2508 = vunpack.c.l.b16 %v2500
        %v2509 = vunpack.c.l.b16 %v2501
        %v2510 = vunpack.c.l.b16 %v2502
        %v2511 = vpack.c.b16 %v2508, %v2507
        %v2512 = vpack.c.b16 %v2510, %v2509
        %v2516 = vsel %vm629, %v2494, 0
        %v2519 = vsel %vm629, %v2495, 0
        %v2522 = vsel %vm629, %v2496, 0
        %v2525 = vsel %vm629, %v2497, 0
        %2527 = vmatprep.subr.bf16.mxu0 0
        %2528 = vmatpush1.bf16.msra.mxu0 0
        %2529 = vmatprep.subr.bf16.mxu0 0
        %2530 = vmatpush1.bf16.msra.mxu0 0
        %2531 = vmatprep.subr.bf16.mxu0 0
        %2532 = vmatpush1.bf16.msra.mxu0 0
        %2533 = vmatprep.subr.bf16.mxu0 0
        %2534 = vmatpush1.bf16.msra.mxu0 0
        %2535 = vmatprep.subr.bf16.mxu0 0
        %2536 = vmatpush1.bf16.msra.mxu0 0
        %2537 = vmatprep.subr.bf16.mxu0 0
        %2538 = vmatpush1.bf16.msra.mxu0 0
        %2539 = vmatprep.subr.bf16.mxu0 0
        %2540 = vmatpush1.bf16.msra.mxu0 %v2512
        %2541 = vmatprep.subr.bf16.mxu0 0
        %2542 = vmatpush1.bf16.msra.mxu0 %v2511
        %2543 = vmatprep.subr.bf16.mxu0 0
        %2544 = vmatpush2.bf16.msra.mxu0 0
        %2545 = vmatprep.subr.bf16.mxu0 0
        %2546 = vmatpush2.bf16.msra.mxu0 0
        %2547 = vmatprep.subr.bf16.mxu0 0
        %2548 = vmatpush2.bf16.msra.mxu0 0
        %2549 = vmatprep.subr.bf16.mxu0 0
        %2550 = vmatpush2.bf16.msra.mxu0 0
        %2551 = vmatprep.subr.bf16.mxu0 0
        %2552 = vmatpush2.bf16.msra.mxu0 0
        %2553 = vmatprep.subr.bf16.mxu0 0
        %2554 = vmatpush2.bf16.msra.mxu0 0
        %2555 = vmatprep.subr.bf16.mxu0 0
        %2556 = vmatpush2.bf16.msra.mxu0 0
        %2557 = vmatprep.subr.bf16.mxu0 0
        %2558 = vmatpush2.bf16.msra.mxu0 0
        %2559 = vmatprep.mubr.bf16.mxu0 0
        %2560 = vmatmul.mubr.bf16.gmra.mxu0 %v2516
        %v2561 = vpop.f32.mrf.mxu0
        %v2562 = vadd.f32 0.0, %v2561
        %v2563 = vpop.f32.mrf.mxu0
        %v2564 = vpop.f32.mrf.mxu0
        %v2565 = vadd.f32 0.0, %v2564
        %v2566 = vpop.f32.mrf.mxu0
        %2567 = vmatprep.mubr.bf16.mxu0 0
        %2568 = vmatmul.mubr.bf16.gmra.mxu0 %v2519
        %v2569 = vpop.f32.mrf.mxu0
        %v2570 = vadd.f32 0.0, %v2569
        %v2571 = vpop.f32.mrf.mxu0
        %v2572 = vpop.f32.mrf.mxu0
        %v2573 = vadd.f32 0.0, %v2572
        %v2574 = vpop.f32.mrf.mxu0
        %2575 = vmatprep.mubr.bf16.mxu0 0
        %2576 = vmatmul.mubr.bf16.gmra.mxu0 %v2522
        %v2577 = vpop.f32.mrf.mxu0
        %v2578 = vadd.f32 0.0, %v2577
        %v2579 = vpop.f32.mrf.mxu0
        %v2580 = vpop.f32.mrf.mxu0
        %v2581 = vadd.f32 0.0, %v2580
        %v2582 = vpop.f32.mrf.mxu0
        %2583 = vmatprep.mubr.bf16.mxu0 0
        %2584 = vmatmul.mubr.bf16.gmra.mxu0 %v2525
        %v2585 = vpop.f32.mrf.mxu0
        %v2586 = vadd.f32 0.0, %v2585
        %v2587 = vpop.f32.mrf.mxu0
        %v2588 = vpop.f32.mrf.mxu0
        %v2589 = vadd.f32 0.0, %v2588
        %v2590 = vpop.f32.mrf.mxu0
        %2591 = vdwg.mxu0
        %v2592 = vpack.c.bf16 %v2565, %v2562
        %v2593 = vpack.c.bf16 %v2573, %v2570
        %v2594 = vpack.c.bf16 %v2581, %v2578
        %v2595 = vpack.c.bf16 %v2589, %v2586
        %v2597 = vsel %vm629, %v2592, 0
        %v2600 = vsel %vm629, %v2593, 0
        %v2603 = vsel %vm629, %v2594, 0
        %v2606 = vsel %vm629, %v2595, 0
        %2608 = vmatprep.subr.bf16.mxu0 0
        %2609 = vmatpush1.bf16.xpose.msra.mxu0 0
        %2610 = vmatprep.subr.bf16.mxu0 0
        %2611 = vmatpush1.bf16.xpose.msra.mxu0 0
        %2612 = vmatprep.subr.bf16.mxu0 0
        %2613 = vmatpush1.bf16.xpose.msra.mxu0 0
        %2614 = vmatprep.subr.bf16.mxu0 0
        %2615 = vmatpush1.bf16.xpose.msra.mxu0 0
        %2616 = vmatprep.subr.bf16.mxu0 0
        %2617 = vmatpush1.bf16.xpose.msra.mxu0 %v2525
        %2618 = vmatprep.subr.bf16.mxu0 0
        %2619 = vmatpush1.bf16.xpose.msra.mxu0 %v2522
        %2620 = vmatprep.subr.bf16.mxu0 0
        %2621 = vmatpush1.bf16.xpose.msra.mxu0 %v2519
        %2622 = vmatprep.subr.bf16.mxu0 0
        %2623 = vmatpush1.bf16.xpose.msra.mxu0 %v2516
        %2624 = vmatprep.subr.bf16.mxu0 0
        %2625 = vmatpush2.bf16.xpose.msra.mxu0 0
        %2626 = vmatprep.subr.bf16.mxu0 0
        %2627 = vmatpush2.bf16.xpose.msra.mxu0 0
        %2628 = vmatprep.subr.bf16.mxu0 0
        %2629 = vmatpush2.bf16.xpose.msra.mxu0 0
        %2630 = vmatprep.subr.bf16.mxu0 0
        %2631 = vmatpush2.bf16.xpose.msra.mxu0 0
        %2632 = vmatprep.subr.bf16.mxu0 0
        %2633 = vmatpush2.bf16.xpose.msra.mxu0 0
        %2634 = vmatprep.subr.bf16.mxu0 0
        %2635 = vmatpush2.bf16.xpose.msra.mxu0 0
        %2636 = vmatprep.subr.bf16.mxu0 0
        %2637 = vmatpush2.bf16.xpose.msra.mxu0 0
        %2638 = vmatprep.subr.bf16.mxu0 0
        %2639 = vmatpush2.bf16.xpose.msra.mxu0 0
        %2640 = vmatprep.mubr.bf16.mxu0 0
        %2641 = vmatmul.mubr.bf16.gmra.mxu0 %v2597
        %v2642 = vpop.f32.mrf.mxu0
        %v2643 = vadd.f32 %v759, %v2642
        %v2644 = vpop.f32.mrf.mxu0
        %v2645 = vpop.f32.mrf.mxu0
        %v2646 = vadd.f32 %v760, %v2645
        %v2647 = vpop.f32.mrf.mxu0
        %2648 = vmatprep.mubr.bf16.mxu0 0
        %2649 = vmatmul.mubr.bf16.gmra.mxu0 %v2600
        %v2650 = vpop.f32.mrf.mxu0
        %v2651 = vadd.f32 %v761, %v2650
        %v2652 = vpop.f32.mrf.mxu0
        %v2653 = vpop.f32.mrf.mxu0
        %v2654 = vadd.f32 %v762, %v2653
        %v2655 = vpop.f32.mrf.mxu0
        %2656 = vmatprep.mubr.bf16.mxu0 0
        %2657 = vmatmul.mubr.bf16.gmra.mxu0 %v2603
        %v2658 = vpop.f32.mrf.mxu0
        %v2659 = vadd.f32 %v763, %v2658
        %v2660 = vpop.f32.mrf.mxu0
        %v2661 = vpop.f32.mrf.mxu0
        %v2662 = vadd.f32 %v764, %v2661
        %v2663 = vpop.f32.mrf.mxu0
        %2664 = vmatprep.mubr.bf16.mxu0 0
        %2665 = vmatmul.mubr.bf16.gmra.mxu0 %v2606
        %v2666 = vpop.f32.mrf.mxu0
        %v2667 = vadd.f32 %v765, %v2666
        %v2668 = vpop.f32.mrf.mxu0
        %v2669 = vpop.f32.mrf.mxu0
        %v2670 = vadd.f32 %v766, %v2669
        %v2671 = vpop.f32.mrf.mxu0
        %2672 = vdwg.mxu0
        %v2673 = vsel %vm1074, %v2643, -inf
        %2674 = vmax.xlane.f32.xlu0 %v2673
        %v2675 = vpop.xlane.xlu0 %2674
        %v2676 = vsel %vm1074, %v2646, -inf
        %2677 = vmax.xlane.f32.xlu0 %v2676
        %v2678 = vpop.xlane.xlu0 %2677
        %v2679 = vsel %vm1074, %v2651, -inf
        %2680 = vmax.xlane.f32.xlu0 %v2679
        %v2681 = vpop.xlane.xlu0 %2680
        %v2682 = vsel %vm1074, %v2654, -inf
        %2683 = vmax.xlane.f32.xlu0 %v2682
        %v2684 = vpop.xlane.xlu0 %2683
        %v2685 = vsel %vm1074, %v2659, -inf
        %2686 = vmax.xlane.f32.xlu0 %v2685
        %v2687 = vpop.xlane.xlu0 %2686
        %v2688 = vsel %vm1074, %v2662, -inf
        %2689 = vmax.xlane.f32.xlu0 %v2688
        %v2690 = vpop.xlane.xlu0 %2689
        %v2691 = vsel %vm1074, %v2667, -inf
        %2692 = vmax.xlane.f32.xlu0 %v2691
        %v2693 = vpop.xlane.xlu0 %2692
        %v2694 = vsel %vm1074, %v2670, -inf
        %2695 = vmax.xlane.f32.xlu0 %v2694
        %v2696 = vpop.xlane.xlu0 %2695
        %v2697 = vsub.f32 %v2643, %v2675
        %v2698 = vsub.f32 %v2646, %v2678
        %v2699 = vsub.f32 %v2651, %v2681
        %v2700 = vsub.f32 %v2654, %v2684
        %v2701 = vsub.f32 %v2659, %v2687
        %v2702 = vsub.f32 %v2662, %v2690
        %v2703 = vsub.f32 %v2667, %v2693
        %v2704 = vsub.f32 %v2670, %v2696
        %v2705 = vmul.f32 %v2697, 1.442695
        %v2706 = vpow.pop %v2705
        %v2707 = vmul.f32 %v2698, 1.442695
        %v2708 = vpow.pop %v2707
        %v2709 = vmul.f32 %v2699, 1.442695
        %v2710 = vpow.pop %v2709
        %v2711 = vmul.f32 %v2700, 1.442695
        %v2712 = vpow.pop %v2711
        %v2713 = vmul.f32 %v2701, 1.442695
        %v2714 = vpow.pop %v2713
        %v2715 = vmul.f32 %v2702, 1.442695
        %v2716 = vpow.pop %v2715
        %v2717 = vmul.f32 %v2703, 1.442695
        %v2718 = vpow.pop %v2717
        %v2719 = vmul.f32 %v2704, 1.442695
        %v2720 = vpow.pop %v2719
        %v2721 = vsel %vm1074, %v2706, 0.0
        %2722 = vadd.xlane.f32.xlu0 %v2721
        %v2723 = vpop.xlane.xlu0 %2722
        %v2724 = vsel %vm1074, %v2708, 0.0
        %2725 = vadd.xlane.f32.xlu0 %v2724
        %v2726 = vpop.xlane.xlu0 %2725
        %v2727 = vsel %vm1074, %v2710, 0.0
        %2728 = vadd.xlane.f32.xlu0 %v2727
        %v2729 = vpop.xlane.xlu0 %2728
        %v2730 = vsel %vm1074, %v2712, 0.0
        %2731 = vadd.xlane.f32.xlu0 %v2730
        %v2732 = vpop.xlane.xlu0 %2731
        %v2733 = vsel %vm1074, %v2714, 0.0
        %2734 = vadd.xlane.f32.xlu0 %v2733
        %v2735 = vpop.xlane.xlu0 %2734
        %v2736 = vsel %vm1074, %v2716, 0.0
        %2737 = vadd.xlane.f32.xlu0 %v2736
        %v2738 = vpop.xlane.xlu0 %2737
        %v2739 = vsel %vm1074, %v2718, 0.0
        %2740 = vadd.xlane.f32.xlu0 %v2739
        %v2741 = vpop.xlane.xlu0 %2740
        %v2742 = vsel %vm1074, %v2720, 0.0
        %2743 = vadd.xlane.f32.xlu0 %v2742
        %v2744 = vpop.xlane.xlu0 %2743
        %v2745 = vpack.c.bf16 %v2708, %v2706
        %v2746 = vpack.c.bf16 %v2712, %v2710
        %v2747 = vpack.c.bf16 %v2716, %v2714
        %v2748 = vpack.c.bf16 %v2720, %v2718
        %v2750 = vsel %vm1074, %v2745, 0
        %v2753 = vsel %vm1074, %v2746, 0
        %v2756 = vsel %vm1074, %v2747, 0
        %v2759 = vsel %vm1074, %v2748, 0
        %2761 = vmatprep.subr.bf16.mxu0 0
        %2762 = vmatpush1.bf16.msra.mxu0 0
        %2763 = vmatprep.subr.bf16.mxu0 0
        %2764 = vmatpush1.bf16.msra.mxu0 0
        %2765 = vmatprep.subr.bf16.mxu0 0
        %2766 = vmatpush1.bf16.msra.mxu0 0
        %2767 = vmatprep.subr.bf16.mxu0 0
        %2768 = vmatpush1.bf16.msra.mxu0 0
        %2769 = vmatprep.subr.bf16.mxu0 0
        %2770 = vmatpush1.bf16.msra.mxu0 %v2497
        %2771 = vmatprep.subr.bf16.mxu0 0
        %2772 = vmatpush1.bf16.msra.mxu0 %v2496
        %2773 = vmatprep.subr.bf16.mxu0 0
        %2774 = vmatpush1.bf16.msra.mxu0 %v2495
        %2775 = vmatprep.subr.bf16.mxu0 0
        %2776 = vmatpush1.bf16.msra.mxu0 %v2494
        %2777 = vmatprep.subr.bf16.mxu0 0
        %2778 = vmatpush2.bf16.msra.mxu0 0
        %2779 = vmatprep.subr.bf16.mxu0 0
        %2780 = vmatpush2.bf16.msra.mxu0 0
        %2781 = vmatprep.subr.bf16.mxu0 0
        %2782 = vmatpush2.bf16.msra.mxu0 0
        %2783 = vmatprep.subr.bf16.mxu0 0
        %2784 = vmatpush2.bf16.msra.mxu0 0
        %2785 = vmatprep.subr.bf16.mxu0 0
        %2786 = vmatpush2.bf16.msra.mxu0 0
        %2787 = vmatprep.subr.bf16.mxu0 0
        %2788 = vmatpush2.bf16.msra.mxu0 0
        %2789 = vmatprep.subr.bf16.mxu0 0
        %2790 = vmatpush2.bf16.msra.mxu0 0
        %2791 = vmatprep.subr.bf16.mxu0 0
        %2792 = vmatpush2.bf16.msra.mxu0 0
        %2793 = vmatprep.mubr.bf16.mxu0 0
        %2794 = vmatmul.mubr.bf16.gmra.mxu0 %v2750
        %v2795 = vpop.f32.mrf.mxu0
        %v2796 = vadd.f32 0.0, %v2795
        %v2797 = vpop.f32.mrf.mxu0
        %v2798 = vpop.f32.mrf.mxu0
        %v2799 = vadd.f32 0.0, %v2798
        %v2800 = vpop.f32.mrf.mxu0
        %2801 = vmatprep.mubr.bf16.mxu0 0
        %2802 = vmatmul.mubr.bf16.gmra.mxu0 %v2753
        %v2803 = vpop.f32.mrf.mxu0
        %v2804 = vadd.f32 0.0, %v2803
        %v2805 = vpop.f32.mrf.mxu0
        %v2806 = vpop.f32.mrf.mxu0
        %v2807 = vadd.f32 0.0, %v2806
        %v2808 = vpop.f32.mrf.mxu0
        %2809 = vmatprep.mubr.bf16.mxu0 0
        %2810 = vmatmul.mubr.bf16.gmra.mxu0 %v2756
        %v2811 = vpop.f32.mrf.mxu0
        %v2812 = vadd.f32 0.0, %v2811
        %v2813 = vpop.f32.mrf.mxu0
        %v2814 = vpop.f32.mrf.mxu0
        %v2815 = vadd.f32 0.0, %v2814
        %v2816 = vpop.f32.mrf.mxu0
        %2817 = vmatprep.mubr.bf16.mxu0 0
        %2818 = vmatmul.mubr.bf16.gmra.mxu0 %v2759
        %v2819 = vpop.f32.mrf.mxu0
        %v2820 = vadd.f32 0.0, %v2819
        %v2821 = vpop.f32.mrf.mxu0
        %v2822 = vpop.f32.mrf.mxu0
        %v2823 = vadd.f32 0.0, %v2822
        %v2824 = vpop.f32.mrf.mxu0
        %2825 = vdwg.mxu0
        %v2826 = vrcp.pop %v2723
        %v2827 = vrcp.pop %v2726
        %v2828 = vrcp.pop %v2729
        %v2829 = vrcp.pop %v2732
        %v2830 = vrcp.pop %v2735
        %v2831 = vrcp.pop %v2738
        %v2832 = vrcp.pop %v2741
        %v2833 = vrcp.pop %v2744
        %v2834 = vmul.f32 %v2796, %v2826
        %v2835 = vmul.f32 %v2799, %v2827
        %v2836 = vmul.f32 %v2804, %v2828
        %v2837 = vmul.f32 %v2807, %v2829
        %v2838 = vmul.f32 %v2812, %v2830
        %v2839 = vmul.f32 %v2815, %v2831
        %v2840 = vmul.f32 %v2820, %v2832
        %v2841 = vmul.f32 %v2823, %v2833
        %v2842 = vpack.c.bf16 %v2835, %v2834
        %v2843 = vpack.c.bf16 %v2837, %v2836
        %v2844 = vpack.c.bf16 %v2839, %v2838
        %v2845 = vpack.c.bf16 %v2841, %v2840
        %s2846 = scalar_lea.vmem %s8, 32
        %v2847 = vld [vmem:[%s2846] sm:$0xf]
        %v2848 = vld [vmem:[%s2846 + $0x4] sm:$0xf]
        %v2849 = vld [vmem:[%s2846 + $0x8] sm:$0xf]
        %v2850 = vld [vmem:[%s2846 + $0xc] sm:$0xf]
        %s2851 = scalar_lea.vmem %s7, 48
        %v2852 = vld [vmem:[%s2851] sm:$0xf]
        %v2853 = vld [vmem:[%s2851 + $0x4] sm:$0xf]
        %v2854 = vld [vmem:[%s2851 + $0x8] sm:$0xf]
        %v2855 = vld [vmem:[%s2851 + $0xc] sm:$0xf]
        %v2860 = vunpack.c.l.b16 %v2852
        %v2861 = vunpack.c.l.b16 %v2853
        %v2862 = vunpack.c.l.b16 %v2854
        %v2863 = vunpack.c.l.b16 %v2855
        %v2864 = vpack.c.b16 %v2861, %v2860
        %v2865 = vpack.c.b16 %v2863, %v2862
        %2868 = vmatprep.subr.bf16.mxu0 0
        %2869 = vmatpush1.bf16.msra.mxu0 0
        %2870 = vmatprep.subr.bf16.mxu0 0
        %2871 = vmatpush1.bf16.msra.mxu0 0
        %2872 = vmatprep.subr.bf16.mxu0 0
        %2873 = vmatpush1.bf16.msra.mxu0 0
        %2874 = vmatprep.subr.bf16.mxu0 0
        %2875 = vmatpush1.bf16.msra.mxu0 0
        %2876 = vmatprep.subr.bf16.mxu0 0
        %2877 = vmatpush1.bf16.msra.mxu0 0
        %2878 = vmatprep.subr.bf16.mxu0 0
        %2879 = vmatpush1.bf16.msra.mxu0 0
        %2880 = vmatprep.subr.bf16.mxu0 0
        %2881 = vmatpush1.bf16.msra.mxu0 %v2865
        %2882 = vmatprep.subr.bf16.mxu0 0
        %2883 = vmatpush1.bf16.msra.mxu0 %v2864
        %2884 = vmatprep.subr.bf16.mxu0 0
        %2885 = vmatpush2.bf16.msra.mxu0 0
        %2886 = vmatprep.subr.bf16.mxu0 0
        %2887 = vmatpush2.bf16.msra.mxu0 0
        %2888 = vmatprep.subr.bf16.mxu0 0
        %2889 = vmatpush2.bf16.msra.mxu0 0
        %2890 = vmatprep.subr.bf16.mxu0 0
        %2891 = vmatpush2.bf16.msra.mxu0 0
        %2892 = vmatprep.subr.bf16.mxu0 0
        %2893 = vmatpush2.bf16.msra.mxu0 0
        %2894 = vmatprep.subr.bf16.mxu0 0
        %2895 = vmatpush2.bf16.msra.mxu0 0
        %2896 = vmatprep.subr.bf16.mxu0 0
        %2897 = vmatpush2.bf16.msra.mxu0 0
        %2898 = vmatprep.subr.bf16.mxu0 0
        %2899 = vmatpush2.bf16.msra.mxu0 0
        %2900 = vmatprep.mubr.bf16.mxu0 0
        %2901 = vmatmul.mubr.bf16.gmra.mxu0 %v2516
        %v2902 = vpop.f32.mrf.mxu0
        %v2903 = vadd.f32 0.0, %v2902
        %v2904 = vpop.f32.mrf.mxu0
        %v2905 = vpop.f32.mrf.mxu0
        %v2906 = vadd.f32 0.0, %v2905
        %v2907 = vpop.f32.mrf.mxu0
        %2908 = vmatprep.mubr.bf16.mxu0 0
        %2909 = vmatmul.mubr.bf16.gmra.mxu0 %v2519
        %v2910 = vpop.f32.mrf.mxu0
        %v2911 = vadd.f32 0.0, %v2910
        %v2912 = vpop.f32.mrf.mxu0
        %v2913 = vpop.f32.mrf.mxu0
        %v2914 = vadd.f32 0.0, %v2913
        %v2915 = vpop.f32.mrf.mxu0
        %2916 = vmatprep.mubr.bf16.mxu0 0
        %2917 = vmatmul.mubr.bf16.gmra.mxu0 %v2522
        %v2918 = vpop.f32.mrf.mxu0
        %v2919 = vadd.f32 0.0, %v2918
        %v2920 = vpop.f32.mrf.mxu0
        %v2921 = vpop.f32.mrf.mxu0
        %v2922 = vadd.f32 0.0, %v2921
        %v2923 = vpop.f32.mrf.mxu0
        %2924 = vmatprep.mubr.bf16.mxu0 0
        %2925 = vmatmul.mubr.bf16.gmra.mxu0 %v2525
        %v2926 = vpop.f32.mrf.mxu0
        %v2927 = vadd.f32 0.0, %v2926
        %v2928 = vpop.f32.mrf.mxu0
        %v2929 = vpop.f32.mrf.mxu0
        %v2930 = vadd.f32 0.0, %v2929
        %v2931 = vpop.f32.mrf.mxu0
        %2932 = vdwg.mxu0
        %v2933 = vpack.c.bf16 %v2906, %v2903
        %v2934 = vpack.c.bf16 %v2914, %v2911
        %v2935 = vpack.c.bf16 %v2922, %v2919
        %v2936 = vpack.c.bf16 %v2930, %v2927
        %v2938 = vsel %vm629, %v2933, 0
        %v2941 = vsel %vm629, %v2934, 0
        %v2944 = vsel %vm629, %v2935, 0
        %v2947 = vsel %vm629, %v2936, 0
        %2949 = vmatprep.subr.bf16.mxu0 0
        %2950 = vmatpush1.bf16.xpose.msra.mxu0 0
        %2951 = vmatprep.subr.bf16.mxu0 0
        %2952 = vmatpush1.bf16.xpose.msra.mxu0 0
        %2953 = vmatprep.subr.bf16.mxu0 0
        %2954 = vmatpush1.bf16.xpose.msra.mxu0 0
        %2955 = vmatprep.subr.bf16.mxu0 0
        %2956 = vmatpush1.bf16.xpose.msra.mxu0 0
        %2957 = vmatprep.subr.bf16.mxu0 0
        %2958 = vmatpush1.bf16.xpose.msra.mxu0 %v2525
        %2959 = vmatprep.subr.bf16.mxu0 0
        %2960 = vmatpush1.bf16.xpose.msra.mxu0 %v2522
        %2961 = vmatprep.subr.bf16.mxu0 0
        %2962 = vmatpush1.bf16.xpose.msra.mxu0 %v2519
        %2963 = vmatprep.subr.bf16.mxu0 0
        %2964 = vmatpush1.bf16.xpose.msra.mxu0 %v2516
        %2965 = vmatprep.subr.bf16.mxu0 0
        %2966 = vmatpush2.bf16.xpose.msra.mxu0 0
        %2967 = vmatprep.subr.bf16.mxu0 0
        %2968 = vmatpush2.bf16.xpose.msra.mxu0 0
        %2969 = vmatprep.subr.bf16.mxu0 0
        %2970 = vmatpush2.bf16.xpose.msra.mxu0 0
        %2971 = vmatprep.subr.bf16.mxu0 0
        %2972 = vmatpush2.bf16.xpose.msra.mxu0 0
        %2973 = vmatprep.subr.bf16.mxu0 0
        %2974 = vmatpush2.bf16.xpose.msra.mxu0 0
        %2975 = vmatprep.subr.bf16.mxu0 0
        %2976 = vmatpush2.bf16.xpose.msra.mxu0 0
        %2977 = vmatprep.subr.bf16.mxu0 0
        %2978 = vmatpush2.bf16.xpose.msra.mxu0 0
        %2979 = vmatprep.subr.bf16.mxu0 0
        %2980 = vmatpush2.bf16.xpose.msra.mxu0 0
        %2981 = vmatprep.mubr.bf16.mxu0 0
        %2982 = vmatmul.mubr.bf16.gmra.mxu0 %v2938
        %v2983 = vpop.f32.mrf.mxu0
        %v2984 = vadd.f32 %v759, %v2983
        %v2985 = vpop.f32.mrf.mxu0
        %v2986 = vpop.f32.mrf.mxu0
        %v2987 = vadd.f32 %v760, %v2986
        %v2988 = vpop.f32.mrf.mxu0
        %2989 = vmatprep.mubr.bf16.mxu0 0
        %2990 = vmatmul.mubr.bf16.gmra.mxu0 %v2941
        %v2991 = vpop.f32.mrf.mxu0
        %v2992 = vadd.f32 %v761, %v2991
        %v2993 = vpop.f32.mrf.mxu0
        %v2994 = vpop.f32.mrf.mxu0
        %v2995 = vadd.f32 %v762, %v2994
        %v2996 = vpop.f32.mrf.mxu0
        %2997 = vmatprep.mubr.bf16.mxu0 0
        %2998 = vmatmul.mubr.bf16.gmra.mxu0 %v2944
        %v2999 = vpop.f32.mrf.mxu0
        %v3000 = vadd.f32 %v763, %v2999
        %v3001 = vpop.f32.mrf.mxu0
        %v3002 = vpop.f32.mrf.mxu0
        %v3003 = vadd.f32 %v764, %v3002
        %v3004 = vpop.f32.mrf.mxu0
        %3005 = vmatprep.mubr.bf16.mxu0 0
        %3006 = vmatmul.mubr.bf16.gmra.mxu0 %v2947
        %v3007 = vpop.f32.mrf.mxu0
        %v3008 = vadd.f32 %v765, %v3007
        %v3009 = vpop.f32.mrf.mxu0
        %v3010 = vpop.f32.mrf.mxu0
        %v3011 = vadd.f32 %v766, %v3010
        %v3012 = vpop.f32.mrf.mxu0
        %3013 = vdwg.mxu0
        %v3014 = vsel %vm1074, %v2984, -inf
        %3015 = vmax.xlane.f32.xlu0 %v3014
        %v3016 = vpop.xlane.xlu0 %3015
        %v3017 = vsel %vm1074, %v2987, -inf
        %3018 = vmax.xlane.f32.xlu0 %v3017
        %v3019 = vpop.xlane.xlu0 %3018
        %v3020 = vsel %vm1074, %v2992, -inf
        %3021 = vmax.xlane.f32.xlu0 %v3020
        %v3022 = vpop.xlane.xlu0 %3021
        %v3023 = vsel %vm1074, %v2995, -inf
        %3024 = vmax.xlane.f32.xlu0 %v3023
        %v3025 = vpop.xlane.xlu0 %3024
        %v3026 = vsel %vm1074, %v3000, -inf
        %3027 = vmax.xlane.f32.xlu0 %v3026
        %v3028 = vpop.xlane.xlu0 %3027
        %v3029 = vsel %vm1074, %v3003, -inf
        %3030 = vmax.xlane.f32.xlu0 %v3029
        %v3031 = vpop.xlane.xlu0 %3030
        %v3032 = vsel %vm1074, %v3008, -inf
        %3033 = vmax.xlane.f32.xlu0 %v3032
        %v3034 = vpop.xlane.xlu0 %3033
        %v3035 = vsel %vm1074, %v3011, -inf
        %3036 = vmax.xlane.f32.xlu0 %v3035
        %v3037 = vpop.xlane.xlu0 %3036
        %v3038 = vsub.f32 %v2984, %v3016
        %v3039 = vsub.f32 %v2987, %v3019
        %v3040 = vsub.f32 %v2992, %v3022
        %v3041 = vsub.f32 %v2995, %v3025
        %v3042 = vsub.f32 %v3000, %v3028
        %v3043 = vsub.f32 %v3003, %v3031
        %v3044 = vsub.f32 %v3008, %v3034
        %v3045 = vsub.f32 %v3011, %v3037
        %v3046 = vmul.f32 %v3038, 1.442695
        %v3047 = vpow.pop %v3046
        %v3048 = vmul.f32 %v3039, 1.442695
        %v3049 = vpow.pop %v3048
        %v3050 = vmul.f32 %v3040, 1.442695
        %v3051 = vpow.pop %v3050
        %v3052 = vmul.f32 %v3041, 1.442695
        %v3053 = vpow.pop %v3052
        %v3054 = vmul.f32 %v3042, 1.442695
        %v3055 = vpow.pop %v3054
        %v3056 = vmul.f32 %v3043, 1.442695
        %v3057 = vpow.pop %v3056
        %v3058 = vmul.f32 %v3044, 1.442695
        %v3059 = vpow.pop %v3058
        %v3060 = vmul.f32 %v3045, 1.442695
        %v3061 = vpow.pop %v3060
        %v3062 = vsel %vm1074, %v3047, 0.0
        %3063 = vadd.xlane.f32.xlu0 %v3062
        %v3064 = vpop.xlane.xlu0 %3063
        %v3065 = vsel %vm1074, %v3049, 0.0
        %3066 = vadd.xlane.f32.xlu0 %v3065
        %v3067 = vpop.xlane.xlu0 %3066
        %v3068 = vsel %vm1074, %v3051, 0.0
        %3069 = vadd.xlane.f32.xlu0 %v3068
        %v3070 = vpop.xlane.xlu0 %3069
        %v3071 = vsel %vm1074, %v3053, 0.0
        %3072 = vadd.xlane.f32.xlu0 %v3071
        %v3073 = vpop.xlane.xlu0 %3072
        %v3074 = vsel %vm1074, %v3055, 0.0
        %3075 = vadd.xlane.f32.xlu0 %v3074
        %v3076 = vpop.xlane.xlu0 %3075
        %v3077 = vsel %vm1074, %v3057, 0.0
        %3078 = vadd.xlane.f32.xlu0 %v3077
        %v3079 = vpop.xlane.xlu0 %3078
        %v3080 = vsel %vm1074, %v3059, 0.0
        %3081 = vadd.xlane.f32.xlu0 %v3080
        %v3082 = vpop.xlane.xlu0 %3081
        %v3083 = vsel %vm1074, %v3061, 0.0
        %3084 = vadd.xlane.f32.xlu0 %v3083
        %v3085 = vpop.xlane.xlu0 %3084
        %v3086 = vpack.c.bf16 %v3049, %v3047
        %v3087 = vpack.c.bf16 %v3053, %v3051
        %v3088 = vpack.c.bf16 %v3057, %v3055
        %v3089 = vpack.c.bf16 %v3061, %v3059
        %v3091 = vsel %vm1074, %v3086, 0
        %v3094 = vsel %vm1074, %v3087, 0
        %v3097 = vsel %vm1074, %v3088, 0
        %v3100 = vsel %vm1074, %v3089, 0
        %3102 = vmatprep.subr.bf16.mxu0 0
        %3103 = vmatpush1.bf16.msra.mxu0 0
        %3104 = vmatprep.subr.bf16.mxu0 0
        %3105 = vmatpush1.bf16.msra.mxu0 0
        %3106 = vmatprep.subr.bf16.mxu0 0
        %3107 = vmatpush1.bf16.msra.mxu0 0
        %3108 = vmatprep.subr.bf16.mxu0 0
        %3109 = vmatpush1.bf16.msra.mxu0 0
        %3110 = vmatprep.subr.bf16.mxu0 0
        %3111 = vmatpush1.bf16.msra.mxu0 %v2497
        %3112 = vmatprep.subr.bf16.mxu0 0
        %3113 = vmatpush1.bf16.msra.mxu0 %v2496
        %3114 = vmatprep.subr.bf16.mxu0 0
        %3115 = vmatpush1.bf16.msra.mxu0 %v2495
        %3116 = vmatprep.subr.bf16.mxu0 0
        %3117 = vmatpush1.bf16.msra.mxu0 %v2494
        %3118 = vmatprep.subr.bf16.mxu0 0
        %3119 = vmatpush2.bf16.msra.mxu0 0
        %3120 = vmatprep.subr.bf16.mxu0 0
        %3121 = vmatpush2.bf16.msra.mxu0 0
        %3122 = vmatprep.subr.bf16.mxu0 0
        %3123 = vmatpush2.bf16.msra.mxu0 0
        %3124 = vmatprep.subr.bf16.mxu0 0
        %3125 = vmatpush2.bf16.msra.mxu0 0
        %3126 = vmatprep.subr.bf16.mxu0 0
        %3127 = vmatpush2.bf16.msra.mxu0 0
        %3128 = vmatprep.subr.bf16.mxu0 0
        %3129 = vmatpush2.bf16.msra.mxu0 0
        %3130 = vmatprep.subr.bf16.mxu0 0
        %3131 = vmatpush2.bf16.msra.mxu0 0
        %3132 = vmatprep.subr.bf16.mxu0 0
        %3133 = vmatpush2.bf16.msra.mxu0 0
        %3134 = vmatprep.mubr.bf16.mxu0 0
        %3135 = vmatmul.mubr.bf16.gmra.mxu0 %v3091
        %v3136 = vpop.f32.mrf.mxu0
        %v3137 = vadd.f32 0.0, %v3136
        %v3138 = vpop.f32.mrf.mxu0
        %v3139 = vpop.f32.mrf.mxu0
        %v3140 = vadd.f32 0.0, %v3139
        %v3141 = vpop.f32.mrf.mxu0
        %3142 = vmatprep.mubr.bf16.mxu0 0
        %3143 = vmatmul.mubr.bf16.gmra.mxu0 %v3094
        %v3144 = vpop.f32.mrf.mxu0
        %v3145 = vadd.f32 0.0, %v3144
        %v3146 = vpop.f32.mrf.mxu0
        %v3147 = vpop.f32.mrf.mxu0
        %v3148 = vadd.f32 0.0, %v3147
        %v3149 = vpop.f32.mrf.mxu0
        %3150 = vmatprep.mubr.bf16.mxu0 0
        %3151 = vmatmul.mubr.bf16.gmra.mxu0 %v3097
        %v3152 = vpop.f32.mrf.mxu0
        %v3153 = vadd.f32 0.0, %v3152
        %v3154 = vpop.f32.mrf.mxu0
        %v3155 = vpop.f32.mrf.mxu0
        %v3156 = vadd.f32 0.0, %v3155
        %v3157 = vpop.f32.mrf.mxu0
        %3158 = vmatprep.mubr.bf16.mxu0 0
        %3159 = vmatmul.mubr.bf16.gmra.mxu0 %v3100
        %v3160 = vpop.f32.mrf.mxu0
        %v3161 = vadd.f32 0.0, %v3160
        %v3162 = vpop.f32.mrf.mxu0
        %v3163 = vpop.f32.mrf.mxu0
        %v3164 = vadd.f32 0.0, %v3163
        %v3165 = vpop.f32.mrf.mxu0
        %3166 = vdwg.mxu0
        %v3167 = vrcp.pop %v3064
        %v3168 = vrcp.pop %v3067
        %v3169 = vrcp.pop %v3070
        %v3170 = vrcp.pop %v3073
        %v3171 = vrcp.pop %v3076
        %v3172 = vrcp.pop %v3079
        %v3173 = vrcp.pop %v3082
        %v3174 = vrcp.pop %v3085
        %v3175 = vmul.f32 %v3137, %v3167
        %v3176 = vmul.f32 %v3140, %v3168
        %v3177 = vmul.f32 %v3145, %v3169
        %v3178 = vmul.f32 %v3148, %v3170
        %v3179 = vmul.f32 %v3153, %v3171
        %v3180 = vmul.f32 %v3156, %v3172
        %v3181 = vmul.f32 %v3161, %v3173
        %v3182 = vmul.f32 %v3164, %v3174
        %v3183 = vpack.c.bf16 %v3176, %v3175
        %v3184 = vpack.c.bf16 %v3178, %v3177
        %v3185 = vpack.c.bf16 %v3180, %v3179
        %v3186 = vpack.c.bf16 %v3182, %v3181
        %s3187 = scalar_lea.vmem %s8, 48
        %v3188 = vld [vmem:[%s3187] sm:$0xf]
        %v3189 = vld [vmem:[%s3187 + $0x4] sm:$0xf]
        %v3190 = vld [vmem:[%s3187 + $0x8] sm:$0xf]
        %v3191 = vld [vmem:[%s3187 + $0xc] sm:$0xf]
        %v3196 = vunpack.c.l.b16 %v3188
        %v3197 = vunpack.c.l.b16 %v3189
        %v3198 = vunpack.c.l.b16 %v3190
        %v3199 = vunpack.c.l.b16 %v3191
        %v3200 = vpack.c.b16 %v3197, %v3196
        %v3201 = vpack.c.b16 %v3199, %v3198
        %v3205 = vsel %vm629, %v3183, 0
        %v3208 = vsel %vm629, %v3184, 0
        %v3211 = vsel %vm629, %v3185, 0
        %v3214 = vsel %vm629, %v3186, 0
        %3216 = vmatprep.subr.bf16.mxu0 0
        %3217 = vmatpush1.bf16.msra.mxu0 0
        %3218 = vmatprep.subr.bf16.mxu0 0
        %3219 = vmatpush1.bf16.msra.mxu0 0
        %3220 = vmatprep.subr.bf16.mxu0 0
        %3221 = vmatpush1.bf16.msra.mxu0 0
        %3222 = vmatprep.subr.bf16.mxu0 0
        %3223 = vmatpush1.bf16.msra.mxu0 0
        %3224 = vmatprep.subr.bf16.mxu0 0
        %3225 = vmatpush1.bf16.msra.mxu0 0
        %3226 = vmatprep.subr.bf16.mxu0 0
        %3227 = vmatpush1.bf16.msra.mxu0 0
        %3228 = vmatprep.subr.bf16.mxu0 0
        %3229 = vmatpush1.bf16.msra.mxu0 %v3201
        %3230 = vmatprep.subr.bf16.mxu0 0
        %3231 = vmatpush1.bf16.msra.mxu0 %v3200
        %3232 = vmatprep.subr.bf16.mxu0 0
        %3233 = vmatpush2.bf16.msra.mxu0 0
        %3234 = vmatprep.subr.bf16.mxu0 0
        %3235 = vmatpush2.bf16.msra.mxu0 0
        %3236 = vmatprep.subr.bf16.mxu0 0
        %3237 = vmatpush2.bf16.msra.mxu0 0
        %3238 = vmatprep.subr.bf16.mxu0 0
        %3239 = vmatpush2.bf16.msra.mxu0 0
        %3240 = vmatprep.subr.bf16.mxu0 0
        %3241 = vmatpush2.bf16.msra.mxu0 0
        %3242 = vmatprep.subr.bf16.mxu0 0
        %3243 = vmatpush2.bf16.msra.mxu0 0
        %3244 = vmatprep.subr.bf16.mxu0 0
        %3245 = vmatpush2.bf16.msra.mxu0 0
        %3246 = vmatprep.subr.bf16.mxu0 0
        %3247 = vmatpush2.bf16.msra.mxu0 0
        %3248 = vmatprep.mubr.bf16.mxu0 0
        %3249 = vmatmul.mubr.bf16.gmra.mxu0 %v3205
        %v3250 = vpop.f32.mrf.mxu0
        %v3251 = vadd.f32 0.0, %v3250
        %v3252 = vpop.f32.mrf.mxu0
        %v3253 = vpop.f32.mrf.mxu0
        %v3254 = vadd.f32 0.0, %v3253
        %v3255 = vpop.f32.mrf.mxu0
        %3256 = vmatprep.mubr.bf16.mxu0 0
        %3257 = vmatmul.mubr.bf16.gmra.mxu0 %v3208
        %v3258 = vpop.f32.mrf.mxu0
        %v3259 = vadd.f32 0.0, %v3258
        %v3260 = vpop.f32.mrf.mxu0
        %v3261 = vpop.f32.mrf.mxu0
        %v3262 = vadd.f32 0.0, %v3261
        %v3263 = vpop.f32.mrf.mxu0
        %3264 = vmatprep.mubr.bf16.mxu0 0
        %3265 = vmatmul.mubr.bf16.gmra.mxu0 %v3211
        %v3266 = vpop.f32.mrf.mxu0
        %v3267 = vadd.f32 0.0, %v3266
        %v3268 = vpop.f32.mrf.mxu0
        %v3269 = vpop.f32.mrf.mxu0
        %v3270 = vadd.f32 0.0, %v3269
        %v3271 = vpop.f32.mrf.mxu0
        %3272 = vmatprep.mubr.bf16.mxu0 0
        %3273 = vmatmul.mubr.bf16.gmra.mxu0 %v3214
        %v3274 = vpop.f32.mrf.mxu0
        %v3275 = vadd.f32 0.0, %v3274
        %v3276 = vpop.f32.mrf.mxu0
        %v3277 = vpop.f32.mrf.mxu0
        %v3278 = vadd.f32 0.0, %v3277
        %v3279 = vpop.f32.mrf.mxu0
        %3280 = vdwg.mxu0
        %v3285 = vunpack.c.l.b16 %v2847
        %v3286 = vunpack.c.l.b16 %v2848
        %v3287 = vunpack.c.l.b16 %v2849
        %v3288 = vunpack.c.l.b16 %v2850
        %v3289 = vpack.c.b16 %v3286, %v3285
        %v3290 = vpack.c.b16 %v3288, %v3287
        %v3294 = vsel %vm629, %v2842, 0
        %v3297 = vsel %vm629, %v2843, 0
        %v3300 = vsel %vm629, %v2844, 0
        %v3303 = vsel %vm629, %v2845, 0
        %3305 = vmatprep.subr.bf16.mxu0 0
        %3306 = vmatpush1.bf16.msra.mxu0 0
        %3307 = vmatprep.subr.bf16.mxu0 0
        %3308 = vmatpush1.bf16.msra.mxu0 0
        %3309 = vmatprep.subr.bf16.mxu0 0
        %3310 = vmatpush1.bf16.msra.mxu0 0
        %3311 = vmatprep.subr.bf16.mxu0 0
        %3312 = vmatpush1.bf16.msra.mxu0 0
        %3313 = vmatprep.subr.bf16.mxu0 0
        %3314 = vmatpush1.bf16.msra.mxu0 0
        %3315 = vmatprep.subr.bf16.mxu0 0
        %3316 = vmatpush1.bf16.msra.mxu0 0
        %3317 = vmatprep.subr.bf16.mxu0 0
        %3318 = vmatpush1.bf16.msra.mxu0 %v3290
        %3319 = vmatprep.subr.bf16.mxu0 0
        %3320 = vmatpush1.bf16.msra.mxu0 %v3289
        %3321 = vmatprep.subr.bf16.mxu0 0
        %3322 = vmatpush2.bf16.msra.mxu0 0
        %3323 = vmatprep.subr.bf16.mxu0 0
        %3324 = vmatpush2.bf16.msra.mxu0 0
        %3325 = vmatprep.subr.bf16.mxu0 0
        %3326 = vmatpush2.bf16.msra.mxu0 0
        %3327 = vmatprep.subr.bf16.mxu0 0
        %3328 = vmatpush2.bf16.msra.mxu0 0
        %3329 = vmatprep.subr.bf16.mxu0 0
        %3330 = vmatpush2.bf16.msra.mxu0 0
        %3331 = vmatprep.subr.bf16.mxu0 0
        %3332 = vmatpush2.bf16.msra.mxu0 0
        %3333 = vmatprep.subr.bf16.mxu0 0
        %3334 = vmatpush2.bf16.msra.mxu0 0
        %3335 = vmatprep.subr.bf16.mxu0 0
        %3336 = vmatpush2.bf16.msra.mxu0 0
        %3337 = vmatprep.mubr.bf16.mxu0 0
        %3338 = vmatmul.mubr.bf16.gmra.mxu0 %v3294
        %v3339 = vpop.f32.mrf.mxu0
        %v3340 = vadd.f32 %v3251, %v3339
        %v3341 = vpop.f32.mrf.mxu0
        %v3342 = vpop.f32.mrf.mxu0
        %v3343 = vadd.f32 %v3254, %v3342
        %v3344 = vpop.f32.mrf.mxu0
        %3345 = vmatprep.mubr.bf16.mxu0 0
        %3346 = vmatmul.mubr.bf16.gmra.mxu0 %v3297
        %v3347 = vpop.f32.mrf.mxu0
        %v3348 = vadd.f32 %v3259, %v3347
        %v3349 = vpop.f32.mrf.mxu0
        %v3350 = vpop.f32.mrf.mxu0
        %v3351 = vadd.f32 %v3262, %v3350
        %v3352 = vpop.f32.mrf.mxu0
        %3353 = vmatprep.mubr.bf16.mxu0 0
        %3354 = vmatmul.mubr.bf16.gmra.mxu0 %v3300
        %v3355 = vpop.f32.mrf.mxu0
        %v3356 = vadd.f32 %v3267, %v3355
        %v3357 = vpop.f32.mrf.mxu0
        %v3358 = vpop.f32.mrf.mxu0
        %v3359 = vadd.f32 %v3270, %v3358
        %v3360 = vpop.f32.mrf.mxu0
        %3361 = vmatprep.mubr.bf16.mxu0 0
        %3362 = vmatmul.mubr.bf16.gmra.mxu0 %v3303
        %v3363 = vpop.f32.mrf.mxu0
        %v3364 = vadd.f32 %v3275, %v3363
        %v3365 = vpop.f32.mrf.mxu0
        %v3366 = vpop.f32.mrf.mxu0
        %v3367 = vadd.f32 %v3278, %v3366
        %v3368 = vpop.f32.mrf.mxu0
        %3369 = vdwg.mxu0
        %v3370 = vadd.f32 %v2356, %v3340
        %v3371 = vadd.f32 %v2357, %v3343
        %v3372 = vadd.f32 %v2358, %v3348
        %v3373 = vadd.f32 %v2359, %v3351
        %v3374 = vadd.f32 %v2360, %v3356
        %v3375 = vadd.f32 %v2361, %v3359
        %v3376 = vadd.f32 %v2362, %v3364
        %v3377 = vadd.f32 %v2363, %v3367
        %v3378 = vlaneseq
        %v3379 = vshrl.u32 %v3378, 7
        %v3380 = vsub.s32 2, %v3379
        %v3381 = vrot.slane %v2365, %v3380
        %v3382 = vadd.f32 %v3370, %v3381
        %v3383 = vadd.f32 %v3371, %v3381
        %v3384 = vadd.f32 %v3372, %v3381
        %v3385 = vadd.f32 %v3373, %v3381
        %v3386 = vadd.f32 %v3374, %v3381
        %v3387 = vadd.f32 %v3375, %v3381
        %v3388 = vadd.f32 %v3376, %v3381
        %v3389 = vadd.f32 %v3377, %v3381
        %v3390 = vsel %vm629, %v3382, 0.0
        %3391 = vadd.xlane.f32.xlu0 %v3390
        %v3392 = vpop.xlane.xlu0 %3391
        %v3393 = vsel %vm629, %v3383, 0.0
        %3394 = vadd.xlane.f32.xlu0 %v3393
        %v3395 = vpop.xlane.xlu0 %3394
        %v3396 = vsel %vm629, %v3384, 0.0
        %3397 = vadd.xlane.f32.xlu0 %v3396
        %v3398 = vpop.xlane.xlu0 %3397
        %v3399 = vsel %vm629, %v3385, 0.0
        %3400 = vadd.xlane.f32.xlu0 %v3399
        %v3401 = vpop.xlane.xlu0 %3400
        %v3402 = vsel %vm629, %v3386, 0.0
        %3403 = vadd.xlane.f32.xlu0 %v3402
        %v3404 = vpop.xlane.xlu0 %3403
        %v3405 = vsel %vm629, %v3387, 0.0
        %3406 = vadd.xlane.f32.xlu0 %v3405
        %v3407 = vpop.xlane.xlu0 %3406
        %v3408 = vsel %vm629, %v3388, 0.0
        %3409 = vadd.xlane.f32.xlu0 %v3408
        %v3410 = vpop.xlane.xlu0 %3409
        %v3411 = vsel %vm629, %v3389, 0.0
        %3412 = vadd.xlane.f32.xlu0 %v3411
        %v3413 = vpop.xlane.xlu0 %3412
        %v3414 = vmul.f32 %v3392, %v651
        %v3415 = vmul.f32 %v3395, %v651
        %v3416 = vmul.f32 %v3398, %v651
        %v3417 = vmul.f32 %v3401, %v651
        %v3418 = vmul.f32 %v3404, %v651
        %v3419 = vmul.f32 %v3407, %v651
        %v3420 = vmul.f32 %v3410, %v651
        %v3421 = vmul.f32 %v3413, %v651
        %v3422 = vsub.f32 %v3382, %v3414
        %v3423 = vsub.f32 %v3383, %v3415
        %v3424 = vsub.f32 %v3384, %v3416
        %v3425 = vsub.f32 %v3385, %v3417
        %v3426 = vsub.f32 %v3386, %v3418
        %v3427 = vsub.f32 %v3387, %v3419
        %v3428 = vsub.f32 %v3388, %v3420
        %v3429 = vsub.f32 %v3389, %v3421
        %v3430 = vmul.f32 %v3422, %v3422
        %v3431 = vmul.f32 %v3423, %v3423
        %v3432 = vmul.f32 %v3424, %v3424
        %v3433 = vmul.f32 %v3425, %v3425
        %v3434 = vmul.f32 %v3426, %v3426
        %v3435 = vmul.f32 %v3427, %v3427
        %v3436 = vmul.f32 %v3428, %v3428
        %v3437 = vmul.f32 %v3429, %v3429
        %v3438 = vsel %vm629, %v3430, 0.0
        %3439 = vadd.xlane.f32.xlu0 %v3438
        %v3440 = vpop.xlane.xlu0 %3439
        %v3441 = vsel %vm629, %v3431, 0.0
        %3442 = vadd.xlane.f32.xlu0 %v3441
        %v3443 = vpop.xlane.xlu0 %3442
        %v3444 = vsel %vm629, %v3432, 0.0
        %3445 = vadd.xlane.f32.xlu0 %v3444
        %v3446 = vpop.xlane.xlu0 %3445
        %v3447 = vsel %vm629, %v3433, 0.0
        %3448 = vadd.xlane.f32.xlu0 %v3447
        %v3449 = vpop.xlane.xlu0 %3448
        %v3450 = vsel %vm629, %v3434, 0.0
        %3451 = vadd.xlane.f32.xlu0 %v3450
        %v3452 = vpop.xlane.xlu0 %3451
        %v3453 = vsel %vm629, %v3435, 0.0
        %3454 = vadd.xlane.f32.xlu0 %v3453
        %v3455 = vpop.xlane.xlu0 %3454
        %v3456 = vsel %vm629, %v3436, 0.0
        %3457 = vadd.xlane.f32.xlu0 %v3456
        %v3458 = vpop.xlane.xlu0 %3457
        %v3459 = vsel %vm629, %v3437, 0.0
        %3460 = vadd.xlane.f32.xlu0 %v3459
        %v3461 = vpop.xlane.xlu0 %3460
        %v3462 = vmul.f32 %v3440, %v651
        %v3463 = vmul.f32 %v3443, %v651
        %v3464 = vmul.f32 %v3446, %v651
        %v3465 = vmul.f32 %v3449, %v651
        %v3466 = vmul.f32 %v3452, %v651
        %v3467 = vmul.f32 %v3455, %v651
        %v3468 = vmul.f32 %v3458, %v651
        %v3469 = vmul.f32 %v3461, %v651
        %v3470 = vadd.f32 %v3462, 1e-05
        %v3471 = vadd.f32 %v3463, 1e-05
        %v3472 = vadd.f32 %v3464, 1e-05
        %v3473 = vadd.f32 %v3465, 1e-05
        %v3474 = vadd.f32 %v3466, 1e-05
        %v3475 = vadd.f32 %v3467, 1e-05
        %v3476 = vadd.f32 %v3468, 1e-05
        %v3477 = vadd.f32 %v3469, 1e-05
        %v3478 = vrsqrt.pop %v3470
        %v3479 = vrsqrt.pop %v3471
        %v3480 = vrsqrt.pop %v3472
        %v3481 = vrsqrt.pop %v3473
        %v3482 = vrsqrt.pop %v3474
        %v3483 = vrsqrt.pop %v3475
        %v3484 = vrsqrt.pop %v3476
        %v3485 = vrsqrt.pop %v3477
        %v3486 = vmul.f32 %v3422, %v3478
        %v3487 = vmul.f32 %v3423, %v3479
        %v3488 = vmul.f32 %v3424, %v3480
        %v3489 = vmul.f32 %v3425, %v3481
        %v3490 = vmul.f32 %v3426, %v3482
        %v3491 = vmul.f32 %v3427, %v3483
        %v3492 = vmul.f32 %v3428, %v3484
        %v3493 = vmul.f32 %v3429, %v3485
        %v3494 = vlaneseq
        %v3495 = vshrl.u32 %v3494, 7
        %v3496 = vsub.s32 3, %v3495
        %v3497 = vrot.slane %v2365, %v3496
        %v3498 = vmul.f32 %v3486, %v3497
        %v3499 = vmul.f32 %v3487, %v3497
        %v3500 = vmul.f32 %v3488, %v3497
        %v3501 = vmul.f32 %v3489, %v3497
        %v3502 = vmul.f32 %v3490, %v3497
        %v3503 = vmul.f32 %v3491, %v3497
        %v3504 = vmul.f32 %v3492, %v3497
        %v3505 = vmul.f32 %v3493, %v3497
        %v3506 = vlaneseq
        %v3507 = vshrl.u32 %v3506, 7
        %v3508 = vsub.s32 4, %v3507
        %v3509 = vrot.slane %v2365, %v3508
        %v3510 = vadd.f32 %v3498, %v3509
        %v3511 = vadd.f32 %v3499, %v3509
        %v3512 = vadd.f32 %v3500, %v3509
        %v3513 = vadd.f32 %v3501, %v3509
        %v3514 = vadd.f32 %v3502, %v3509
        %v3515 = vadd.f32 %v3503, %v3509
        %v3516 = vadd.f32 %v3504, %v3509
        %v3517 = vadd.f32 %v3505, %v3509
        %v3518 = vpack.c.bf16 %v3511, %v3510
        %v3519 = vpack.c.bf16 %v3513, %v3512
        %v3520 = vpack.c.bf16 %v3515, %v3514
        %v3521 = vpack.c.bf16 %v3517, %v3516
        %s3522 = scalar_lea.vmem %s9, 16
        %v3523 = vld [vmem:[%s3522] sm:$0xf]
        %v3524 = vld [vmem:[%s3522 + $0x4] sm:$0xf]
        %v3525 = vld [vmem:[%s3522 + $0x8] sm:$0xf]
        %v3526 = vld [vmem:[%s3522 + $0xc] sm:$0xf]
        %s3527 = scalar_lea.vmem %s6, 1
        %v3528 = vld [vmem:[%s3527] sm:$0x1]
        %v3530 = vlaneseq
        %v3531 = vshrl.u32 %v3530, 7
        %v3532 = vsub.s32 0, %v3531
        %v3533 = vrot.slane %v3528, %v3532
        %v3539 = vunpack.c.l.b16 %v3523
        %v3540 = vunpack.c.l.b16 %v3524
        %v3541 = vunpack.c.l.b16 %v3525
        %v3542 = vunpack.c.l.b16 %v3526
        %v3543 = vpack.c.b16 %v3540, %v3539
        %v3544 = vpack.c.b16 %v3542, %v3541
        %v3548 = vsel %vm629, %v3518, 0
        %v3551 = vsel %vm629, %v3519, 0
        %v3554 = vsel %vm629, %v3520, 0
        %v3557 = vsel %vm629, %v3521, 0
        %3559 = vmatprep.subr.bf16.mxu0 0
        %3560 = vmatpush1.bf16.msra.mxu0 0
        %3561 = vmatprep.subr.bf16.mxu0 0
        %3562 = vmatpush1.bf16.msra.mxu0 0
        %3563 = vmatprep.subr.bf16.mxu0 0
        %3564 = vmatpush1.bf16.msra.mxu0 0
        %3565 = vmatprep.subr.bf16.mxu0 0
        %3566 = vmatpush1.bf16.msra.mxu0 0
        %3567 = vmatprep.subr.bf16.mxu0 0
        %3568 = vmatpush1.bf16.msra.mxu0 0
        %3569 = vmatprep.subr.bf16.mxu0 0
        %3570 = vmatpush1.bf16.msra.mxu0 0
        %3571 = vmatprep.subr.bf16.mxu0 0
        %3572 = vmatpush1.bf16.msra.mxu0 %v3544
        %3573 = vmatprep.subr.bf16.mxu0 0
        %3574 = vmatpush1.bf16.msra.mxu0 %v3543
        %3575 = vmatprep.subr.bf16.mxu0 0
        %3576 = vmatpush2.bf16.msra.mxu0 0
        %3577 = vmatprep.subr.bf16.mxu0 0
        %3578 = vmatpush2.bf16.msra.mxu0 0
        %3579 = vmatprep.subr.bf16.mxu0 0
        %3580 = vmatpush2.bf16.msra.mxu0 0
        %3581 = vmatprep.subr.bf16.mxu0 0
        %3582 = vmatpush2.bf16.msra.mxu0 0
        %3583 = vmatprep.subr.bf16.mxu0 0
        %3584 = vmatpush2.bf16.msra.mxu0 0
        %3585 = vmatprep.subr.bf16.mxu0 0
        %3586 = vmatpush2.bf16.msra.mxu0 0
        %3587 = vmatprep.subr.bf16.mxu0 0
        %3588 = vmatpush2.bf16.msra.mxu0 0
        %3589 = vmatprep.subr.bf16.mxu0 0
        %3590 = vmatpush2.bf16.msra.mxu0 0
        %3591 = vmatprep.mubr.bf16.mxu0 0
        %3592 = vmatmul.mubr.bf16.gmra.mxu0 %v3548
        %v3593 = vpop.f32.mrf.mxu0
        %v3594 = vadd.f32 %v3533, %v3593
        %v3595 = vpop.f32.mrf.mxu0
        %v3596 = vpop.f32.mrf.mxu0
        %v3597 = vadd.f32 %v3533, %v3596
        %v3598 = vpop.f32.mrf.mxu0
        %3599 = vmatprep.mubr.bf16.mxu0 0
        %3600 = vmatmul.mubr.bf16.gmra.mxu0 %v3551
        %v3601 = vpop.f32.mrf.mxu0
        %v3602 = vadd.f32 %v3533, %v3601
        %v3603 = vpop.f32.mrf.mxu0
        %v3604 = vpop.f32.mrf.mxu0
        %v3605 = vadd.f32 %v3533, %v3604
        %v3606 = vpop.f32.mrf.mxu0
        %3607 = vmatprep.mubr.bf16.mxu0 0
        %3608 = vmatmul.mubr.bf16.gmra.mxu0 %v3554
        %v3609 = vpop.f32.mrf.mxu0
        %v3610 = vadd.f32 %v3533, %v3609
        %v3611 = vpop.f32.mrf.mxu0
        %v3612 = vpop.f32.mrf.mxu0
        %v3613 = vadd.f32 %v3533, %v3612
        %v3614 = vpop.f32.mrf.mxu0
        %3615 = vmatprep.mubr.bf16.mxu0 0
        %3616 = vmatmul.mubr.bf16.gmra.mxu0 %v3557
        %v3617 = vpop.f32.mrf.mxu0
        %v3618 = vadd.f32 %v3533, %v3617
        %v3619 = vpop.f32.mrf.mxu0
        %v3620 = vpop.f32.mrf.mxu0
        %v3621 = vadd.f32 %v3533, %v3620
        %v3622 = vpop.f32.mrf.mxu0
        %3623 = vdwg.mxu0
        %v3624 = vmul.f32 %v3594, 0.5
        %v3625 = vmul.f32 %v3597, 0.5
        %v3626 = vmul.f32 %v3602, 0.5
        %v3627 = vmul.f32 %v3605, 0.5
        %v3628 = vmul.f32 %v3610, 0.5
        %v3629 = vmul.f32 %v3613, 0.5
        %v3630 = vmul.f32 %v3618, 0.5
        %v3631 = vmul.f32 %v3621, 0.5
        %v3632 = vmul.f32 %v3594, 0.70710677
        %v3633 = vmul.f32 %v3597, 0.70710677
        %v3634 = vmul.f32 %v3602, 0.70710677
        %v3635 = vmul.f32 %v3605, 0.70710677
        %v3636 = vmul.f32 %v3610, 0.70710677
        %v3637 = vmul.f32 %v3613, 0.70710677
        %v3638 = vmul.f32 %v3618, 0.70710677
        %v3639 = vmul.f32 %v3621, 0.70710677
        %vm3640 = vcmp.ge.f32.partialorder %v3632, 0.0
        %vm3641 = vcmp.ge.f32.partialorder %v3633, 0.0
        %vm3642 = vcmp.ge.f32.partialorder %v3634, 0.0
        %vm3643 = vcmp.ge.f32.partialorder %v3635, 0.0
        %vm3644 = vcmp.ge.f32.partialorder %v3636, 0.0
        %vm3645 = vcmp.ge.f32.partialorder %v3637, 0.0
        %vm3646 = vcmp.ge.f32.partialorder %v3638, 0.0
        %vm3647 = vcmp.ge.f32.partialorder %v3639, 0.0
        %v3648 = vsel %vm3640, 1.0, -1.0
        %v3649 = vsel %vm3641, 1.0, -1.0
        %v3650 = vsel %vm3642, 1.0, -1.0
        %v3651 = vsel %vm3643, 1.0, -1.0
        %v3652 = vsel %vm3644, 1.0, -1.0
        %v3653 = vsel %vm3645, 1.0, -1.0
        %v3654 = vsel %vm3646, 1.0, -1.0
        %v3655 = vsel %vm3647, 1.0, -1.0
        %v3656 = vand.u32 2147483647, %v3632
        %v3657 = vand.u32 2147483647, %v3633
        %v3658 = vand.u32 2147483647, %v3634
        %v3659 = vand.u32 2147483647, %v3635
        %v3660 = vand.u32 2147483647, %v3636
        %v3661 = vand.u32 2147483647, %v3637
        %v3662 = vand.u32 2147483647, %v3638
        %v3663 = vand.u32 2147483647, %v3639
        %v3664 = vmul.f32 %v3656, 0.3275911
        %v3665 = vmul.f32 %v3657, 0.3275911
        %v3666 = vmul.f32 %v3658, 0.3275911
        %v3667 = vmul.f32 %v3659, 0.3275911
        %v3668 = vmul.f32 %v3660, 0.3275911
        %v3669 = vmul.f32 %v3661, 0.3275911
        %v3670 = vmul.f32 %v3662, 0.3275911
        %v3671 = vmul.f32 %v3663, 0.3275911
        %v3672 = vadd.f32 %v3664, 1.0
        %v3673 = vadd.f32 %v3665, 1.0
        %v3674 = vadd.f32 %v3666, 1.0
        %v3675 = vadd.f32 %v3667, 1.0
        %v3676 = vadd.f32 %v3668, 1.0
        %v3677 = vadd.f32 %v3669, 1.0
        %v3678 = vadd.f32 %v3670, 1.0
        %v3679 = vadd.f32 %v3671, 1.0
        %v3680 = vrcp.pop %v3672
        %v3681 = vmul.f32 1.0, %v3680
        %v3682 = vrcp.pop %v3673
        %v3683 = vmul.f32 1.0, %v3682
        %v3684 = vrcp.pop %v3674
        %v3685 = vmul.f32 1.0, %v3684
        %v3686 = vrcp.pop %v3675
        %v3687 = vmul.f32 1.0, %v3686
        %v3688 = vrcp.pop %v3676
        %v3689 = vmul.f32 1.0, %v3688
        %v3690 = vrcp.pop %v3677
        %v3691 = vmul.f32 1.0, %v3690
        %v3692 = vrcp.pop %v3678
        %v3693 = vmul.f32 1.0, %v3692
        %v3694 = vrcp.pop %v3679
        %v3695 = vmul.f32 1.0, %v3694
        %v3696 = vmul.f32 %v3681, 1.0614054
        %v3697 = vmul.f32 %v3683, 1.0614054
        %v3698 = vmul.f32 %v3685, 1.0614054
        %v3699 = vmul.f32 %v3687, 1.0614054
        %v3700 = vmul.f32 %v3689, 1.0614054
        %v3701 = vmul.f32 %v3691, 1.0614054
        %v3702 = vmul.f32 %v3693, 1.0614054
        %v3703 = vmul.f32 %v3695, 1.0614054
        %v3704 = vadd.f32 %v3696, -1.4531521
        %v3705 = vadd.f32 %v3697, -1.4531521
        %v3706 = vadd.f32 %v3698, -1.4531521
        %v3707 = vadd.f32 %v3699, -1.4531521
        %v3708 = vadd.f32 %v3700, -1.4531521
        %v3709 = vadd.f32 %v3701, -1.4531521
        %v3710 = vadd.f32 %v3702, -1.4531521
        %v3711 = vadd.f32 %v3703, -1.4531521
        %v3712 = vmul.f32 %v3704, %v3681
        %v3713 = vmul.f32 %v3705, %v3683
        %v3714 = vmul.f32 %v3706, %v3685
        %v3715 = vmul.f32 %v3707, %v3687
        %v3716 = vmul.f32 %v3708, %v3689
        %v3717 = vmul.f32 %v3709, %v3691
        %v3718 = vmul.f32 %v3710, %v3693
        %v3719 = vmul.f32 %v3711, %v3695
        %v3720 = vadd.f32 %v3712, 1.4214138
        %v3721 = vadd.f32 %v3713, 1.4214138
        %v3722 = vadd.f32 %v3714, 1.4214138
        %v3723 = vadd.f32 %v3715, 1.4214138
        %v3724 = vadd.f32 %v3716, 1.4214138
        %v3725 = vadd.f32 %v3717, 1.4214138
        %v3726 = vadd.f32 %v3718, 1.4214138
        %v3727 = vadd.f32 %v3719, 1.4214138
        %v3728 = vmul.f32 %v3720, %v3681
        %v3729 = vmul.f32 %v3721, %v3683
        %v3730 = vmul.f32 %v3722, %v3685
        %v3731 = vmul.f32 %v3723, %v3687
        %v3732 = vmul.f32 %v3724, %v3689
        %v3733 = vmul.f32 %v3725, %v3691
        %v3734 = vmul.f32 %v3726, %v3693
        %v3735 = vmul.f32 %v3727, %v3695
        %v3736 = vadd.f32 %v3728, -0.28449672
        %v3737 = vadd.f32 %v3729, -0.28449672
        %v3738 = vadd.f32 %v3730, -0.28449672
        %v3739 = vadd.f32 %v3731, -0.28449672
        %v3740 = vadd.f32 %v3732, -0.28449672
        %v3741 = vadd.f32 %v3733, -0.28449672
        %v3742 = vadd.f32 %v3734, -0.28449672
        %v3743 = vadd.f32 %v3735, -0.28449672
        %v3744 = vmul.f32 %v3736, %v3681
        %v3745 = vmul.f32 %v3737, %v3683
        %v3746 = vmul.f32 %v3738, %v3685
        %v3747 = vmul.f32 %v3739, %v3687
        %v3748 = vmul.f32 %v3740, %v3689
        %v3749 = vmul.f32 %v3741, %v3691
        %v3750 = vmul.f32 %v3742, %v3693
        %v3751 = vmul.f32 %v3743, %v3695
        %v3752 = vadd.f32 %v3744, 0.2548296
        %v3753 = vadd.f32 %v3745, 0.2548296
        %v3754 = vadd.f32 %v3746, 0.2548296
        %v3755 = vadd.f32 %v3747, 0.2548296
        %v3756 = vadd.f32 %v3748, 0.2548296
        %v3757 = vadd.f32 %v3749, 0.2548296
        %v3758 = vadd.f32 %v3750, 0.2548296
        %v3759 = vadd.f32 %v3751, 0.2548296
        %v3760 = vmul.f32 %v3752, %v3681
        %v3761 = vmul.f32 %v3753, %v3683
        %v3762 = vmul.f32 %v3754, %v3685
        %v3763 = vmul.f32 %v3755, %v3687
        %v3764 = vmul.f32 %v3756, %v3689
        %v3765 = vmul.f32 %v3757, %v3691
        %v3766 = vmul.f32 %v3758, %v3693
        %v3767 = vmul.f32 %v3759, %v3695
        %v3768 = vsub.f32 0.0, %v3656
        %v3769 = vsub.f32 0.0, %v3657
        %v3770 = vsub.f32 0.0, %v3658
        %v3771 = vsub.f32 0.0, %v3659
        %v3772 = vsub.f32 0.0, %v3660
        %v3773 = vsub.f32 0.0, %v3661
        %v3774 = vsub.f32 0.0, %v3662
        %v3775 = vsub.f32 0.0, %v3663
        %v3776 = vmul.f32 %v3768, %v3656
        %v3777 = vmul.f32 %v3769, %v3657
        %v3778 = vmul.f32 %v3770, %v3658
        %v3779 = vmul.f32 %v3771, %v3659
        %v3780 = vmul.f32 %v3772, %v3660
        %v3781 = vmul.f32 %v3773, %v3661
        %v3782 = vmul.f32 %v3774, %v3662
        %v3783 = vmul.f32 %v3775, %v3663
        %v3784 = vmul.f32 %v3776, 1.442695
        %v3785 = vpow.pop %v3784
        %v3786 = vmul.f32 %v3777, 1.442695
        %v3787 = vpow.pop %v3786
        %v3788 = vmul.f32 %v3778, 1.442695
        %v3789 = vpow.pop %v3788
        %v3790 = vmul.f32 %v3779, 1.442695
        %v3791 = vpow.pop %v3790
        %v3792 = vmul.f32 %v3780, 1.442695
        %v3793 = vpow.pop %v3792
        %v3794 = vmul.f32 %v3781, 1.442695
        %v3795 = vpow.pop %v3794
        %v3796 = vmul.f32 %v3782, 1.442695
        %v3797 = vpow.pop %v3796
        %v3798 = vmul.f32 %v3783, 1.442695
        %v3799 = vpow.pop %v3798
        %v3800 = vmul.f32 %v3760, %v3785
        %v3801 = vmul.f32 %v3761, %v3787
        %v3802 = vmul.f32 %v3762, %v3789
        %v3803 = vmul.f32 %v3763, %v3791
        %v3804 = vmul.f32 %v3764, %v3793
        %v3805 = vmul.f32 %v3765, %v3795
        %v3806 = vmul.f32 %v3766, %v3797
        %v3807 = vmul.f32 %v3767, %v3799
        %v3808 = vsub.f32 1.0, %v3800
        %v3809 = vsub.f32 1.0, %v3801
        %v3810 = vsub.f32 1.0, %v3802
        %v3811 = vsub.f32 1.0, %v3803
        %v3812 = vsub.f32 1.0, %v3804
        %v3813 = vsub.f32 1.0, %v3805
        %v3814 = vsub.f32 1.0, %v3806
        %v3815 = vsub.f32 1.0, %v3807
        %v3816 = vmul.f32 %v3648, %v3808
        %v3817 = vmul.f32 %v3649, %v3809
        %v3818 = vmul.f32 %v3650, %v3810
        %v3819 = vmul.f32 %v3651, %v3811
        %v3820 = vmul.f32 %v3652, %v3812
        %v3821 = vmul.f32 %v3653, %v3813
        %v3822 = vmul.f32 %v3654, %v3814
        %v3823 = vmul.f32 %v3655, %v3815
        %v3824 = vadd.f32 %v3816, 1.0
        %v3825 = vadd.f32 %v3817, 1.0
        %v3826 = vadd.f32 %v3818, 1.0
        %v3827 = vadd.f32 %v3819, 1.0
        %v3828 = vadd.f32 %v3820, 1.0
        %v3829 = vadd.f32 %v3821, 1.0
        %v3830 = vadd.f32 %v3822, 1.0
        %v3831 = vadd.f32 %v3823, 1.0
        %v3832 = vmul.f32 %v3624, %v3824
        %v3833 = vmul.f32 %v3625, %v3825
        %v3834 = vmul.f32 %v3626, %v3826
        %v3835 = vmul.f32 %v3627, %v3827
        %v3836 = vmul.f32 %v3628, %v3828
        %v3837 = vmul.f32 %v3629, %v3829
        %v3838 = vmul.f32 %v3630, %v3830
        %v3839 = vmul.f32 %v3631, %v3831
        %v3840 = vpack.c.bf16 %v3833, %v3832
        %v3841 = vpack.c.bf16 %v3835, %v3834
        %v3842 = vpack.c.bf16 %v3837, %v3836
        %v3843 = vpack.c.bf16 %v3839, %v3838
        %s3844 = scalar_lea.vmem %s10, 32
        %v3845 = vld [vmem:[%s3844] sm:$0xf]
        %v3846 = vld [vmem:[%s3844 + $0x4] sm:$0xf]
        %v3847 = vld [vmem:[%s3844 + $0x8] sm:$0xf]
        %v3848 = vld [vmem:[%s3844 + $0xc] sm:$0xf]
        %v3849 = vld [vmem:[%s3844 + $0x10] sm:$0xf]
        %v3850 = vld [vmem:[%s3844 + $0x14] sm:$0xf]
        %v3851 = vld [vmem:[%s3844 + $0x18] sm:$0xf]
        %v3852 = vld [vmem:[%s3844 + $0x1c] sm:$0xf]
        %v3853 = vlaneseq
        %v3854 = vshrl.u32 %v3853, 7
        %v3855 = vsub.s32 5, %v3854
        %v3856 = vrot.slane %v2365, %v3855
        %v3865 = vunpack.c.l.b16 %v3845
        %v3866 = vunpack.c.l.b16 %v3846
        %v3867 = vunpack.c.l.b16 %v3847
        %v3868 = vunpack.c.l.b16 %v3848
        %v3869 = vunpack.c.l.b16 %v3849
        %v3870 = vunpack.c.l.b16 %v3850
        %v3871 = vunpack.c.l.b16 %v3851
        %v3872 = vunpack.c.l.b16 %v3852
        %v3873 = vpack.c.b16 %v3866, %v3865
        %v3874 = vpack.c.b16 %v3868, %v3867
        %v3875 = vpack.c.b16 %v3870, %v3869
        %v3876 = vpack.c.b16 %v3872, %v3871
        %v3882 = vsel %vm1074, %v3840, 0
        %v3885 = vsel %vm1074, %v3841, 0
        %v3888 = vsel %vm1074, %v3842, 0
        %v3891 = vsel %vm1074, %v3843, 0
        %3893 = vmatprep.subr.bf16.mxu0 0
        %3894 = vmatpush1.bf16.msra.mxu0 0
        %3895 = vmatprep.subr.bf16.mxu0 0
        %3896 = vmatpush1.bf16.msra.mxu0 0
        %3897 = vmatprep.subr.bf16.mxu0 0
        %3898 = vmatpush1.bf16.msra.mxu0 0
        %3899 = vmatprep.subr.bf16.mxu0 0
        %3900 = vmatpush1.bf16.msra.mxu0 0
        %3901 = vmatprep.subr.bf16.mxu0 0
        %3902 = vmatpush1.bf16.msra.mxu0 %v3876
        %3903 = vmatprep.subr.bf16.mxu0 0
        %3904 = vmatpush1.bf16.msra.mxu0 %v3875
        %3905 = vmatprep.subr.bf16.mxu0 0
        %3906 = vmatpush1.bf16.msra.mxu0 %v3874
        %3907 = vmatprep.subr.bf16.mxu0 0
        %3908 = vmatpush1.bf16.msra.mxu0 %v3873
        %3909 = vmatprep.subr.bf16.mxu0 0
        %3910 = vmatpush2.bf16.msra.mxu0 0
        %3911 = vmatprep.subr.bf16.mxu0 0
        %3912 = vmatpush2.bf16.msra.mxu0 0
        %3913 = vmatprep.subr.bf16.mxu0 0
        %3914 = vmatpush2.bf16.msra.mxu0 0
        %3915 = vmatprep.subr.bf16.mxu0 0
        %3916 = vmatpush2.bf16.msra.mxu0 0
        %3917 = vmatprep.subr.bf16.mxu0 0
        %3918 = vmatpush2.bf16.msra.mxu0 0
        %3919 = vmatprep.subr.bf16.mxu0 0
        %3920 = vmatpush2.bf16.msra.mxu0 0
        %3921 = vmatprep.subr.bf16.mxu0 0
        %3922 = vmatpush2.bf16.msra.mxu0 0
        %3923 = vmatprep.subr.bf16.mxu0 0
        %3924 = vmatpush2.bf16.msra.mxu0 0
        %3925 = vmatprep.mubr.bf16.mxu0 0
        %3926 = vmatmul.mubr.bf16.gmra.mxu0 %v3882
        %v3927 = vpop.f32.mrf.mxu0
        %v3928 = vadd.f32 %v3856, %v3927
        %v3929 = vpop.f32.mrf.mxu0
        %v3930 = vpop.f32.mrf.mxu0
        %v3931 = vpop.f32.mrf.mxu0
        %3932 = vmatprep.mubr.bf16.mxu0 0
        %3933 = vmatmul.mubr.bf16.gmra.mxu0 %v3885
        %v3934 = vpop.f32.mrf.mxu0
        %v3935 = vpop.f32.mrf.mxu0
        %v3936 = vpop.f32.mrf.mxu0
        %v3937 = vpop.f32.mrf.mxu0
        %3938 = vmatprep.mubr.bf16.mxu0 0
        %3939 = vmatmul.mubr.bf16.gmra.mxu0 %v3888
        %v3940 = vpop.f32.mrf.mxu0
        %v3941 = vpop.f32.mrf.mxu0
        %v3942 = vpop.f32.mrf.mxu0
        %v3943 = vpop.f32.mrf.mxu0
        %3944 = vmatprep.mubr.bf16.mxu0 0
        %3945 = vmatmul.mubr.bf16.gmra.mxu0 %v3891
        %v3946 = vpop.f32.mrf.mxu0
        %v3947 = vpop.f32.mrf.mxu0
        %v3948 = vpop.f32.mrf.mxu0
        %v3949 = vpop.f32.mrf.mxu0
        %3950 = vdwg.mxu0
        %v3951 = vadd.f32 %v3382, %v3928
        %vm3952 = vcmask 253952
        %v3953 = vsel %vm3952, %v3951, 0.0
        %3954 = vadd.xlane.f32.xlu0 %v3953
        %v3955 = vpop.xlane.xlu0 %3954
        %v3956 = vmul.f32 %v3955, %v651
        %v3957 = vsub.f32 %v3951, %v3956
        %v3958 = vmul.f32 %v3957, %v3957
        %v3959 = vsel %vm3952, %v3958, 0.0
        %3960 = vadd.xlane.f32.xlu0 %v3959
        %v3961 = vpop.xlane.xlu0 %3960
        %v3962 = vmul.f32 %v3961, %v651
        %v3963 = vadd.f32 %v3962, 1e-05
        %v3964 = vrsqrt.pop %v3963
        %v3965 = vmul.f32 %v3957, %v3964
        %v3967 = vrot.slane %v467, 3
        %v3969 = vmul.f32 %v3965, %v3967
        %v3970 = vrot.slane %v467, 4
        %v3972 = vadd.f32 %v3969, %v3970
        %v3973 = vpack.c.bf16 %v3972, %v3972
        %v3974 = vld [vmem:[#allocation5] sm:$0xf]
        %v3975 = vld [vmem:[#allocation5 + $0x4] sm:$0xf]
        %v3976 = vld [vmem:[#allocation5 + $0x8] sm:$0xf]
        %v3977 = vld [vmem:[#allocation5 + $0xc] sm:$0xf]
        %v3978 = vld [vmem:[%s12] sm:$0x1]
        %v3983 = vunpack.c.l.b16 %v3974
        %v3984 = vunpack.c.l.b16 %v3975
        %v3985 = vunpack.c.l.b16 %v3976
        %v3986 = vunpack.c.l.b16 %v3977
        %v3987 = vpack.c.b16 %v3984, %v3983
        %v3988 = vpack.c.b16 %v3986, %v3985
        %v3992 = vsel %vm629, %v3973, 0
        %3994 = vmatprep.subr.bf16.mxu0 0
        %3995 = vmatpush1.bf16.msra.mxu0 0
        %3996 = vmatprep.subr.bf16.mxu0 0
        %3997 = vmatpush1.bf16.msra.mxu0 0
        %3998 = vmatprep.subr.bf16.mxu0 0
        %3999 = vmatpush1.bf16.msra.mxu0 0
        %4000 = vmatprep.subr.bf16.mxu0 0
        %4001 = vmatpush1.bf16.msra.mxu0 0
        %4002 = vmatprep.subr.bf16.mxu0 0
        %4003 = vmatpush1.bf16.msra.mxu0 0
        %4004 = vmatprep.subr.bf16.mxu0 0
        %4005 = vmatpush1.bf16.msra.mxu0 0
        %4006 = vmatprep.subr.bf16.mxu0 0
        %4007 = vmatpush1.bf16.msra.mxu0 %v3988
        %4008 = vmatprep.subr.bf16.mxu0 0
        %4009 = vmatpush1.bf16.msra.mxu0 %v3987
        %4010 = vmatprep.subr.bf16.mxu0 0
        %4011 = vmatpush2.bf16.msra.mxu0 0
        %4012 = vmatprep.subr.bf16.mxu0 0
        %4013 = vmatpush2.bf16.msra.mxu0 0
        %4014 = vmatprep.subr.bf16.mxu0 0
        %4015 = vmatpush2.bf16.msra.mxu0 0
        %4016 = vmatprep.subr.bf16.mxu0 0
        %4017 = vmatpush2.bf16.msra.mxu0 0
        %4018 = vmatprep.subr.bf16.mxu0 0
        %4019 = vmatpush2.bf16.msra.mxu0 0
        %4020 = vmatprep.subr.bf16.mxu0 0
        %4021 = vmatpush2.bf16.msra.mxu0 0
        %4022 = vmatprep.subr.bf16.mxu0 0
        %4023 = vmatpush2.bf16.msra.mxu0 0
        %4024 = vmatprep.subr.bf16.mxu0 0
        %4025 = vmatpush2.bf16.msra.mxu0 0
        %4026 = vmatprep.mubr.bf16.mxu0 0
        %4027 = vmatmul.mubr.bf16.gmra.mxu0 %v3992
        %v4028 = vpop.f32.mrf.mxu0
        %v4029 = vadd.f32 %v3978, %v4028
        %v4030 = vpop.f32.mrf.mxu0
        %v4031 = vpop.f32.mrf.mxu0
        %v4032 = vpop.f32.mrf.mxu0
        %4033 = vdwg.mxu0
        %4034 = vst [vmem:[%s460] sm:$0x1] %v4029
        %s4035 = sand.u32 %s315, 1
        %s4036 = scalar_lea.sflag [#allocation4], %s4035
        %s4037 = sand.u32 %s315, 1
        %s4038 = scalar_lea.vmem [#allocation7], %s4037
        // Predicated region
        $region81: #{tpu_custom_call.1} parent=71 // pred_check
          %p4039 = pneg %p325
        $region82: #{tpu_custom_call.1} parent=71 // pred_check_branch
          %4041 = sbr.rel (%p4039) target = $region84
        $region83: #{tpu_custom_call.1} parent=71 // pred_region
          %s4043 = ssub.s32 16, 16
          %4044 = vsyncadd %s4036, %s4043
          %s4045 = smul.addr %s29, 16
          %s4046 = scalar_lea.hbm %s13, %s4045
          %s4048 = sshll.u32 %s4038, 4
          %s4049 = int_to_ptr.vmem [resolvable:$true] %s4048
          %4051 = dma.vmem_to_hbm [thread:$0]  %s4049, 16, %s4046, %s4036
        $region84: #{tpu_custom_call.1} parent=71 // pred_fallthru
          _
      $region72: #{tpu_custom_call.1} parent=5 // pred_fallthru
        _
      %p4052 = scmp.le.s32.totalorder 2, %s24
      // Predicated region
      $region85: #{tpu_custom_call.1} parent=5 // pred_check
        %p4053 = pneg %p4052
      $region86: #{tpu_custom_call.1} parent=5 // pred_check_branch
        %4055 = sbr.rel (%p4053) target = $region88
      $region87: #{tpu_custom_call.1} parent=5 // pred_region
        %s4056 = ssub.s32 %s24, 2
        // Predicated region
        $region89: #{tpu_custom_call.1} parent=87 // pred_check
          %p4057 = pneg %p331
        $region90: #{tpu_custom_call.1} parent=87 // pred_check_branch
          %4059 = sbr.rel (%p4057) target = $region92
        $region91: #{tpu_custom_call.1} parent=87 // pred_region
          %s4060 = sand.u32 %s316, 1
          %s4061 = scalar_lea.sflag [#allocation4], %s4060
          %s4062 = sand.u32 %s316, 1
          %s4063 = scalar_lea.vmem [#allocation7], %s4062
          %4064 = dma.done %s4061, 16
        $region92: #{tpu_custom_call.1} parent=87 // pred_fallthru
          _
      $region88: #{tpu_custom_call.1} parent=5 // pred_fallthru
        _
    $region6: #{tpu_custom_call.1} parent=1 // loop_footer
      %s28 = sadd.s32 1, %s24
    $region7: #{tpu_custom_call.1} parent=1 // loop_footer_branch
      %23 = sbr.rel target = $region3
    $region8: #{tpu_custom_call.1} parent=1 // loop_exit
      _
    %4065 = vsyncpa [#allocation3], 1
    %s4066 = scalar_lea.sflag [#allocation3], 1
    %4067 = vsyncpa %s4066, 1
    %4068 = vsyncpa [#allocation6], 1
    %4069 = vsyncpa [#allocation4], 1
    %s4070 = scalar_lea.sflag [#allocation4], 1
    %4071 = vsyncpa %s4070, 1

</llo_original>
